<compile_context>
chip_gen: v7x
topology: tpu7x:2x2x1
jax: 0.10.0
libtpu: 0.0.40
codegen_flags: <defaults>
</compile_context>

<pallas_src>
import jax
import jax.numpy as jnp
from jax import lax
from jax.experimental import pallas as pl
from jax.experimental.pallas import tpu as pltpu


def _round_up(x: int, m: int) -> int:
    return ((x + m - 1) // m) * m


# ---------------------------------------------------------------------------
# Stage 1: batched input-to-gate pre-activations   G = X @ W_ih^T + b
# ---------------------------------------------------------------------------
def _matmul_bias_kernel(x_ref, w_ref, b_ref, o_ref):
    o_ref[...] = (jnp.dot(x_ref[...], w_ref[...],
                          preferred_element_type=jnp.float32)
                  + b_ref[...]).astype(o_ref.dtype)


# ---------------------------------------------------------------------------
# Stage 2: LSTM recurrence over time; TT time steps per grid iteration
# ---------------------------------------------------------------------------
def _lstm_recurrence_kernel(g_ref, whh_ref, h_out_ref, h_scr, c_scr):
    """g_ref: (B, TT, 4H) pre-activations, whh_ref: (H, 4H),
    h_out_ref: (B, TT, H); h_scr/c_scr: (B, H) carried across grid steps."""
    kk = pl.program_id(0)

    @pl.when(kk == 0)
    def _():
        h_scr[...] = jnp.zeros_like(h_scr)
        c_scr[...] = jnp.zeros_like(c_scr)

    H = h_scr.shape[1]
    TT = g_ref.shape[1]
    whh = whh_ref[...]          # hoist weight load out of the time loop

    h = h_scr[...]
    c = c_scr[...]
    # Short fixed trip count -> fully unrolled, static slices/stores.
    for t in range(TT):
        gates = g_ref[:, t, :] + jnp.dot(h, whh,
                                         preferred_element_type=jnp.float32)
        i_g = jax.nn.sigmoid(gates[:, 0 * H:1 * H])
        f_g = jax.nn.sigmoid(gates[:, 1 * H:2 * H])
        g_g = jnp.tanh(gates[:, 2 * H:3 * H])
        o_g = jax.nn.sigmoid(gates[:, 3 * H:4 * H])
        c = f_g * c + i_g * g_g
        h = o_g * jnp.tanh(c)
        h_out_ref[:, t, :] = h.astype(h_out_ref.dtype)

    h_scr[...] = h
    c_scr[...] = c


# ---------------------------------------------------------------------------
# Stage 3: vocab projection + log-softmax (lane-dense padded vocab)
# ---------------------------------------------------------------------------
def _proj_logsoftmax_kernel(h_ref, w_ref, b_ref, o_ref):
    logits = (jnp.dot(h_ref[...], w_ref[...],
                      preferred_element_type=jnp.float32)
              + b_ref[...])                                   # (rm, Vp)
    m = jnp.max(logits, axis=-1, keepdims=True)
    z = logits - m
    lse = jnp.log(jnp.sum(jnp.exp(z), axis=-1, keepdims=True))
    o_ref[...] = (z - lse).astype(o_ref.dtype)


@jax.jit
def rnnlm_forward(sent, params):
    """sent: (B, S) int32 token ids. Returns (B, S-1, V) log-probs."""
    w_emb, w_ih_t, w_hh_t, b_gates, w_out_t, b_out = params
    B, S = sent.shape
    T = S - 1
    D = w_emb.shape[1]
    H = w_hh_t.shape[0]
    V = w_out_t.shape[1]
    G4 = 4 * H

    # ---- glue: embedding lookup (batch-major); dropout == identity ---------
    x_emb = jnp.take(w_emb, sent[:, :-1], axis=0)             # (B, T, D)

    # ---- row padding / tiling for the batched (non-recurrent) matmuls ------
    R = B * T
    rm = min(256, _round_up(R, 8))                            # row tile
    Rp = _round_up(R, rm)

    x_flat = x_emb.reshape(R, D)
    if Rp != R:
        x_flat = jnp.pad(x_flat, ((0, Rp - R), (0, 0)))

    g_pre_flat = pl.pallas_call(
        _matmul_bias_kernel,
        out_shape=jax.ShapeDtypeStruct((Rp, G4), jnp.float32),
        grid_spec=pltpu.PrefetchScalarGridSpec(
            num_scalar_prefetch=0,
            grid=(Rp // rm,),
            in_specs=[
                pl.BlockSpec((rm, D), lambda i: (i, 0)),      # X rows
                pl.BlockSpec((D, G4), lambda i: (0, 0)),      # W_ih^T
                pl.BlockSpec((1, G4), lambda i: (0, 0)),      # b_ih + b_hh
            ],
            out_specs=pl.BlockSpec((rm, G4), lambda i: (i, 0)),
        ),
        compiler_params=pltpu.CompilerParams(
            dimension_semantics=("parallel",)),
    )(x_flat, w_ih_t, b_gates)

    g_pre = g_pre_flat[:R].reshape(B, T, G4)

    # ---- recurrence: pad time up to a multiple of the time block -----------
    TT = 8
    Tp = _round_up(T, TT)
    if Tp != T:
        g_pre = jnp.pad(g_pre, ((0, 0), (0, Tp - T), (0, 0)))

    h_all = pl.pallas_call(
        _lstm_recurrence_kernel,
        out_shape=jax.ShapeDtypeStruct((B, Tp, H), jnp.float32),
        grid_spec=pltpu.PrefetchScalarGridSpec(
            num_scalar_prefetch=0,
            grid=(Tp // TT,),
            in_specs=[
                pl.BlockSpec((B, TT, G4), lambda k: (0, k, 0)),  # pre-gates
                pl.BlockSpec((H, G4), lambda k: (0, 0)),         # W_hh^T
            ],
            out_specs=pl.BlockSpec((B, TT, H), lambda k: (0, k, 0)),
            scratch_shapes=[
                pltpu.VMEM((B, H), jnp.float32),   # h carry
                pltpu.VMEM((B, H), jnp.float32),   # c carry
            ],
        ),
        compiler_params=pltpu.CompilerParams(
            dimension_semantics=("arbitrary",)),   # time recurrence: sequential
    )(g_pre, w_hh_t)

    # ---- projection + log-softmax over all rows (lane-dense padded vocab) --
    Vp = _round_up(V, 128)
    w_out_p = jnp.pad(w_out_t, ((0, 0), (0, Vp - V)))
    b_out_p = jnp.pad(b_out, ((0, 0), (0, Vp - V)), constant_values=-1e30)

    h_flat = h_all[:, :T, :].reshape(R, H)
    if Rp != R:
        h_flat = jnp.pad(h_flat, ((0, Rp - R), (0, 0)))

    logp_flat = pl.pallas_call(
        _proj_logsoftmax_kernel,
        out_shape=jax.ShapeDtypeStruct((Rp, Vp), jnp.float32),
        grid_spec=pltpu.PrefetchScalarGridSpec(
            num_scalar_prefetch=0,
            grid=(Rp // rm,),
            in_specs=[
                pl.BlockSpec((rm, H), lambda i: (i, 0)),      # h rows
                pl.BlockSpec((H, Vp), lambda i: (0, 0)),      # W_out^T (padded)
                pl.BlockSpec((1, Vp), lambda i: (0, 0)),      # b_out   (padded)
            ],
            out_specs=pl.BlockSpec((rm, Vp), lambda i: (i, 0)),
        ),
        compiler_params=pltpu.CompilerParams(
            dimension_semantics=("parallel",)),
    )(h_flat, w_out_p, b_out_p)

    return logp_flat[:R, :V].reshape(B, T, V)                 # (B, T, V)


def ref_forward(sent, params):
    """Pure-JAX reference (lax.scan LSTM) for correctness checking."""
    w_emb, w_ih_t, w_hh_t, b_gates, w_out_t, b_out = params
    H = w_hh_t.shape[0]
    x_emb = w_emb[sent[:, :-1]]                      # (B, T, D)
    x_tm = jnp.transpose(x_emb, (1, 0, 2))           # (T, B, D)
    B = x_tm.shape[1]

    def step(carry, x_t):
        h, c = carry
        gates = x_t @ w_ih_t + h @ w_hh_t + b_gates
        i = jax.nn.sigmoid(gates[:, 0 * H:1 * H])
        f = jax.nn.sigmoid(gates[:, 1 * H:2 * H])
        g = jnp.tanh(gates[:, 2 * H:3 * H])
        o = jax.nn.sigmoid(gates[:, 3 * H:4 * H])
        c = f * c + i * g
        h = o * jnp.tanh(c)
        return (h, c), h

    h0 = jnp.zeros((B, H), jnp.float32)
    c0 = jnp.zeros((B, H), jnp.float32)
    _, hs = lax.scan(step, (h0, c0), x_tm)           # (T, B, H)
    logits = hs @ w_out_t + b_out                    # (T, B, V)
    logp = jax.nn.log_softmax(logits, axis=-1)
    return jnp.transpose(logp, (1, 0, 2))


def init_params(key, vocab_size, word_dim, h_dim):
    """Deterministic synthetic parameters (PyTorch-like uniform init)."""
    ks = jax.random.split(key, 7)
    bound = 1.0 / jnp.sqrt(h_dim)
    w_emb = jax.random.normal(ks[0], (vocab_size, word_dim), jnp.float32) * 0.1
    w_ih = jax.random.uniform(ks[1], (4 * h_dim, word_dim), jnp.float32, -bound, bound)
    w_hh = jax.random.uniform(ks[2], (4 * h_dim, h_dim), jnp.float32, -bound, bound)
    b_ih = jax.random.uniform(ks[3], (4 * h_dim,), jnp.float32, -bound, bound)
    b_hh = jax.random.uniform(ks[4], (4 * h_dim,), jnp.float32, -bound, bound)
    w_out = jax.random.uniform(ks[5], (vocab_size, h_dim), jnp.float32, -bound, bound)
    b_out = jax.random.uniform(ks[6], (vocab_size,), jnp.float32, -bound, bound)
    return (
        w_emb,
        w_ih.T,                                  # (D, 4H)
        w_hh.T,                                  # (H, 4H)
        (b_ih + b_hh).reshape(1, 4 * h_dim),     # (1, 4H)
        w_out.T,                                 # (H, V)
        b_out.reshape(1, vocab_size),            # (1, V)
    )


if __name__ == "__main__":
    vocab_size = 24
    word_dim = 128
    h_dim = 128
    B, S = 2, 8   # model consumes sent[:, :-1] -> T = 7

    key = jax.random.PRNGKey(0)
    pkey, skey = jax.random.split(key)
    params = init_params(pkey, vocab_size, word_dim, h_dim)
    sent = jax.random.randint(skey, (B, S), 0, vocab_size, dtype=jnp.int32)

    out = jax.block_until_ready(rnnlm_forward(sent, params))
    ref = jax.block_until_ready(ref_forward(sent, params))

    assert out.shape == (B, S - 1, vocab_size)
    assert jnp.allclose(out, ref, atol=2e-2, rtol=2e-2), float(jnp.max(jnp.abs(out - ref)))

    print("KERNEL_OK")
</pallas_src>

<mosaic_0001>
module attributes {stable_mosaic.version = 11 : i64} {
  func.func @_matmul_bias_kernel(%arg0: i32, %arg1: memref<16x128xf32, #tpu.memory_space<vmem>>, %arg2: memref<128x512xf32, #tpu.memory_space<vmem>>, %arg3: memref<1x512xf32, #tpu.memory_space<vmem>>, %arg4: memref<16x512xf32, #tpu.memory_space<vmem>>) attributes {dimension_semantics = [#tpu.dimension_semantics<parallel>], iteration_bounds = array<i64: 1>, scalar_prefetch = 0 : i64, scratch_operands = 0 : i64, tpu.core_type = #tpu.core_type<tc>, window_params = [{transform_indices = @transform_0, window_bounds = array<i64: 16, 128>}, {pipeline_mode = #tpu.pipeline_mode<synchronous>, transform_indices = @transform_1, window_bounds = array<i64: 128, 512>}, {pipeline_mode = #tpu.pipeline_mode<synchronous>, transform_indices = @transform_2, window_bounds = array<i64: 1, 512>}, {transform_indices = @transform_3, window_bounds = array<i64: 16, 512>}]} {
    %c0 = arith.constant 0 : index
    %c0_0 = arith.constant 0 : index
    %0 = vector.load %arg1[%c0, %c0_0] : memref<16x128xf32, #tpu.memory_space<vmem>>, vector<16x128xf32>
    %c0_1 = arith.constant 0 : index
    %c0_2 = arith.constant 0 : index
    %1 = vector.load %arg2[%c0_1, %c0_2] : memref<128x512xf32, #tpu.memory_space<vmem>>, vector<128x512xf32>
    %cst = arith.constant dense<0.000000e+00> : vector<16x512xf32>
    %2 = tpu.matmul %0, %1, %cst {dimension_numbers = #tpu.dot_dimension_numbers<[1], [0], [0], [1], [0, 0, 1, 1], [], []>} : vector<16x128xf32>, vector<128x512xf32>, vector<16x512xf32> -> vector<16x512xf32>
    %c0_3 = arith.constant 0 : index
    %c0_4 = arith.constant 0 : index
    %3 = vector.load %arg3[%c0_3, %c0_4] : memref<1x512xf32, #tpu.memory_space<vmem>>, vector<1x512xf32>
    %4 = vector.broadcast %3 : vector<1x512xf32> to vector<16x512xf32>
    %5 = arith.addf %2, %4 : vector<16x512xf32>
    %c0_5 = arith.constant 0 : index
    %c0_6 = arith.constant 0 : index
    %6 = vector.load %arg4[%c0_5, %c0_6] : memref<16x512xf32, #tpu.memory_space<vmem>>, vector<16x512xf32>
    tpu.vector_store %arg4[%c0_5, %c0_6], %5 {strides = array<i32>} : memref<16x512xf32, #tpu.memory_space<vmem>>, vector<16x512xf32>,
    return
  }
  func.func @transform_0(%arg0: i32) -> (i32, i32) {
    %c0_i32 = arith.constant 0 : i32
    %c0_i32_0 = arith.constant 0 : i32
    return %arg0, %c0_i32 : i32, i32
  }
  func.func @transform_1(%arg0: i32) -> (i32, i32) {
    %c0_i32 = arith.constant 0 : i32
    %c0_i32_0 = arith.constant 0 : i32
    %c0_i32_1 = arith.constant 0 : i32
    return %c0_i32, %c0_i32_0 : i32, i32
  }
  func.func @transform_2(%arg0: i32) -> (i32, i32) {
    %c0_i32 = arith.constant 0 : i32
    %c0_i32_0 = arith.constant 0 : i32
    %c0_i32_1 = arith.constant 0 : i32
    return %c0_i32, %c0_i32_0 : i32, i32
  }
  func.func @transform_3(%arg0: i32) -> (i32, i32) {
    %c0_i32 = arith.constant 0 : i32
    %c0_i32_0 = arith.constant 0 : i32
    return %arg0, %c0_i32 : i32, i32
  }
}

module attributes {stable_mosaic.version = 11 : i64} {
  func.func @_proj_logsoftmax_kernel(%arg0: i32, %arg1: memref<16x128xf32, #tpu.memory_space<vmem>>, %arg2: memref<128x128xf32, #tpu.memory_space<vmem>>, %arg3: memref<1x128xf32, #tpu.memory_space<vmem>>, %arg4: memref<16x128xf32, #tpu.memory_space<vmem>>) attributes {dimension_semantics = [#tpu.dimension_semantics<parallel>], iteration_bounds = array<i64: 1>, scalar_prefetch = 0 : i64, scratch_operands = 0 : i64, tpu.core_type = #tpu.core_type<tc>, window_params = [{transform_indices = @transform_0, window_bounds = array<i64: 16, 128>}, {pipeline_mode = #tpu.pipeline_mode<synchronous>, transform_indices = @transform_1, window_bounds = array<i64: 128, 128>}, {pipeline_mode = #tpu.pipeline_mode<synchronous>, transform_indices = @transform_2, window_bounds = array<i64: 1, 128>}, {transform_indices = @transform_3, window_bounds = array<i64: 16, 128>}]} {
    %c0 = arith.constant 0 : index
    %c0_0 = arith.constant 0 : index
    %0 = vector.load %arg1[%c0, %c0_0] : memref<16x128xf32, #tpu.memory_space<vmem>>, vector<16x128xf32>
    %c0_1 = arith.constant 0 : index
    %c0_2 = arith.constant 0 : index
    %1 = vector.load %arg2[%c0_1, %c0_2] : memref<128x128xf32, #tpu.memory_space<vmem>>, vector<128x128xf32>
    %cst = arith.constant dense<0.000000e+00> : vector<16x128xf32>
    %2 = tpu.matmul %0, %1, %cst {dimension_numbers = #tpu.dot_dimension_numbers<[1], [0], [0], [1], [0, 0, 1, 1], [], []>} : vector<16x128xf32>, vector<128x128xf32>, vector<16x128xf32> -> vector<16x128xf32>
    %c0_3 = arith.constant 0 : index
    %c0_4 = arith.constant 0 : index
    %3 = vector.load %arg3[%c0_3, %c0_4] : memref<1x128xf32, #tpu.memory_space<vmem>>, vector<1x128xf32>
    %4 = vector.broadcast %3 : vector<1x128xf32> to vector<16x128xf32>
    %5 = arith.addf %2, %4 : vector<16x128xf32>
    %cst_5 = arith.constant dense<0xFF800000> : vector<16xf32>
    %6 = vector.multi_reduction <maximumf>, %5, %cst_5 [1] : vector<16x128xf32> to vector<16xf32>
    %7 = vector.shape_cast %6 : vector<16xf32> to vector<16x1xf32>
    %8 = vector.broadcast %7 : vector<16x1xf32> to vector<16x128xf32>
    %9 = arith.subf %5, %8 : vector<16x128xf32>
    %10 = math.exp %9 : vector<16x128xf32>
    %cst_6 = arith.constant dense<0.000000e+00> : vector<16xf32>
    %11 = vector.multi_reduction <add>, %10, %cst_6 [1] : vector<16x128xf32> to vector<16xf32>
    %12 = vector.shape_cast %11 : vector<16xf32> to vector<16x1xf32>
    %13 = math.log %12 : vector<16x1xf32>
    %14 = vector.broadcast %13 : vector<16x1xf32> to vector<16x128xf32>
    %15 = arith.subf %9, %14 : vector<16x128xf32>
    %c0_7 = arith.constant 0 : index
    %c0_8 = arith.constant 0 : index
    %16 = vector.load %arg4[%c0_7, %c0_8] : memref<16x128xf32, #tpu.memory_space<vmem>>, vector<16x128xf32>
    tpu.vector_store %arg4[%c0_7, %c0_8], %15 {strides = array<i32>} : memref<16x128xf32, #tpu.memory_space<vmem>>, vector<16x128xf32>,
    return
  }
  func.func @transform_0(%arg0: i32) -> (i32, i32) {
    %c0_i32 = arith.constant 0 : i32
    %c0_i32_0 = arith.constant 0 : i32
    return %arg0, %c0_i32 : i32, i32
  }
  func.func @transform_1(%arg0: i32) -> (i32, i32) {
    %c0_i32 = arith.constant 0 : i32
    %c0_i32_0 = arith.constant 0 : i32
    %c0_i32_1 = arith.constant 0 : i32
    return %c0_i32, %c0_i32_0 : i32, i32
  }
  func.func @transform_2(%arg0: i32) -> (i32, i32) {
    %c0_i32 = arith.constant 0 : i32
    %c0_i32_0 = arith.constant 0 : i32
    %c0_i32_1 = arith.constant 0 : i32
    return %c0_i32, %c0_i32_0 : i32, i32
  }
  func.func @transform_3(%arg0: i32) -> (i32, i32) {
    %c0_i32 = arith.constant 0 : i32
    %c0_i32_0 = arith.constant 0 : i32
    return %arg0, %c0_i32 : i32, i32
  }
}

module attributes {stable_mosaic.version = 11 : i64} {
  func.func @_lstm_recurrence_kernel(%arg0: i32, %arg1: memref<2x8x512xf32, #tpu.memory_space<vmem>>, %arg2: memref<128x512xf32, #tpu.memory_space<vmem>>, %arg3: memref<2x8x128xf32, #tpu.memory_space<vmem>>, %arg4: memref<2x128xf32, #tpu.memory_space<vmem>>, %arg5: memref<2x128xf32, #tpu.memory_space<vmem>>) attributes {dimension_semantics = [#tpu.dimension_semantics<arbitrary>], iteration_bounds = array<i64: 1>, scalar_prefetch = 0 : i64, scratch_operands = 2 : i64, tpu.core_type = #tpu.core_type<tc>, window_params = [{transform_indices = @transform_0, window_bounds = array<i64: 2, 8, 512>}, {pipeline_mode = #tpu.pipeline_mode<synchronous>, transform_indices = @transform_1, window_bounds = array<i64: 128, 512>}, {transform_indices = @transform_2, window_bounds = array<i64: 2, 8, 128>}]} {
    %c0_i32 = arith.constant 0 : i32
    %0 = arith.cmpi eq, %arg0, %c0_i32 : i32
    %1 = arith.extui %0 : i1 to i32
    %c0_i32_0 = arith.constant 0 : i32
    %2 = arith.cmpi ne, %1, %c0_i32_0 : i32
    scf.if %2 {
      %cst_82 = arith.constant 0.000000e+00 : f32
      %264 = vector.broadcast %cst_82 : f32 to vector<2x128xf32>
      %c0_83 = arith.constant 0 : index
      %c0_84 = arith.constant 0 : index
      %265 = vector.load %arg4[%c0_83, %c0_84] : memref<2x128xf32, #tpu.memory_space<vmem>>, vector<2x128xf32>
      tpu.vector_store %arg4[%c0_83, %c0_84], %264 {strides = array<i32>} : memref<2x128xf32, #tpu.memory_space<vmem>>, vector<2x128xf32>,
      %cst_85 = arith.constant 0.000000e+00 : f32
      %266 = vector.broadcast %cst_85 : f32 to vector<2x128xf32>
      %c0_86 = arith.constant 0 : index
      %c0_87 = arith.constant 0 : index
      %267 = vector.load %arg5[%c0_86, %c0_87] : memref<2x128xf32, #tpu.memory_space<vmem>>, vector<2x128xf32>
      tpu.vector_store %arg5[%c0_86, %c0_87], %266 {strides = array<i32>} : memref<2x128xf32, #tpu.memory_space<vmem>>, vector<2x128xf32>,
    } else {
    }
    %c0 = arith.constant 0 : index
    %c0_1 = arith.constant 0 : index
    %3 = vector.load %arg2[%c0, %c0_1] : memref<128x512xf32, #tpu.memory_space<vmem>>, vector<128x512xf32>
    %c0_2 = arith.constant 0 : index
    %c0_3 = arith.constant 0 : index
    %4 = vector.load %arg4[%c0_2, %c0_3] : memref<2x128xf32, #tpu.memory_space<vmem>>, vector<2x128xf32>
    %c0_4 = arith.constant 0 : index
    %c0_5 = arith.constant 0 : index
    %5 = vector.load %arg5[%c0_4, %c0_5] : memref<2x128xf32, #tpu.memory_space<vmem>>, vector<2x128xf32>
    %c0_6 = arith.constant 0 : index
    %c0_7 = arith.constant 0 : index
    %c0_8 = arith.constant 0 : index
    %6 = vector.load %arg1[%c0_6, %c0_7, %c0_8] : memref<2x8x512xf32, #tpu.memory_space<vmem>>, vector<2x1x512xf32>
    %7 = vector.shape_cast %6 : vector<2x1x512xf32> to vector<2x512xf32>
    %cst = arith.constant dense<0.000000e+00> : vector<2x512xf32>
    %8 = tpu.matmul %4, %3, %cst {dimension_numbers = #tpu.dot_dimension_numbers<[1], [0], [0], [1], [0, 0, 1, 1], [], []>} : vector<2x128xf32>, vector<128x512xf32>, vector<2x512xf32> -> vector<2x512xf32>
    %9 = arith.addf %7, %8 : vector<2x512xf32>
    %10 = vector.extract_strided_slice %9 {offsets = [0, 0], sizes = [2, 128], strides = [1, 1]} : vector<2x512xf32> to vector<2x128xf32>
    %11 = arith.negf %10 : vector<2x128xf32>
    %12 = math.exp %11 : vector<2x128xf32>
    %cst_9 = arith.constant 1.000000e+00 : f32
    %13 = vector.broadcast %cst_9 : f32 to vector<2x128xf32>
    %14 = arith.addf %13, %12 : vector<2x128xf32>
    %15 = arith.divf %13, %14 : vector<2x128xf32>
    %16 = vector.extract_strided_slice %9 {offsets = [0, 128], sizes = [2, 128], strides = [1, 1]} : vector<2x512xf32> to vector<2x128xf32>
    %17 = arith.negf %16 : vector<2x128xf32>
    %18 = math.exp %17 : vector<2x128xf32>
    %cst_10 = arith.constant 1.000000e+00 : f32
    %19 = vector.broadcast %cst_10 : f32 to vector<2x128xf32>
    %20 = arith.addf %19, %18 : vector<2x128xf32>
    %21 = arith.divf %19, %20 : vector<2x128xf32>
    %22 = vector.extract_strided_slice %9 {offsets = [0, 256], sizes = [2, 128], strides = [1, 1]} : vector<2x512xf32> to vector<2x128xf32>
    %23 = math.tanh %22 : vector<2x128xf32>
    %24 = vector.extract_strided_slice %9 {offsets = [0, 384], sizes = [2, 128], strides = [1, 1]} : vector<2x512xf32> to vector<2x128xf32>
    %25 = arith.negf %24 : vector<2x128xf32>
    %26 = math.exp %25 : vector<2x128xf32>
    %cst_11 = arith.constant 1.000000e+00 : f32
    %27 = vector.broadcast %cst_11 : f32 to vector<2x128xf32>
    %28 = arith.addf %27, %26 : vector<2x128xf32>
    %29 = arith.divf %27, %28 : vector<2x128xf32>
    %30 = arith.mulf %21, %5 : vector<2x128xf32>
    %31 = arith.mulf %15, %23 : vector<2x128xf32>
    %32 = arith.addf %30, %31 : vector<2x128xf32>
    %33 = math.tanh %32 : vector<2x128xf32>
    %34 = arith.mulf %29, %33 : vector<2x128xf32>
    %c0_12 = arith.constant 0 : index
    %c0_13 = arith.constant 0 : index
    %c0_14 = arith.constant 0 : index
    %35 = vector.load %arg3[%c0_12, %c0_13, %c0_14] : memref<2x8x128xf32, #tpu.memory_space<vmem>>, vector<2x1x128xf32>
    %36 = vector.shape_cast %35 : vector<2x1x128xf32> to vector<2x128xf32>
    %37 = vector.shape_cast %34 : vector<2x128xf32> to vector<2x1x128xf32>
    tpu.vector_store %arg3[%c0_12, %c0_13, %c0_14], %37 {strides = array<i32>} : memref<2x8x128xf32, #tpu.memory_space<vmem>>, vector<2x1x128xf32>,
    %c0_15 = arith.constant 0 : index
    %c1 = arith.constant 1 : index
    %c0_16 = arith.constant 0 : index
    %38 = vector.load %arg1[%c0_15, %c1, %c0_16] : memref<2x8x512xf32, #tpu.memory_space<vmem>>, vector<2x1x512xf32>
    %39 = vector.shape_cast %38 : vector<2x1x512xf32> to vector<2x512xf32>
    %cst_17 = arith.constant dense<0.000000e+00> : vector<2x512xf32>
    %40 = tpu.matmul %34, %3, %cst_17 {dimension_numbers = #tpu.dot_dimension_numbers<[1], [0], [0], [1], [0, 0, 1, 1], [], []>} : vector<2x128xf32>, vector<128x512xf32>, vector<2x512xf32> -> vector<2x512xf32>
    %41 = arith.addf %39, %40 : vector<2x512xf32>
    %42 = vector.extract_strided_slice %41 {offsets = [0, 0], sizes = [2, 128], strides = [1, 1]} : vector<2x512xf32> to vector<2x128xf32>
    %43 = arith.negf %42 : vector<2x128xf32>
    %44 = math.exp %43 : vector<2x128xf32>
    %cst_18 = arith.constant 1.000000e+00 : f32
    %45 = vector.broadcast %cst_18 : f32 to vector<2x128xf32>
    %46 = arith.addf %45, %44 : vector<2x128xf32>
    %47 = arith.divf %45, %46 : vector<2x128xf32>
    %48 = vector.extract_strided_slice %41 {offsets = [0, 128], sizes = [2, 128], strides = [1, 1]} : vector<2x512xf32> to vector<2x128xf32>
    %49 = arith.negf %48 : vector<2x128xf32>
    %50 = math.exp %49 : vector<2x128xf32>
    %cst_19 = arith.constant 1.000000e+00 : f32
    %51 = vector.broadcast %cst_19 : f32 to vector<2x128xf32>
    %52 = arith.addf %51, %50 : vector<2x128xf32>
    %53 = arith.divf %51, %52 : vector<2x128xf32>
    %54 = vector.extract_strided_slice %41 {offsets = [0, 256], sizes = [2, 128], strides = [1, 1]} : vector<2x512xf32> to vector<2x128xf32>
    %55 = math.tanh %54 : vector<2x128xf32>
    %56 = vector.extract_strided_slice %41 {offsets = [0, 384], sizes = [2, 128], strides = [1, 1]} : vector<2x512xf32> to vector<2x128xf32>
    %57 = arith.negf %56 : vector<2x128xf32>
    %58 = math.exp %57 : vector<2x128xf32>
    %cst_20 = arith.constant 1.000000e+00 : f32
    %59 = vector.broadcast %cst_20 : f32 to vector<2x128xf32>
    %60 = arith.addf %59, %58 : vector<2x128xf32>
    %61 = arith.divf %59, %60 : vector<2x128xf32>
    %62 = arith.mulf %53, %32 : vector<2x128xf32>
    %63 = arith.mulf %47, %55 : vector<2x128xf32>
    %64 = arith.addf %62, %63 : vector<2x128xf32>
    %65 = math.tanh %64 : vector<2x128xf32>
    %66 = arith.mulf %61, %65 : vector<2x128xf32>
    %c0_21 = arith.constant 0 : index
    %c1_22 = arith.constant 1 : index
    %c0_23 = arith.constant 0 : index
    %67 = vector.load %arg3[%c0_21, %c1_22, %c0_23] : memref<2x8x128xf32, #tpu.memory_space<vmem>>, vector<2x1x128xf32>
    %68 = vector.shape_cast %67 : vector<2x1x128xf32> to vector<2x128xf32>
    %69 = vector.shape_cast %66 : vector<2x128xf32> to vector<2x1x128xf32>
    tpu.vector_store %arg3[%c0_21, %c1_22, %c0_23], %69 {strides = array<i32>} : memref<2x8x128xf32, #tpu.memory_space<vmem>>, vector<2x1x128xf32>,
    %c0_24 = arith.constant 0 : index
    %c2 = arith.constant 2 : index
    %c0_25 = arith.constant 0 : index
    %70 = vector.load %arg1[%c0_24, %c2, %c0_25] : memref<2x8x512xf32, #tpu.memory_space<vmem>>, vector<2x1x512xf32>
    %71 = vector.shape_cast %70 : vector<2x1x512xf32> to vector<2x512xf32>
    %cst_26 = arith.constant dense<0.000000e+00> : vector<2x512xf32>
    %72 = tpu.matmul %66, %3, %cst_26 {dimension_numbers = #tpu.dot_dimension_numbers<[1], [0], [0], [1], [0, 0, 1, 1], [], []>} : vector<2x128xf32>, vector<128x512xf32>, vector<2x512xf32> -> vector<2x512xf32>
    %73 = arith.addf %71, %72 : vector<2x512xf32>
    %74 = vector.extract_strided_slice %73 {offsets = [0, 0], sizes = [2, 128], strides = [1, 1]} : vector<2x512xf32> to vector<2x128xf32>
    %75 = arith.negf %74 : vector<2x128xf32>
    %76 = math.exp %75 : vector<2x128xf32>
    %cst_27 = arith.constant 1.000000e+00 : f32
    %77 = vector.broadcast %cst_27 : f32 to vector<2x128xf32>
    %78 = arith.addf %77, %76 : vector<2x128xf32>
    %79 = arith.divf %77, %78 : vector<2x128xf32>
    %80 = vector.extract_strided_slice %73 {offsets = [0, 128], sizes = [2, 128], strides = [1, 1]} : vector<2x512xf32> to vector<2x128xf32>
    %81 = arith.negf %80 : vector<2x128xf32>
    %82 = math.exp %81 : vector<2x128xf32>
    %cst_28 = arith.constant 1.000000e+00 : f32
    %83 = vector.broadcast %cst_28 : f32 to vector<2x128xf32>
    %84 = arith.addf %83, %82 : vector<2x128xf32>
    %85 = arith.divf %83, %84 : vector<2x128xf32>
    %86 = vector.extract_strided_slice %73 {offsets = [0, 256], sizes = [2, 128], strides = [1, 1]} : vector<2x512xf32> to vector<2x128xf32>
    %87 = math.tanh %86 : vector<2x128xf32>
    %88 = vector.extract_strided_slice %73 {offsets = [0, 384], sizes = [2, 128], strides = [1, 1]} : vector<2x512xf32> to vector<2x128xf32>
    %89 = arith.negf %88 : vector<2x128xf32>
    %90 = math.exp %89 : vector<2x128xf32>
    %cst_29 = arith.constant 1.000000e+00 : f32
    %91 = vector.broadcast %cst_29 : f32 to vector<2x128xf32>
    %92 = arith.addf %91, %90 : vector<2x128xf32>
    %93 = arith.divf %91, %92 : vector<2x128xf32>
    %94 = arith.mulf %85, %64 : vector<2x128xf32>
    %95 = arith.mulf %79, %87 : vector<2x128xf32>
    %96 = arith.addf %94, %95 : vector<2x128xf32>
    %97 = math.tanh %96 : vector<2x128xf32>
    %98 = arith.mulf %93, %97 : vector<2x128xf32>
    %c0_30 = arith.constant 0 : index
    %c2_31 = arith.constant 2 : index
    %c0_32 = arith.constant 0 : index
    %99 = vector.load %arg3[%c0_30, %c2_31, %c0_32] : memref<2x8x128xf32, #tpu.memory_space<vmem>>, vector<2x1x128xf32>
    %100 = vector.shape_cast %99 : vector<2x1x128xf32> to vector<2x128xf32>
    %101 = vector.shape_cast %98 : vector<2x128xf32> to vector<2x1x128xf32>
    tpu.vector_store %arg3[%c0_30, %c2_31, %c0_32], %101 {strides = array<i32>} : memref<2x8x128xf32, #tpu.memory_space<vmem>>, vector<2x1x128xf32>,
    %c0_33 = arith.constant 0 : index
    %c3 = arith.constant 3 : index
    %c0_34 = arith.constant 0 : index
    %102 = vector.load %arg1[%c0_33, %c3, %c0_34] : memref<2x8x512xf32, #tpu.memory_space<vmem>>, vector<2x1x512xf32>
    %103 = vector.shape_cast %102 : vector<2x1x512xf32> to vector<2x512xf32>
    %cst_35 = arith.constant dense<0.000000e+00> : vector<2x512xf32>
    %104 = tpu.matmul %98, %3, %cst_35 {dimension_numbers = #tpu.dot_dimension_numbers<[1], [0], [0], [1], [0, 0, 1, 1], [], []>} : vector<2x128xf32>, vector<128x512xf32>, vector<2x512xf32> -> vector<2x512xf32>
    %105 = arith.addf %103, %104 : vector<2x512xf32>
    %106 = vector.extract_strided_slice %105 {offsets = [0, 0], sizes = [2, 128], strides = [1, 1]} : vector<2x512xf32> to vector<2x128xf32>
    %107 = arith.negf %106 : vector<2x128xf32>
    %108 = math.exp %107 : vector<2x128xf32>
    %cst_36 = arith.constant 1.000000e+00 : f32
    %109 = vector.broadcast %cst_36 : f32 to vector<2x128xf32>
    %110 = arith.addf %109, %108 : vector<2x128xf32>
    %111 = arith.divf %109, %110 : vector<2x128xf32>
    %112 = vector.extract_strided_slice %105 {offsets = [0, 128], sizes = [2, 128], strides = [1, 1]} : vector<2x512xf32> to vector<2x128xf32>
    %113 = arith.negf %112 : vector<2x128xf32>
    %114 = math.exp %113 : vector<2x128xf32>
    %cst_37 = arith.constant 1.000000e+00 : f32
    %115 = vector.broadcast %cst_37 : f32 to vector<2x128xf32>
    %116 = arith.addf %115, %114 : vector<2x128xf32>
    %117 = arith.divf %115, %116 : vector<2x128xf32>
    %118 = vector.extract_strided_slice %105 {offsets = [0, 256], sizes = [2, 128], strides = [1, 1]} : vector<2x512xf32> to vector<2x128xf32>
    %119 = math.tanh %118 : vector<2x128xf32>
    %120 = vector.extract_strided_slice %105 {offsets = [0, 384], sizes = [2, 128], strides = [1, 1]} : vector<2x512xf32> to vector<2x128xf32>
    %121 = arith.negf %120 : vector<2x128xf32>
    %122 = math.exp %121 : vector<2x128xf32>
    %cst_38 = arith.constant 1.000000e+00 : f32
    %123 = vector.broadcast %cst_38 : f32 to vector<2x128xf32>
    %124 = arith.addf %123, %122 : vector<2x128xf32>
    %125 = arith.divf %123, %124 : vector<2x128xf32>
    %126 = arith.mulf %117, %96 : vector<2x128xf32>
    %127 = arith.mulf %111, %119 : vector<2x128xf32>
    %128 = arith.addf %126, %127 : vector<2x128xf32>
    %129 = math.tanh %128 : vector<2x128xf32>
    %130 = arith.mulf %125, %129 : vector<2x128xf32>
    %c0_39 = arith.constant 0 : index
    %c3_40 = arith.constant 3 : index
    %c0_41 = arith.constant 0 : index
    %131 = vector.load %arg3[%c0_39, %c3_40, %c0_41] : memref<2x8x128xf32, #tpu.memory_space<vmem>>, vector<2x1x128xf32>
    %132 = vector.shape_cast %131 : vector<2x1x128xf32> to vector<2x128xf32>
    %133 = vector.shape_cast %130 : vector<2x128xf32> to vector<2x1x128xf32>
    tpu.vector_store %arg3[%c0_39, %c3_40, %c0_41], %133 {strides = array<i32>} : memref<2x8x128xf32, #tpu.memory_space<vmem>>, vector<2x1x128xf32>,
    %c0_42 = arith.constant 0 : index
    %c4 = arith.constant 4 : index
    %c0_43 = arith.constant 0 : index
    %134 = vector.load %arg1[%c0_42, %c4, %c0_43] : memref<2x8x512xf32, #tpu.memory_space<vmem>>, vector<2x1x512xf32>
    %135 = vector.shape_cast %134 : vector<2x1x512xf32> to vector<2x512xf32>
    %cst_44 = arith.constant dense<0.000000e+00> : vector<2x512xf32>
    %136 = tpu.matmul %130, %3, %cst_44 {dimension_numbers = #tpu.dot_dimension_numbers<[1], [0], [0], [1], [0, 0, 1, 1], [], []>} : vector<2x128xf32>, vector<128x512xf32>, vector<2x512xf32> -> vector<2x512xf32>
    %137 = arith.addf %135, %136 : vector<2x512xf32>
    %138 = vector.extract_strided_slice %137 {offsets = [0, 0], sizes = [2, 128], strides = [1, 1]} : vector<2x512xf32> to vector<2x128xf32>
    %139 = arith.negf %138 : vector<2x128xf32>
    %140 = math.exp %139 : vector<2x128xf32>
    %cst_45 = arith.constant 1.000000e+00 : f32
    %141 = vector.broadcast %cst_45 : f32 to vector<2x128xf32>
    %142 = arith.addf %141, %140 : vector<2x128xf32>
    %143 = arith.divf %141, %142 : vector<2x128xf32>
    %144 = vector.extract_strided_slice %137 {offsets = [0, 128], sizes = [2, 128], strides = [1, 1]} : vector<2x512xf32> to vector<2x128xf32>
    %145 = arith.negf %144 : vector<2x128xf32>
    %146 = math.exp %145 : vector<2x128xf32>
    %cst_46 = arith.constant 1.000000e+00 : f32
    %147 = vector.broadcast %cst_46 : f32 to vector<2x128xf32>
    %148 = arith.addf %147, %146 : vector<2x128xf32>
    %149 = arith.divf %147, %148 : vector<2x128xf32>
    %150 = vector.extract_strided_slice %137 {offsets = [0, 256], sizes = [2, 128], strides = [1, 1]} : vector<2x512xf32> to vector<2x128xf32>
    %151 = math.tanh %150 : vector<2x128xf32>
    %152 = vector.extract_strided_slice %137 {offsets = [0, 384], sizes = [2, 128], strides = [1, 1]} : vector<2x512xf32> to vector<2x128xf32>
    %153 = arith.negf %152 : vector<2x128xf32>
    %154 = math.exp %153 : vector<2x128xf32>
    %cst_47 = arith.constant 1.000000e+00 : f32
    %155 = vector.broadcast %cst_47 : f32 to vector<2x128xf32>
    %156 = arith.addf %155, %154 : vector<2x128xf32>
    %157 = arith.divf %155, %156 : vector<2x128xf32>
    %158 = arith.mulf %149, %128 : vector<2x128xf32>
    %159 = arith.mulf %143, %151 : vector<2x128xf32>
    %160 = arith.addf %158, %159 : vector<2x128xf32>
    %161 = math.tanh %160 : vector<2x128xf32>
    %162 = arith.mulf %157, %161 : vector<2x128xf32>
    %c0_48 = arith.constant 0 : index
    %c4_49 = arith.constant 4 : index
    %c0_50 = arith.constant 0 : index
    %163 = vector.load %arg3[%c0_48, %c4_49, %c0_50] : memref<2x8x128xf32, #tpu.memory_space<vmem>>, vector<2x1x128xf32>
    %164 = vector.shape_cast %163 : vector<2x1x128xf32> to vector<2x128xf32>
    %165 = vector.shape_cast %162 : vector<2x128xf32> to vector<2x1x128xf32>
    tpu.vector_store %arg3[%c0_48, %c4_49, %c0_50], %165 {strides = array<i32>} : memref<2x8x128xf32, #tpu.memory_space<vmem>>, vector<2x1x128xf32>,
    %c0_51 = arith.constant 0 : index
    %c5 = arith.constant 5 : index
    %c0_52 = arith.constant 0 : index
    %166 = vector.load %arg1[%c0_51, %c5, %c0_52] : memref<2x8x512xf32, #tpu.memory_space<vmem>>, vector<2x1x512xf32>
    %167 = vector.shape_cast %166 : vector<2x1x512xf32> to vector<2x512xf32>
    %cst_53 = arith.constant dense<0.000000e+00> : vector<2x512xf32>
    %168 = tpu.matmul %162, %3, %cst_53 {dimension_numbers = #tpu.dot_dimension_numbers<[1], [0], [0], [1], [0, 0, 1, 1], [], []>} : vector<2x128xf32>, vector<128x512xf32>, vector<2x512xf32> -> vector<2x512xf32>
    %169 = arith.addf %167, %168 : vector<2x512xf32>
    %170 = vector.extract_strided_slice %169 {offsets = [0, 0], sizes = [2, 128], strides = [1, 1]} : vector<2x512xf32> to vector<2x128xf32>
    %171 = arith.negf %170 : vector<2x128xf32>
    %172 = math.exp %171 : vector<2x128xf32>
    %cst_54 = arith.constant 1.000000e+00 : f32
    %173 = vector.broadcast %cst_54 : f32 to vector<2x128xf32>
    %174 = arith.addf %173, %172 : vector<2x128xf32>
    %175 = arith.divf %173, %174 : vector<2x128xf32>
    %176 = vector.extract_strided_slice %169 {offsets = [0, 128], sizes = [2, 128], strides = [1, 1]} : vector<2x512xf32> to vector<2x128xf32>
    %177 = arith.negf %176 : vector<2x128xf32>
    %178 = math.exp %177 : vector<2x128xf32>
    %cst_55 = arith.constant 1.000000e+00 : f32
    %179 = vector.broadcast %cst_55 : f32 to vector<2x128xf32>
    %180 = arith.addf %179, %178 : vector<2x128xf32>
    %181 = arith.divf %179, %180 : vector<2x128xf32>
    %182 = vector.extract_strided_slice %169 {offsets = [0, 256], sizes = [2, 128], strides = [1, 1]} : vector<2x512xf32> to vector<2x128xf32>
    %183 = math.tanh %182 : vector<2x128xf32>
    %184 = vector.extract_strided_slice %169 {offsets = [0, 384], sizes = [2, 128], strides = [1, 1]} : vector<2x512xf32> to vector<2x128xf32>
    %185 = arith.negf %184 : vector<2x128xf32>
    %186 = math.exp %185 : vector<2x128xf32>
    %cst_56 = arith.constant 1.000000e+00 : f32
    %187 = vector.broadcast %cst_56 : f32 to vector<2x128xf32>
    %188 = arith.addf %187, %186 : vector<2x128xf32>
    %189 = arith.divf %187, %188 : vector<2x128xf32>
    %190 = arith.mulf %181, %160 : vector<2x128xf32>
    %191 = arith.mulf %175, %183 : vector<2x128xf32>
    %192 = arith.addf %190, %191 : vector<2x128xf32>
    %193 = math.tanh %192 : vector<2x128xf32>
    %194 = arith.mulf %189, %193 : vector<2x128xf32>
    %c0_57 = arith.constant 0 : index
    %c5_58 = arith.constant 5 : index
    %c0_59 = arith.constant 0 : index
    %195 = vector.load %arg3[%c0_57, %c5_58, %c0_59] : memref<2x8x128xf32, #tpu.memory_space<vmem>>, vector<2x1x128xf32>
    %196 = vector.shape_cast %195 : vector<2x1x128xf32> to vector<2x128xf32>
    %197 = vector.shape_cast %194 : vector<2x128xf32> to vector<2x1x128xf32>
    tpu.vector_store %arg3[%c0_57, %c5_58, %c0_59], %197 {strides = array<i32>} : memref<2x8x128xf32, #tpu.memory_space<vmem>>, vector<2x1x128xf32>,
    %c0_60 = arith.constant 0 : index
    %c6 = arith.constant 6 : index
    %c0_61 = arith.constant 0 : index
    %198 = vector.load %arg1[%c0_60, %c6, %c0_61] : memref<2x8x512xf32, #tpu.memory_space<vmem>>, vector<2x1x512xf32>
    %199 = vector.shape_cast %198 : vector<2x1x512xf32> to vector<2x512xf32>
    %cst_62 = arith.constant dense<0.000000e+00> : vector<2x512xf32>
    %200 = tpu.matmul %194, %3, %cst_62 {dimension_numbers = #tpu.dot_dimension_numbers<[1], [0], [0], [1], [0, 0, 1, 1], [], []>} : vector<2x128xf32>, vector<128x512xf32>, vector<2x512xf32> -> vector<2x512xf32>
    %201 = arith.addf %199, %200 : vector<2x512xf32>
    %202 = vector.extract_strided_slice %201 {offsets = [0, 0], sizes = [2, 128], strides = [1, 1]} : vector<2x512xf32> to vector<2x128xf32>
    %203 = arith.negf %202 : vector<2x128xf32>
    %204 = math.exp %203 : vector<2x128xf32>
    %cst_63 = arith.constant 1.000000e+00 : f32
    %205 = vector.broadcast %cst_63 : f32 to vector<2x128xf32>
    %206 = arith.addf %205, %204 : vector<2x128xf32>
    %207 = arith.divf %205, %206 : vector<2x128xf32>
    %208 = vector.extract_strided_slice %201 {offsets = [0, 128], sizes = [2, 128], strides = [1, 1]} : vector<2x512xf32> to vector<2x128xf32>
    %209 = arith.negf %208 : vector<2x128xf32>
    %210 = math.exp %209 : vector<2x128xf32>
    %cst_64 = arith.constant 1.000000e+00 : f32
    %211 = vector.broadcast %cst_64 : f32 to vector<2x128xf32>
    %212 = arith.addf %211, %210 : vector<2x128xf32>
    %213 = arith.divf %211, %212 : vector<2x128xf32>
    %214 = vector.extract_strided_slice %201 {offsets = [0, 256], sizes = [2, 128], strides = [1, 1]} : vector<2x512xf32> to vector<2x128xf32>
    %215 = math.tanh %214 : vector<2x128xf32>
    %216 = vector.extract_strided_slice %201 {offsets = [0, 384], sizes = [2, 128], strides = [1, 1]} : vector<2x512xf32> to vector<2x128xf32>
    %217 = arith.negf %216 : vector<2x128xf32>
    %218 = math.exp %217 : vector<2x128xf32>
    %cst_65 = arith.constant 1.000000e+00 : f32
    %219 = vector.broadcast %cst_65 : f32 to vector<2x128xf32>
    %220 = arith.addf %219, %218 : vector<2x128xf32>
    %221 = arith.divf %219, %220 : vector<2x128xf32>
    %222 = arith.mulf %213, %192 : vector<2x128xf32>
    %223 = arith.mulf %207, %215 : vector<2x128xf32>
    %224 = arith.addf %222, %223 : vector<2x128xf32>
    %225 = math.tanh %224 : vector<2x128xf32>
    %226 = arith.mulf %221, %225 : vector<2x128xf32>
    %c0_66 = arith.constant 0 : index
    %c6_67 = arith.constant 6 : index
    %c0_68 = arith.constant 0 : index
    %227 = vector.load %arg3[%c0_66, %c6_67, %c0_68] : memref<2x8x128xf32, #tpu.memory_space<vmem>>, vector<2x1x128xf32>
    %228 = vector.shape_cast %227 : vector<2x1x128xf32> to vector<2x128xf32>
    %229 = vector.shape_cast %226 : vector<2x128xf32> to vector<2x1x128xf32>
    tpu.vector_store %arg3[%c0_66, %c6_67, %c0_68], %229 {strides = array<i32>} : memref<2x8x128xf32, #tpu.memory_space<vmem>>, vector<2x1x128xf32>,
    %c0_69 = arith.constant 0 : index
    %c7 = arith.constant 7 : index
    %c0_70 = arith.constant 0 : index
    %230 = vector.load %arg1[%c0_69, %c7, %c0_70] : memref<2x8x512xf32, #tpu.memory_space<vmem>>, vector<2x1x512xf32>
    %231 = vector.shape_cast %230 : vector<2x1x512xf32> to vector<2x512xf32>
    %cst_71 = arith.constant dense<0.000000e+00> : vector<2x512xf32>
    %232 = tpu.matmul %226, %3, %cst_71 {dimension_numbers = #tpu.dot_dimension_numbers<[1], [0], [0], [1], [0, 0, 1, 1], [], []>} : vector<2x128xf32>, vector<128x512xf32>, vector<2x512xf32> -> vector<2x512xf32>
    %233 = arith.addf %231, %232 : vector<2x512xf32>
    %234 = vector.extract_strided_slice %233 {offsets = [0, 0], sizes = [2, 128], strides = [1, 1]} : vector<2x512xf32> to vector<2x128xf32>
    %235 = arith.negf %234 : vector<2x128xf32>
    %236 = math.exp %235 : vector<2x128xf32>
    %cst_72 = arith.constant 1.000000e+00 : f32
    %237 = vector.broadcast %cst_72 : f32 to vector<2x128xf32>
    %238 = arith.addf %237, %236 : vector<2x128xf32>
    %239 = arith.divf %237, %238 : vector<2x128xf32>
    %240 = vector.extract_strided_slice %233 {offsets = [0, 128], sizes = [2, 128], strides = [1, 1]} : vector<2x512xf32> to vector<2x128xf32>
    %241 = arith.negf %240 : vector<2x128xf32>
    %242 = math.exp %241 : vector<2x128xf32>
    %cst_73 = arith.constant 1.000000e+00 : f32
    %243 = vector.broadcast %cst_73 : f32 to vector<2x128xf32>
    %244 = arith.addf %243, %242 : vector<2x128xf32>
    %245 = arith.divf %243, %244 : vector<2x128xf32>
    %246 = vector.extract_strided_slice %233 {offsets = [0, 256], sizes = [2, 128], strides = [1, 1]} : vector<2x512xf32> to vector<2x128xf32>
    %247 = math.tanh %246 : vector<2x128xf32>
    %248 = vector.extract_strided_slice %233 {offsets = [0, 384], sizes = [2, 128], strides = [1, 1]} : vector<2x512xf32> to vector<2x128xf32>
    %249 = arith.negf %248 : vector<2x128xf32>
    %250 = math.exp %249 : vector<2x128xf32>
    %cst_74 = arith.constant 1.000000e+00 : f32
    %251 = vector.broadcast %cst_74 : f32 to vector<2x128xf32>
    %252 = arith.addf %251, %250 : vector<2x128xf32>
    %253 = arith.divf %251, %252 : vector<2x128xf32>
    %254 = arith.mulf %245, %224 : vector<2x128xf32>
    %255 = arith.mulf %239, %247 : vector<2x128xf32>
    %256 = arith.addf %254, %255 : vector<2x128xf32>
    %257 = math.tanh %256 : vector<2x128xf32>
    %258 = arith.mulf %253, %257 : vector<2x128xf32>
    %c0_75 = arith.constant 0 : index
    %c7_76 = arith.constant 7 : index
    %c0_77 = arith.constant 0 : index
    %259 = vector.load %arg3[%c0_75, %c7_76, %c0_77] : memref<2x8x128xf32, #tpu.memory_space<vmem>>, vector<2x1x128xf32>
    %260 = vector.shape_cast %259 : vector<2x1x128xf32> to vector<2x128xf32>
    %261 = vector.shape_cast %258 : vector<2x128xf32> to vector<2x1x128xf32>
    tpu.vector_store %arg3[%c0_75, %c7_76, %c0_77], %261 {strides = array<i32>} : memref<2x8x128xf32, #tpu.memory_space<vmem>>, vector<2x1x128xf32>,
    %c0_78 = arith.constant 0 : index
    %c0_79 = arith.constant 0 : index
    %262 = vector.load %arg4[%c0_78, %c0_79] : memref<2x128xf32, #tpu.memory_space<vmem>>, vector<2x128xf32>
    tpu.vector_store %arg4[%c0_78, %c0_79], %258 {strides = array<i32>} : memref<2x128xf32, #tpu.memory_space<vmem>>, vector<2x128xf32>,
    %c0_80 = arith.constant 0 : index
    %c0_81 = arith.constant 0 : index
    %263 = vector.load %arg5[%c0_80, %c0_81] : memref<2x128xf32, #tpu.memory_space<vmem>>, vector<2x128xf32>
    tpu.vector_store %arg5[%c0_80, %c0_81], %256 {strides = array<i32>} : memref<2x128xf32, #tpu.memory_space<vmem>>, vector<2x128xf32>,
    return
  }
  func.func @transform_0(%arg0: i32) -> (i32, i32, i32) {
    %c0_i32 = arith.constant 0 : i32
    %c0_i32_0 = arith.constant 0 : i32
    %c0_i32_1 = arith.constant 0 : i32
    return %c0_i32, %arg0, %c0_i32_0 : i32, i32, i32
  }
  func.func @transform_1(%arg0: i32) -> (i32, i32) {
    %c0_i32 = arith.constant 0 : i32
    %c0_i32_0 = arith.constant 0 : i32
    %c0_i32_1 = arith.constant 0 : i32
    return %c0_i32, %c0_i32_0 : i32, i32
  }
  func.func @transform_2(%arg0: i32) -> (i32, i32, i32) {
    %c0_i32 = arith.constant 0 : i32
    %c0_i32_0 = arith.constant 0 : i32
    %c0_i32_1 = arith.constant 0 : i32
    return %c0_i32, %arg0, %c0_i32_0 : i32, i32, i32
  }
}

</mosaic_0001>

<llo_original>
// kernel: rnnlm_forward.5
$region0: #{rnnlm_forward.5}
  #allocation0 [shape = 'u32[]', space=smem, size = 0x4, offset = 0x4, fixed_abs, tag = 'smem constant byte address 0x4 - core index']
  #allocation1 [shape = 'u32[144,128]{1,0:T(1,128)}', space=vmem, size = 0x12000, scoped, tag = 'internal scratch']
  %s0 = inlined_call_operand.vmem [shape: f32[16,128], index: 0, kind: input, shape index: {}]
  %s1 = inlined_call_operand.vmem [shape: f32[128,128], index: 1, kind: input, shape index: {}]
  %s2 = inlined_call_operand.vmem [shape: f32[1,128], index: 2, kind: input, shape index: {}]
  %s3 = inlined_call_operand.vmem [shape: f32[16,128], index: 3, kind: output, shape index: {}]
  %s4 = sld [smem:[#allocation0]]
  $region22: #{rnnlm_forward.5} parent=0
    _
  %s6 = ssub.s32 1, %s4
  %s7 = scalar_select 0, %s6, %s4
  // Predicated region
  $region2: #{rnnlm_forward.5} parent=0 // pred_check
    _
  $region3: #{rnnlm_forward.5} parent=0 // pred_check_branch
    %9 = sbr.rel (0) target = $region5
  $region4: #{rnnlm_forward.5} parent=0 // pred_region
    _
  $region5: #{rnnlm_forward.5} parent=0 // pred_fallthru
    _
  // Predicated region
  $region6: #{rnnlm_forward.5} parent=0 // pred_check
    _
  $region7: #{rnnlm_forward.5} parent=0 // pred_check_branch
    %11 = sbr.rel (0) target = $region9
  $region8: #{rnnlm_forward.5} parent=0 // pred_region
    _
  $region9: #{rnnlm_forward.5} parent=0 // pred_fallthru
    _
  // Predicated region
  $region10: #{rnnlm_forward.5} parent=0 // pred_check
    _
  $region11: #{rnnlm_forward.5} parent=0 // pred_check_branch
    %13 = sbr.rel (0) target = $region13
  $region12: #{rnnlm_forward.5} parent=0 // pred_region
    _
  $region13: #{rnnlm_forward.5} parent=0 // pred_fallthru
    _
  %v14 = vld [vmem:[%s0] sm:$0xff]
  %v15 = vld [vmem:[%s0 + $0x8] sm:$0xff]
  %v16 = vld [vmem:[%s1] sm:$0xff]
  %v17 = vld [vmem:[%s1 + $0x8] sm:$0xff]
  %v18 = vld [vmem:[%s1 + $0x10] sm:$0xff]
  %v19 = vld [vmem:[%s1 + $0x18] sm:$0xff]
  %v20 = vld [vmem:[%s1 + $0x20] sm:$0xff]
  %v21 = vld [vmem:[%s1 + $0x28] sm:$0xff]
  %v22 = vld [vmem:[%s1 + $0x30] sm:$0xff]
  %v23 = vld [vmem:[%s1 + $0x38] sm:$0xff]
  %v24 = vld [vmem:[%s1 + $0x40] sm:$0xff]
  %v25 = vld [vmem:[%s1 + $0x48] sm:$0xff]
  %v26 = vld [vmem:[%s1 + $0x50] sm:$0xff]
  %v27 = vld [vmem:[%s1 + $0x58] sm:$0xff]
  %v28 = vld [vmem:[%s1 + $0x60] sm:$0xff]
  %v29 = vld [vmem:[%s1 + $0x68] sm:$0xff]
  %v30 = vld [vmem:[%s1 + $0x70] sm:$0xff]
  %v31 = vld [vmem:[%s1 + $0x78] sm:$0xff]
  %v32 = vld [vmem:[%s2] sm:$0x1]
  %v34 = vlaneseq
  %v35 = vshrl.u32 %v34, 7
  %v36 = vsub.s32 0, %v35
  %v37 = vrot.slane %v32, %v36
  %39 = vmatprep.subr.mxu0 0.0
  %40 = vmatpush1.msra.mxu0 %v16
  %41 = vmatprep.subr.mxu0 0.0
  %42 = vmatpush1.msra.mxu0 %v17
  %43 = vmatprep.subr.mxu0 0.0
  %44 = vmatpush1.msra.mxu0 %v18
  %45 = vmatprep.subr.mxu0 0.0
  %46 = vmatpush1.msra.mxu0 %v19
  %47 = vmatprep.subr.mxu0 0.0
  %48 = vmatpush1.msra.mxu0 %v20
  %49 = vmatprep.subr.mxu0 0.0
  %50 = vmatpush1.msra.mxu0 %v21
  %51 = vmatprep.subr.mxu0 0.0
  %52 = vmatpush1.msra.mxu0 %v22
  %53 = vmatprep.subr.mxu0 0.0
  %54 = vmatpush1.msra.mxu0 %v23
  %55 = vmatprep.subr.mxu0 0.0
  %56 = vmatpush1.msra.mxu0 %v24
  %57 = vmatprep.subr.mxu0 0.0
  %58 = vmatpush1.msra.mxu0 %v25
  %59 = vmatprep.subr.mxu0 0.0
  %60 = vmatpush1.msra.mxu0 %v26
  %61 = vmatprep.subr.mxu0 0.0
  %62 = vmatpush1.msra.mxu0 %v27
  %63 = vmatprep.subr.mxu0 0.0
  %64 = vmatpush1.msra.mxu0 %v28
  %65 = vmatprep.subr.mxu0 0.0
  %66 = vmatpush1.msra.mxu0 %v29
  %67 = vmatprep.subr.mxu0 0.0
  %68 = vmatpush1.msra.mxu0 %v30
  %69 = vmatprep.subr.mxu0 0.0
  %70 = vmatpush1.msra.mxu0 %v31
  %71 = vmatprep.subr.mxu0 0.0
  %72 = vmatpush1.msra.mxu0 0.0
  %73 = vmatprep.subr.mxu0 0.0
  %74 = vmatpush1.msra.mxu0 0.0
  %75 = vmatprep.subr.mxu0 0.0
  %76 = vmatpush1.msra.mxu0 0.0
  %77 = vmatprep.subr.mxu0 0.0
  %78 = vmatpush1.msra.mxu0 0.0
  %79 = vmatprep.subr.mxu0 0.0
  %80 = vmatpush1.msra.mxu0 0.0
  %81 = vmatprep.subr.mxu0 0.0
  %82 = vmatpush1.msra.mxu0 0.0
  %83 = vmatprep.subr.mxu0 0.0
  %84 = vmatpush1.msra.mxu0 0.0
  %85 = vmatprep.subr.mxu0 0.0
  %86 = vmatpush1.msra.mxu0 0.0
  %87 = vmatprep.subr.mxu0 0.0
  %88 = vmatpush1.msra.mxu0 0.0
  %89 = vmatprep.subr.mxu0 0.0
  %90 = vmatpush1.msra.mxu0 0.0
  %91 = vmatprep.subr.mxu0 0.0
  %92 = vmatpush1.msra.mxu0 0.0
  %93 = vmatprep.subr.mxu0 0.0
  %94 = vmatpush1.msra.mxu0 0.0
  %95 = vmatprep.subr.mxu0 0.0
  %96 = vmatpush1.msra.mxu0 0.0
  %97 = vmatprep.subr.mxu0 0.0
  %98 = vmatpush1.msra.mxu0 0.0
  %99 = vmatprep.subr.mxu0 0.0
  %100 = vmatpush1.msra.mxu0 0.0
  %101 = vmatprep.subr.mxu0 0.0
  %102 = vmatpush1.msra.mxu0 0.0
  %103 = vmatprep.mubr.f32.mxu0 0.0
  %104 = vmatmul.mubr.f32.gmra.mrb[0].mxu0 %v14
  %v105 = vpop.f32.mrb[0].mxu0
  %v106 = vadd.f32 %v37, %v105
  %v107 = vpop.f32.mrb[0].mxu0
  %108 = vmatprep.mubr.f32.mxu0 0.0
  %109 = vmatmul.mubr.f32.gmra.mrb[0].mxu0 %v15
  %v110 = vpop.f32.mrb[0].mxu0
  %v111 = vadd.f32 %v37, %v110
  %v112 = vpop.f32.mrb[0].mxu0
  %113 = vdwg.mxu0
  %114 = vmax.xlane.f32.xlu0 %v106
  %v115 = vpop.xlane.xlu0 %114
  %116 = vmax.xlane.f32.xlu0 %v111
  %v117 = vpop.xlane.xlu0 %116
  %v118 = vsub.f32 %v106, %v115
  %v119 = vsub.f32 %v111, %v117
  %v120 = vmul.f32 %v118, 1.442695
  %v121 = vpow.pop %v120
  %v122 = vmul.f32 %v119, 1.442695
  %v123 = vpow.pop %v122
  %124 = vadd.xlane.f32.xlu0 %v121
  %v125 = vpop.xlane.xlu0 %124
  %126 = vadd.xlane.f32.xlu0 %v123
  %v127 = vpop.xlane.xlu0 %126
  %v128 = vlog2.pop %v125
  %v129 = vmul.f32 %v128, 0.6931472
  %v130 = vlog2.pop %v127
  %v131 = vmul.f32 %v130, 0.6931472
  %v132 = vsub.f32 %v118, %v129
  %v133 = vsub.f32 %v119, %v131
  %134 = vst [vmem:[%s3] sm:$0xff] %v132
  %135 = vst [vmem:[%s3 + $0x8] sm:$0xff] %v133
  // Predicated region
  $region14: #{rnnlm_forward.5} parent=0 // pred_check
    _
  $region15: #{rnnlm_forward.5} parent=0 // pred_check_branch
    %137 = sbr.rel (0) target = $region17
  $region16: #{rnnlm_forward.5} parent=0 // pred_region
    _
  $region17: #{rnnlm_forward.5} parent=0 // pred_fallthru
    _
  // Predicated region
  $region18: #{rnnlm_forward.5} parent=0 // pred_check
    _
  $region19: #{rnnlm_forward.5} parent=0 // pred_check_branch
    %139 = sbr.rel (0) target = $region21
  $region20: #{rnnlm_forward.5} parent=0 // pred_region
    _
  $region21: #{rnnlm_forward.5} parent=0 // pred_fallthru
    _

// kernel: rnnlm_forward.3
$region0: #{rnnlm_forward.3}
  #allocation0 [shape = 'u32[]', space=smem, size = 0x4, offset = 0x4, fixed_abs, tag = 'smem constant byte address 0x4 - core index']
  #allocation1 [shape = 'u32[144,128]{1,0:T(1,128)}', space=vmem, size = 0x12000, scoped, tag = 'internal scratch']
  %s0 = inlined_call_operand.vmem [shape: f32[16,128], index: 0, kind: input, shape index: {}]
  %s1 = inlined_call_operand.hbm [shape: f32[128,512], index: 1, kind: input, shape index: {}]
  %s2 = inlined_call_operand.vmem [shape: f32[1,512], index: 2, kind: input, shape index: {}]
  %s3 = inlined_call_operand.vmem [shape: f32[16,512], index: 3, kind: output, shape index: {}]
  %s4 = sld [smem:[#allocation0]]
  $region26: #{rnnlm_forward.3} parent=0
    _
  %s6 = ssub.s32 1, %s4
  %s7 = scalar_select 0, %s6, %s4
  $region1: #{rnnlm_forward.3} parent=0
    #allocation2 [shape = 'u8[262144]{0}', space=vmem, size = 0x40000, scoped, tag = 'input window, operand 1, single buffered']
    #allocation3 [shape = 's32[1]{0}', space=sflag, size = 0x4, scoped, tag = 'scoped memory for rnnlm_forward.3']
    %8 = vsyncpa [#allocation3], 0
    // Predicated region
    $region2: #{rnnlm_forward.3} parent=1 // pred_check
      _
    $region3: #{rnnlm_forward.3} parent=1 // pred_check_branch
      %10 = sbr.rel (0) target = $region5
    $region4: #{rnnlm_forward.3} parent=1 // pred_region
      _
    $region5: #{rnnlm_forward.3} parent=1 // pred_fallthru
      _
    // Predicated region
    $region6: #{rnnlm_forward.3} parent=1 // pred_check
      _
    $region7: #{rnnlm_forward.3} parent=1 // pred_check_branch
      %12 = sbr.rel (0) target = $region9
    $region8: #{rnnlm_forward.3} parent=1 // pred_region
      %s14 = ssub.s32 8192, 8192
      %15 = vsyncadd [#allocation3], %s14
      %s16 = sshll.u32 [#allocation2], 4
      %s17 = int_to_ptr.vmem [resolvable:$true] %s16
      %22 = dma.hbm_to_vmem [thread:$0]  %s1, 8192, %s17, [#allocation3], 512, 512, 32
    $region9: #{rnnlm_forward.3} parent=1 // pred_fallthru
      _
    // Predicated region
    $region10: #{rnnlm_forward.3} parent=1 // pred_check
      _
    $region11: #{rnnlm_forward.3} parent=1 // pred_check_branch
      %24 = sbr.rel (0) target = $region13
    $region12: #{rnnlm_forward.3} parent=1 // pred_region
      _
    $region13: #{rnnlm_forward.3} parent=1 // pred_fallthru
      _
    // Predicated region
    $region14: #{rnnlm_forward.3} parent=1 // pred_check
      _
    $region15: #{rnnlm_forward.3} parent=1 // pred_check_branch
      %26 = sbr.rel (0) target = $region17
    $region16: #{rnnlm_forward.3} parent=1 // pred_region
      %27 = dma.done [#allocation3], 8192
    $region17: #{rnnlm_forward.3} parent=1 // pred_fallthru
      _
    %v28 = vld [vmem:[%s0] sm:$0xff]
    %v29 = vld [vmem:[%s0 + $0x8] sm:$0xff]
    %v30 = vld [vmem:[#allocation2] sm:$0xff]
    %v31 = vld [vmem:[#allocation2 + $0x8] sm:$0xff]
    %v32 = vld [vmem:[#allocation2 + $0x10] sm:$0xff]
    %v33 = vld [vmem:[#allocation2 + $0x18] sm:$0xff]
    %v34 = vld [vmem:[#allocation2 + $0x20] sm:$0xff]
    %v35 = vld [vmem:[#allocation2 + $0x28] sm:$0xff]
    %v36 = vld [vmem:[#allocation2 + $0x30] sm:$0xff]
    %v37 = vld [vmem:[#allocation2 + $0x38] sm:$0xff]
    %v38 = vld [vmem:[#allocation2 + $0x40] sm:$0xff]
    %v39 = vld [vmem:[#allocation2 + $0x48] sm:$0xff]
    %v40 = vld [vmem:[#allocation2 + $0x50] sm:$0xff]
    %v41 = vld [vmem:[#allocation2 + $0x58] sm:$0xff]
    %v42 = vld [vmem:[#allocation2 + $0x60] sm:$0xff]
    %v43 = vld [vmem:[#allocation2 + $0x68] sm:$0xff]
    %v44 = vld [vmem:[#allocation2 + $0x70] sm:$0xff]
    %v45 = vld [vmem:[#allocation2 + $0x78] sm:$0xff]
    %v46 = vld [vmem:[#allocation2 + $0x80] sm:$0xff]
    %v47 = vld [vmem:[#allocation2 + $0x88] sm:$0xff]
    %v48 = vld [vmem:[#allocation2 + $0x90] sm:$0xff]
    %v49 = vld [vmem:[#allocation2 + $0x98] sm:$0xff]
    %v50 = vld [vmem:[#allocation2 + $0xa0] sm:$0xff]
    %v51 = vld [vmem:[#allocation2 + $0xa8] sm:$0xff]
    %v52 = vld [vmem:[#allocation2 + $0xb0] sm:$0xff]
    %v53 = vld [vmem:[#allocation2 + $0xb8] sm:$0xff]
    %v54 = vld [vmem:[#allocation2 + $0xc0] sm:$0xff]
    %v55 = vld [vmem:[#allocation2 + $0xc8] sm:$0xff]
    %v56 = vld [vmem:[#allocation2 + $0xd0] sm:$0xff]
    %v57 = vld [vmem:[#allocation2 + $0xd8] sm:$0xff]
    %v58 = vld [vmem:[#allocation2 + $0xe0] sm:$0xff]
    %v59 = vld [vmem:[#allocation2 + $0xe8] sm:$0xff]
    %v60 = vld [vmem:[#allocation2 + $0xf0] sm:$0xff]
    %v61 = vld [vmem:[#allocation2 + $0xf8] sm:$0xff]
    %v62 = vld [vmem:[#allocation2 + $0x100] sm:$0xff]
    %v63 = vld [vmem:[#allocation2 + $0x108] sm:$0xff]
    %v64 = vld [vmem:[#allocation2 + $0x110] sm:$0xff]
    %v65 = vld [vmem:[#allocation2 + $0x118] sm:$0xff]
    %v66 = vld [vmem:[#allocation2 + $0x120] sm:$0xff]
    %v67 = vld [vmem:[#allocation2 + $0x128] sm:$0xff]
    %v68 = vld [vmem:[#allocation2 + $0x130] sm:$0xff]
    %v69 = vld [vmem:[#allocation2 + $0x138] sm:$0xff]
    %v70 = vld [vmem:[#allocation2 + $0x140] sm:$0xff]
    %v71 = vld [vmem:[#allocation2 + $0x148] sm:$0xff]
    %v72 = vld [vmem:[#allocation2 + $0x150] sm:$0xff]
    %v73 = vld [vmem:[#allocation2 + $0x158] sm:$0xff]
    %v74 = vld [vmem:[#allocation2 + $0x160] sm:$0xff]
    %v75 = vld [vmem:[#allocation2 + $0x168] sm:$0xff]
    %v76 = vld [vmem:[#allocation2 + $0x170] sm:$0xff]
    %v77 = vld [vmem:[#allocation2 + $0x178] sm:$0xff]
    %v78 = vld [vmem:[#allocation2 + $0x180] sm:$0xff]
    %v79 = vld [vmem:[#allocation2 + $0x188] sm:$0xff]
    %v80 = vld [vmem:[#allocation2 + $0x190] sm:$0xff]
    %v81 = vld [vmem:[#allocation2 + $0x198] sm:$0xff]
    %v82 = vld [vmem:[#allocation2 + $0x1a0] sm:$0xff]
    %v83 = vld [vmem:[#allocation2 + $0x1a8] sm:$0xff]
    %v84 = vld [vmem:[#allocation2 + $0x1b0] sm:$0xff]
    %v85 = vld [vmem:[#allocation2 + $0x1b8] sm:$0xff]
    %v86 = vld [vmem:[#allocation2 + $0x1c0] sm:$0xff]
    %v87 = vld [vmem:[#allocation2 + $0x1c8] sm:$0xff]
    %v88 = vld [vmem:[#allocation2 + $0x1d0] sm:$0xff]
    %v89 = vld [vmem:[#allocation2 + $0x1d8] sm:$0xff]
    %v90 = vld [vmem:[#allocation2 + $0x1e0] sm:$0xff]
    %v91 = vld [vmem:[#allocation2 + $0x1e8] sm:$0xff]
    %v92 = vld [vmem:[#allocation2 + $0x1f0] sm:$0xff]
    %v93 = vld [vmem:[#allocation2 + $0x1f8] sm:$0xff]
    %v94 = vld [vmem:[%s2] sm:$0xf]
    %v96 = vlaneseq
    %v97 = vshrl.u32 %v96, 7
    %v98 = vsub.s32 0, %v97
    %v99 = vrot.slane %v94, %v98
    %v100 = vlaneseq
    %v101 = vshrl.u32 %v100, 7
    %v102 = vsub.s32 1, %v101
    %v103 = vrot.slane %v94, %v102
    %v104 = vlaneseq
    %v105 = vshrl.u32 %v104, 7
    %v106 = vsub.s32 2, %v105
    %v107 = vrot.slane %v94, %v106
    %v108 = vlaneseq
    %v109 = vshrl.u32 %v108, 7
    %v110 = vsub.s32 3, %v109
    %v111 = vrot.slane %v94, %v110
    %116 = vmatprep.subr.mxu0 %v31
    %117 = vmatpush1.msra.mxu0 %v30
    %118 = vmatprep.subr.mxu0 %v35
    %119 = vmatpush1.msra.mxu0 %v34
    %120 = vmatprep.subr.mxu0 %v39
    %121 = vmatpush1.msra.mxu0 %v38
    %122 = vmatprep.subr.mxu0 %v43
    %123 = vmatpush1.msra.mxu0 %v42
    %124 = vmatprep.subr.mxu0 %v47
    %125 = vmatpush1.msra.mxu0 %v46
    %126 = vmatprep.subr.mxu0 %v51
    %127 = vmatpush1.msra.mxu0 %v50
    %128 = vmatprep.subr.mxu0 %v55
    %129 = vmatpush1.msra.mxu0 %v54
    %130 = vmatprep.subr.mxu0 %v59
    %131 = vmatpush1.msra.mxu0 %v58
    %132 = vmatprep.subr.mxu0 %v63
    %133 = vmatpush1.msra.mxu0 %v62
    %134 = vmatprep.subr.mxu0 %v67
    %135 = vmatpush1.msra.mxu0 %v66
    %136 = vmatprep.subr.mxu0 %v71
    %137 = vmatpush1.msra.mxu0 %v70
    %138 = vmatprep.subr.mxu0 %v75
    %139 = vmatpush1.msra.mxu0 %v74
    %140 = vmatprep.subr.mxu0 %v79
    %141 = vmatpush1.msra.mxu0 %v78
    %142 = vmatprep.subr.mxu0 %v83
    %143 = vmatpush1.msra.mxu0 %v82
    %144 = vmatprep.subr.mxu0 %v87
    %145 = vmatpush1.msra.mxu0 %v86
    %146 = vmatprep.subr.mxu0 %v91
    %147 = vmatpush1.msra.mxu0 %v90
    %148 = vmatprep.subr.mxu0 0.0
    %149 = vmatpush1.msra.mxu0 0.0
    %150 = vmatprep.subr.mxu0 0.0
    %151 = vmatpush1.msra.mxu0 0.0
    %152 = vmatprep.subr.mxu0 0.0
    %153 = vmatpush1.msra.mxu0 0.0
    %154 = vmatprep.subr.mxu0 0.0
    %155 = vmatpush1.msra.mxu0 0.0
    %156 = vmatprep.subr.mxu0 0.0
    %157 = vmatpush1.msra.mxu0 0.0
    %158 = vmatprep.subr.mxu0 0.0
    %159 = vmatpush1.msra.mxu0 0.0
    %160 = vmatprep.subr.mxu0 0.0
    %161 = vmatpush1.msra.mxu0 0.0
    %162 = vmatprep.subr.mxu0 0.0
    %163 = vmatpush1.msra.mxu0 0.0
    %164 = vmatprep.subr.mxu0 0.0
    %165 = vmatpush1.msra.mxu0 0.0
    %166 = vmatprep.subr.mxu0 0.0
    %167 = vmatpush1.msra.mxu0 0.0
    %168 = vmatprep.subr.mxu0 0.0
    %169 = vmatpush1.msra.mxu0 0.0
    %170 = vmatprep.subr.mxu0 0.0
    %171 = vmatpush1.msra.mxu0 0.0
    %172 = vmatprep.subr.mxu0 0.0
    %173 = vmatpush1.msra.mxu0 0.0
    %174 = vmatprep.subr.mxu0 0.0
    %175 = vmatpush1.msra.mxu0 0.0
    %176 = vmatprep.subr.mxu0 0.0
    %177 = vmatpush1.msra.mxu0 0.0
    %178 = vmatprep.subr.mxu0 0.0
    %179 = vmatpush1.msra.mxu0 0.0
    %180 = vmatprep.mubr.f32.mxu0 0.0
    %181 = vmatmul.mubr.f32.gmra.mrb[0].mxu0 %v28
    %v182 = vpop.f32.mrb[0].mxu0
    %v183 = vadd.f32 %v99, %v182
    %v184 = vpop.f32.mrb[0].mxu0
    %v185 = vadd.f32 %v103, %v184
    %186 = vmatprep.mubr.f32.mxu0 0.0
    %187 = vmatmul.mubr.f32.gmra.mrb[0].mxu0 %v29
    %v188 = vpop.f32.mrb[0].mxu0
    %v189 = vadd.f32 %v99, %v188
    %v190 = vpop.f32.mrb[0].mxu0
    %v191 = vadd.f32 %v103, %v190
    %192 = vdwg.mxu0
    %193 = vmatprep.subr.mxu0 %v33
    %194 = vmatpush1.msra.mxu0 %v32
    %195 = vmatprep.subr.mxu0 %v37
    %196 = vmatpush1.msra.mxu0 %v36
    %197 = vmatprep.subr.mxu0 %v41
    %198 = vmatpush1.msra.mxu0 %v40
    %199 = vmatprep.subr.mxu0 %v45
    %200 = vmatpush1.msra.mxu0 %v44
    %201 = vmatprep.subr.mxu0 %v49
    %202 = vmatpush1.msra.mxu0 %v48
    %203 = vmatprep.subr.mxu0 %v53
    %204 = vmatpush1.msra.mxu0 %v52
    %205 = vmatprep.subr.mxu0 %v57
    %206 = vmatpush1.msra.mxu0 %v56
    %207 = vmatprep.subr.mxu0 %v61
    %208 = vmatpush1.msra.mxu0 %v60
    %209 = vmatprep.subr.mxu0 %v65
    %210 = vmatpush1.msra.mxu0 %v64
    %211 = vmatprep.subr.mxu0 %v69
    %212 = vmatpush1.msra.mxu0 %v68
    %213 = vmatprep.subr.mxu0 %v73
    %214 = vmatpush1.msra.mxu0 %v72
    %215 = vmatprep.subr.mxu0 %v77
    %216 = vmatpush1.msra.mxu0 %v76
    %217 = vmatprep.subr.mxu0 %v81
    %218 = vmatpush1.msra.mxu0 %v80
    %219 = vmatprep.subr.mxu0 %v85
    %220 = vmatpush1.msra.mxu0 %v84
    %221 = vmatprep.subr.mxu0 %v89
    %222 = vmatpush1.msra.mxu0 %v88
    %223 = vmatprep.subr.mxu0 %v93
    %224 = vmatpush1.msra.mxu0 %v92
    %225 = vmatprep.subr.mxu0 0.0
    %226 = vmatpush1.msra.mxu0 0.0
    %227 = vmatprep.subr.mxu0 0.0
    %228 = vmatpush1.msra.mxu0 0.0
    %229 = vmatprep.subr.mxu0 0.0
    %230 = vmatpush1.msra.mxu0 0.0
    %231 = vmatprep.subr.mxu0 0.0
    %232 = vmatpush1.msra.mxu0 0.0
    %233 = vmatprep.subr.mxu0 0.0
    %234 = vmatpush1.msra.mxu0 0.0
    %235 = vmatprep.subr.mxu0 0.0
    %236 = vmatpush1.msra.mxu0 0.0
    %237 = vmatprep.subr.mxu0 0.0
    %238 = vmatpush1.msra.mxu0 0.0
    %239 = vmatprep.subr.mxu0 0.0
    %240 = vmatpush1.msra.mxu0 0.0
    %241 = vmatprep.subr.mxu0 0.0
    %242 = vmatpush1.msra.mxu0 0.0
    %243 = vmatprep.subr.mxu0 0.0
    %244 = vmatpush1.msra.mxu0 0.0
    %245 = vmatprep.subr.mxu0 0.0
    %246 = vmatpush1.msra.mxu0 0.0
    %247 = vmatprep.subr.mxu0 0.0
    %248 = vmatpush1.msra.mxu0 0.0
    %249 = vmatprep.subr.mxu0 0.0
    %250 = vmatpush1.msra.mxu0 0.0
    %251 = vmatprep.subr.mxu0 0.0
    %252 = vmatpush1.msra.mxu0 0.0
    %253 = vmatprep.subr.mxu0 0.0
    %254 = vmatpush1.msra.mxu0 0.0
    %255 = vmatprep.subr.mxu0 0.0
    %256 = vmatpush1.msra.mxu0 0.0
    %257 = vmatprep.mubr.f32.mxu0 0.0
    %258 = vmatmul.mubr.f32.gmra.mrb[0].mxu0 %v28
    %v259 = vpop.f32.mrb[0].mxu0
    %v260 = vadd.f32 %v107, %v259
    %v261 = vpop.f32.mrb[0].mxu0
    %v262 = vadd.f32 %v111, %v261
    %263 = vmatprep.mubr.f32.mxu0 0.0
    %264 = vmatmul.mubr.f32.gmra.mrb[0].mxu0 %v29
    %v265 = vpop.f32.mrb[0].mxu0
    %v266 = vadd.f32 %v107, %v265
    %v267 = vpop.f32.mrb[0].mxu0
    %v268 = vadd.f32 %v111, %v267
    %269 = vdwg.mxu0
    %270 = vst [vmem:[%s3] sm:$0xff] %v183
    %271 = vst [vmem:[%s3 + $0x8] sm:$0xff] %v185
    %272 = vst [vmem:[%s3 + $0x10] sm:$0xff] %v260
    %273 = vst [vmem:[%s3 + $0x18] sm:$0xff] %v262
    %274 = vst [vmem:[%s3 + $0x20] sm:$0xff] %v189
    %275 = vst [vmem:[%s3 + $0x28] sm:$0xff] %v191
    %276 = vst [vmem:[%s3 + $0x30] sm:$0xff] %v266
    %277 = vst [vmem:[%s3 + $0x38] sm:$0xff] %v268
    // Predicated region
    $region18: #{rnnlm_forward.3} parent=1 // pred_check
      _
    $region19: #{rnnlm_forward.3} parent=1 // pred_check_branch
      %279 = sbr.rel (0) target = $region21
    $region20: #{rnnlm_forward.3} parent=1 // pred_region
      _
    $region21: #{rnnlm_forward.3} parent=1 // pred_fallthru
      _
    // Predicated region
    $region22: #{rnnlm_forward.3} parent=1 // pred_check
      _
    $region23: #{rnnlm_forward.3} parent=1 // pred_check_branch
      %281 = sbr.rel (0) target = $region25
    $region24: #{rnnlm_forward.3} parent=1 // pred_region
      _
    $region25: #{rnnlm_forward.3} parent=1 // pred_fallthru
      _
    %282 = vsyncpa [#allocation3], 1

// kernel: rnnlm_forward.4
$region0: #{rnnlm_forward.4}
  #allocation0 [shape = 'u32[]', space=smem, size = 0x4, offset = 0x4, fixed_abs, tag = 'smem constant byte address 0x4 - core index']
  #allocation1 [shape = 'u32[144,128]{1,0:T(1,128)}', space=vmem, size = 0x12000, scoped, tag = 'internal scratch']
  #allocation2 [shape = 'f32[2,128]{1,0:T(2,128)}', space=vmem, size = 0x400, scoped, tag = 'scratch operand']
  #allocation3 [shape = 'f32[2,128]{1,0:T(2,128)}', space=vmem, size = 0x400, scoped, tag = 'scratch operand']
  %s0 = inlined_call_operand.vmem [shape: f32[2,8,512], index: 0, kind: input, shape index: {}]
  %s1 = inlined_call_operand.vmem [shape: f32[128,512], index: 1, kind: input, shape index: {}]
  %s2 = inlined_call_operand.vmem [shape: f32[2,8,128], index: 2, kind: output, shape index: {}]
  %s3 = sld [smem:[#allocation0]]
  $region22: #{rnnlm_forward.4} parent=0
    _
  %s5 = ssub.s32 1, %s3
  %s6 = scalar_select 0, %s5, %s3
  // Predicated region
  $region2: #{rnnlm_forward.4} parent=0 // pred_check
    _
  $region3: #{rnnlm_forward.4} parent=0 // pred_check_branch
    %8 = sbr.rel (0) target = $region5
  $region4: #{rnnlm_forward.4} parent=0 // pred_region
    _
  $region5: #{rnnlm_forward.4} parent=0 // pred_fallthru
    _
  // Predicated region
  $region6: #{rnnlm_forward.4} parent=0 // pred_check
    _
  $region7: #{rnnlm_forward.4} parent=0 // pred_check_branch
    %10 = sbr.rel (0) target = $region9
  $region8: #{rnnlm_forward.4} parent=0 // pred_region
    _
  $region9: #{rnnlm_forward.4} parent=0 // pred_fallthru
    _
  %p11 = scmp.eq.s32.totalorder 0, 0
  // Predicated region
  $region10: #{rnnlm_forward.4} parent=0 // pred_check
    %p12 = pneg %p11
  $region11: #{rnnlm_forward.4} parent=0 // pred_check_branch
    %14 = sbr.rel (%p12) target = $region13
  $region12: #{rnnlm_forward.4} parent=0 // pred_region
    %15 = vst [vmem:[#allocation2] sm:$0x3] 0.0
    %16 = vst [vmem:[#allocation3] sm:$0x3] 0.0
  $region13: #{rnnlm_forward.4} parent=0 // pred_fallthru
    _
  %v17 = vld [vmem:[%s1] sm:$0xff]
  %v18 = vld [vmem:[%s1 + $0x8] sm:$0xff]
  %v19 = vld [vmem:[%s1 + $0x10] sm:$0xff]
  %v20 = vld [vmem:[%s1 + $0x18] sm:$0xff]
  %v21 = vld [vmem:[%s1 + $0x20] sm:$0xff]
  %v22 = vld [vmem:[%s1 + $0x28] sm:$0xff]
  %v23 = vld [vmem:[%s1 + $0x30] sm:$0xff]
  %v24 = vld [vmem:[%s1 + $0x38] sm:$0xff]
  %v25 = vld [vmem:[%s1 + $0x40] sm:$0xff]
  %v26 = vld [vmem:[%s1 + $0x48] sm:$0xff]
  %v27 = vld [vmem:[%s1 + $0x50] sm:$0xff]
  %v28 = vld [vmem:[%s1 + $0x58] sm:$0xff]
  %v29 = vld [vmem:[%s1 + $0x60] sm:$0xff]
  %v30 = vld [vmem:[%s1 + $0x68] sm:$0xff]
  %v31 = vld [vmem:[%s1 + $0x70] sm:$0xff]
  %v32 = vld [vmem:[%s1 + $0x78] sm:$0xff]
  %v33 = vld [vmem:[%s1 + $0x80] sm:$0xff]
  %v34 = vld [vmem:[%s1 + $0x88] sm:$0xff]
  %v35 = vld [vmem:[%s1 + $0x90] sm:$0xff]
  %v36 = vld [vmem:[%s1 + $0x98] sm:$0xff]
  %v37 = vld [vmem:[%s1 + $0xa0] sm:$0xff]
  %v38 = vld [vmem:[%s1 + $0xa8] sm:$0xff]
  %v39 = vld [vmem:[%s1 + $0xb0] sm:$0xff]
  %v40 = vld [vmem:[%s1 + $0xb8] sm:$0xff]
  %v41 = vld [vmem:[%s1 + $0xc0] sm:$0xff]
  %v42 = vld [vmem:[%s1 + $0xc8] sm:$0xff]
  %v43 = vld [vmem:[%s1 + $0xd0] sm:$0xff]
  %v44 = vld [vmem:[%s1 + $0xd8] sm:$0xff]
  %v45 = vld [vmem:[%s1 + $0xe0] sm:$0xff]
  %v46 = vld [vmem:[%s1 + $0xe8] sm:$0xff]
  %v47 = vld [vmem:[%s1 + $0xf0] sm:$0xff]
  %v48 = vld [vmem:[%s1 + $0xf8] sm:$0xff]
  %v49 = vld [vmem:[%s1 + $0x100] sm:$0xff]
  %v50 = vld [vmem:[%s1 + $0x108] sm:$0xff]
  %v51 = vld [vmem:[%s1 + $0x110] sm:$0xff]
  %v52 = vld [vmem:[%s1 + $0x118] sm:$0xff]
  %v53 = vld [vmem:[%s1 + $0x120] sm:$0xff]
  %v54 = vld [vmem:[%s1 + $0x128] sm:$0xff]
  %v55 = vld [vmem:[%s1 + $0x130] sm:$0xff]
  %v56 = vld [vmem:[%s1 + $0x138] sm:$0xff]
  %v57 = vld [vmem:[%s1 + $0x140] sm:$0xff]
  %v58 = vld [vmem:[%s1 + $0x148] sm:$0xff]
  %v59 = vld [vmem:[%s1 + $0x150] sm:$0xff]
  %v60 = vld [vmem:[%s1 + $0x158] sm:$0xff]
  %v61 = vld [vmem:[%s1 + $0x160] sm:$0xff]
  %v62 = vld [vmem:[%s1 + $0x168] sm:$0xff]
  %v63 = vld [vmem:[%s1 + $0x170] sm:$0xff]
  %v64 = vld [vmem:[%s1 + $0x178] sm:$0xff]
  %v65 = vld [vmem:[%s1 + $0x180] sm:$0xff]
  %v66 = vld [vmem:[%s1 + $0x188] sm:$0xff]
  %v67 = vld [vmem:[%s1 + $0x190] sm:$0xff]
  %v68 = vld [vmem:[%s1 + $0x198] sm:$0xff]
  %v69 = vld [vmem:[%s1 + $0x1a0] sm:$0xff]
  %v70 = vld [vmem:[%s1 + $0x1a8] sm:$0xff]
  %v71 = vld [vmem:[%s1 + $0x1b0] sm:$0xff]
  %v72 = vld [vmem:[%s1 + $0x1b8] sm:$0xff]
  %v73 = vld [vmem:[%s1 + $0x1c0] sm:$0xff]
  %v74 = vld [vmem:[%s1 + $0x1c8] sm:$0xff]
  %v75 = vld [vmem:[%s1 + $0x1d0] sm:$0xff]
  %v76 = vld [vmem:[%s1 + $0x1d8] sm:$0xff]
  %v77 = vld [vmem:[%s1 + $0x1e0] sm:$0xff]
  %v78 = vld [vmem:[%s1 + $0x1e8] sm:$0xff]
  %v79 = vld [vmem:[%s1 + $0x1f0] sm:$0xff]
  %v80 = vld [vmem:[%s1 + $0x1f8] sm:$0xff]
  %v81 = vld [vmem:[#allocation2] sm:$0x3]
  %v82 = vld [vmem:[#allocation3] sm:$0x3]
  %v83 = vld [vmem:[%s0] ss:$8 sm:$0xf]
  %s84 = scalar_lea.vmem %s0, 32
  %v85 = vld [vmem:[%s84] ss:$8 sm:$0xf]
  %86 = vmatprep.subr.mxu0 %v18
  %87 = vmatpush1.msra.mxu0 %v17
  %88 = vmatprep.subr.mxu0 %v22
  %89 = vmatpush1.msra.mxu0 %v21
  %90 = vmatprep.subr.mxu0 %v26
  %91 = vmatpush1.msra.mxu0 %v25
  %92 = vmatprep.subr.mxu0 %v30
  %93 = vmatpush1.msra.mxu0 %v29
  %94 = vmatprep.subr.mxu0 %v34
  %95 = vmatpush1.msra.mxu0 %v33
  %96 = vmatprep.subr.mxu0 %v38
  %97 = vmatpush1.msra.mxu0 %v37
  %98 = vmatprep.subr.mxu0 %v42
  %99 = vmatpush1.msra.mxu0 %v41
  %100 = vmatprep.subr.mxu0 %v46
  %101 = vmatpush1.msra.mxu0 %v45
  %102 = vmatprep.subr.mxu0 %v50
  %103 = vmatpush1.msra.mxu0 %v49
  %104 = vmatprep.subr.mxu0 %v54
  %105 = vmatpush1.msra.mxu0 %v53
  %106 = vmatprep.subr.mxu0 %v58
  %107 = vmatpush1.msra.mxu0 %v57
  %108 = vmatprep.subr.mxu0 %v62
  %109 = vmatpush1.msra.mxu0 %v61
  %110 = vmatprep.subr.mxu0 %v66
  %111 = vmatpush1.msra.mxu0 %v65
  %112 = vmatprep.subr.mxu0 %v70
  %113 = vmatpush1.msra.mxu0 %v69
  %114 = vmatprep.subr.mxu0 %v74
  %115 = vmatpush1.msra.mxu0 %v73
  %116 = vmatprep.subr.mxu0 %v78
  %117 = vmatpush1.msra.mxu0 %v77
  %118 = vmatprep.subr.mxu0 0.0
  %119 = vmatpush1.msra.mxu0 0.0
  %120 = vmatprep.subr.mxu0 0.0
  %121 = vmatpush1.msra.mxu0 0.0
  %122 = vmatprep.subr.mxu0 0.0
  %123 = vmatpush1.msra.mxu0 0.0
  %124 = vmatprep.subr.mxu0 0.0
  %125 = vmatpush1.msra.mxu0 0.0
  %126 = vmatprep.subr.mxu0 0.0
  %127 = vmatpush1.msra.mxu0 0.0
  %128 = vmatprep.subr.mxu0 0.0
  %129 = vmatpush1.msra.mxu0 0.0
  %130 = vmatprep.subr.mxu0 0.0
  %131 = vmatpush1.msra.mxu0 0.0
  %132 = vmatprep.subr.mxu0 0.0
  %133 = vmatpush1.msra.mxu0 0.0
  %134 = vmatprep.subr.mxu0 0.0
  %135 = vmatpush1.msra.mxu0 0.0
  %136 = vmatprep.subr.mxu0 0.0
  %137 = vmatpush1.msra.mxu0 0.0
  %138 = vmatprep.subr.mxu0 0.0
  %139 = vmatpush1.msra.mxu0 0.0
  %140 = vmatprep.subr.mxu0 0.0
  %141 = vmatpush1.msra.mxu0 0.0
  %142 = vmatprep.subr.mxu0 0.0
  %143 = vmatpush1.msra.mxu0 0.0
  %144 = vmatprep.subr.mxu0 0.0
  %145 = vmatpush1.msra.mxu0 0.0
  %146 = vmatprep.subr.mxu0 0.0
  %147 = vmatpush1.msra.mxu0 0.0
  %148 = vmatprep.subr.mxu0 0.0
  %149 = vmatpush1.msra.mxu0 0.0
  %150 = vmatprep.mubr.f32.mxu0 0.0
  %151 = vmatmul.mubr.f32.gmra.mrb[0].mxu0 %v81
  %v152 = vpop.f32.mrb[0].mxu0
  %v153 = vadd.f32 0.0, %v152
  %v154 = vpop.f32.mrb[0].mxu0
  %v155 = vadd.f32 0.0, %v154
  %156 = vdwg.mxu0
  %157 = vmatprep.subr.mxu0 %v20
  %158 = vmatpush1.msra.mxu0 %v19
  %159 = vmatprep.subr.mxu0 %v24
  %160 = vmatpush1.msra.mxu0 %v23
  %161 = vmatprep.subr.mxu0 %v28
  %162 = vmatpush1.msra.mxu0 %v27
  %163 = vmatprep.subr.mxu0 %v32
  %164 = vmatpush1.msra.mxu0 %v31
  %165 = vmatprep.subr.mxu0 %v36
  %166 = vmatpush1.msra.mxu0 %v35
  %167 = vmatprep.subr.mxu0 %v40
  %168 = vmatpush1.msra.mxu0 %v39
  %169 = vmatprep.subr.mxu0 %v44
  %170 = vmatpush1.msra.mxu0 %v43
  %171 = vmatprep.subr.mxu0 %v48
  %172 = vmatpush1.msra.mxu0 %v47
  %173 = vmatprep.subr.mxu0 %v52
  %174 = vmatpush1.msra.mxu0 %v51
  %175 = vmatprep.subr.mxu0 %v56
  %176 = vmatpush1.msra.mxu0 %v55
  %177 = vmatprep.subr.mxu0 %v60
  %178 = vmatpush1.msra.mxu0 %v59
  %179 = vmatprep.subr.mxu0 %v64
  %180 = vmatpush1.msra.mxu0 %v63
  %181 = vmatprep.subr.mxu0 %v68
  %182 = vmatpush1.msra.mxu0 %v67
  %183 = vmatprep.subr.mxu0 %v72
  %184 = vmatpush1.msra.mxu0 %v71
  %185 = vmatprep.subr.mxu0 %v76
  %186 = vmatpush1.msra.mxu0 %v75
  %187 = vmatprep.subr.mxu0 %v80
  %188 = vmatpush1.msra.mxu0 %v79
  %189 = vmatprep.subr.mxu0 0.0
  %190 = vmatpush1.msra.mxu0 0.0
  %191 = vmatprep.subr.mxu0 0.0
  %192 = vmatpush1.msra.mxu0 0.0
  %193 = vmatprep.subr.mxu0 0.0
  %194 = vmatpush1.msra.mxu0 0.0
  %195 = vmatprep.subr.mxu0 0.0
  %196 = vmatpush1.msra.mxu0 0.0
  %197 = vmatprep.subr.mxu0 0.0
  %198 = vmatpush1.msra.mxu0 0.0
  %199 = vmatprep.subr.mxu0 0.0
  %200 = vmatpush1.msra.mxu0 0.0
  %201 = vmatprep.subr.mxu0 0.0
  %202 = vmatpush1.msra.mxu0 0.0
  %203 = vmatprep.subr.mxu0 0.0
  %204 = vmatpush1.msra.mxu0 0.0
  %205 = vmatprep.subr.mxu0 0.0
  %206 = vmatpush1.msra.mxu0 0.0
  %207 = vmatprep.subr.mxu0 0.0
  %208 = vmatpush1.msra.mxu0 0.0
  %209 = vmatprep.subr.mxu0 0.0
  %210 = vmatpush1.msra.mxu0 0.0
  %211 = vmatprep.subr.mxu0 0.0
  %212 = vmatpush1.msra.mxu0 0.0
  %213 = vmatprep.subr.mxu0 0.0
  %214 = vmatpush1.msra.mxu0 0.0
  %215 = vmatprep.subr.mxu0 0.0
  %216 = vmatpush1.msra.mxu0 0.0
  %217 = vmatprep.subr.mxu0 0.0
  %218 = vmatpush1.msra.mxu0 0.0
  %219 = vmatprep.subr.mxu0 0.0
  %220 = vmatpush1.msra.mxu0 0.0
  %221 = vmatprep.mubr.f32.mxu0 0.0
  %222 = vmatmul.mubr.f32.gmra.mrb[0].mxu0 %v81
  %v223 = vpop.f32.mrb[0].mxu0
  %v224 = vadd.f32 0.0, %v223
  %v225 = vpop.f32.mrb[0].mxu0
  %v226 = vadd.f32 0.0, %v225
  %227 = vdwg.mxu0
  %v232 = vcombine.low %v153, %v155
  %v233 = vcombine.low %v224, %v226
  %v235 = vunpack.c.l.s4 1966171168
  %v236 = vunpack.c.0.s8 %v235
  %v237 = vlaneseq
  %v238 = vshrl.u32 %v237, 7
  %v239 = vsub.s32 %v236, %v238
  %v240 = vrot.slane %v232, %v239
  %v242 = vunpack.c.l.s4 1966171168
  %v243 = vunpack.c.0.s8 %v242
  %v244 = vlaneseq
  %v245 = vshrl.u32 %v244, 7
  %v246 = vsub.s32 %v243, %v245
  %v247 = vrot.slane %v233, %v246
  %v248 = vcombine.low %v240, %v247
  %v249 = vcombine.high %v240, %v247
  %v251 = vunpack.c.l.s4 1966171168
  %v252 = vunpack.c.0.s8 %v251
  %v253 = vlaneseq
  %v254 = vshrl.u32 %v253, 7
  %v255 = vsub.s32 %v252, %v254
  %v256 = vrot.slane %v248, %v255
  %v258 = vunpack.c.l.s4 1966171168
  %v259 = vunpack.c.0.s8 %v258
  %v260 = vlaneseq
  %v261 = vshrl.u32 %v260, 7
  %v262 = vsub.s32 %v259, %v261
  %v263 = vrot.slane %v249, %v262
  %v266 = vadd.f32 %v83, %v256
  %v267 = vadd.f32 %v85, %v263
  %v268 = vxor.u32 %v266, 2147483648
  %v269 = vxor.u32 %v267, 2147483648
  %v270 = vmul.f32 %v268, 1.442695
  %v271 = vpow.pop %v270
  %v272 = vmul.f32 %v269, 1.442695
  %v273 = vpow.pop %v272
  %v274 = vadd.f32 %v271, 1.0
  %v275 = vadd.f32 %v273, 1.0
  %v276 = vrcp.pop %v274
  %v277 = vmul.f32 1.0, %v276
  %v278 = vrcp.pop %v275
  %v279 = vmul.f32 1.0, %v278
  %v282 = vrot.slane %v266, 1
  %v283 = vrot.slane %v267, 1
  %v286 = vxor.u32 %v282, 2147483648
  %v287 = vxor.u32 %v283, 2147483648
  %v288 = vmul.f32 %v286, 1.442695
  %v289 = vpow.pop %v288
  %v290 = vmul.f32 %v287, 1.442695
  %v291 = vpow.pop %v290
  %v292 = vadd.f32 %v289, 1.0
  %v293 = vadd.f32 %v291, 1.0
  %v294 = vrcp.pop %v292
  %v295 = vmul.f32 1.0, %v294
  %v296 = vrcp.pop %v293
  %v297 = vmul.f32 1.0, %v296
  %v298 = vrot.slane %v266, 2
  %v299 = vrot.slane %v267, 2
  %v302 = vtanh.pop %v298
  %v303 = vtanh.pop %v299
  %v304 = vrot.slane %v266, 3
  %v305 = vrot.slane %v267, 3
  %v308 = vxor.u32 %v304, 2147483648
  %v309 = vxor.u32 %v305, 2147483648
  %v310 = vmul.f32 %v308, 1.442695
  %v311 = vpow.pop %v310
  %v312 = vmul.f32 %v309, 1.442695
  %v313 = vpow.pop %v312
  %v314 = vadd.f32 %v311, 1.0
  %v315 = vadd.f32 %v313, 1.0
  %v316 = vrcp.pop %v314
  %v317 = vmul.f32 1.0, %v316
  %v318 = vrcp.pop %v315
  %v319 = vmul.f32 1.0, %v318
  %v322 = vunpack.c.l.s4 1966171168
  %v323 = vunpack.c.0.s8 %v322
  %v324 = vlaneseq
  %v325 = vshrl.u32 %v324, 7
  %v326 = vsub.s32 %v323, %v325
  %v327 = vrot.slane %v82, %v326
  %v328 = vcombine.high %v327, %v327
  %v330 = vunpack.c.l.s4 1966171168
  %v331 = vunpack.c.0.s8 %v330
  %v332 = vlaneseq
  %v333 = vshrl.u32 %v332, 7
  %v334 = vsub.s32 %v331, %v333
  %v335 = vrot.slane %v327, %v334
  %v337 = vunpack.c.l.s4 1966171168
  %v338 = vunpack.c.0.s8 %v337
  %v339 = vlaneseq
  %v340 = vshrl.u32 %v339, 7
  %v341 = vsub.s32 %v338, %v340
  %v342 = vrot.slane %v328, %v341
  %v345 = vmul.f32 %v295, %v335
  %v346 = vmul.f32 %v297, %v342
  %v347 = vmul.f32 %v277, %v302
  %v348 = vmul.f32 %v279, %v303
  %v349 = vadd.f32 %v345, %v347
  %v350 = vadd.f32 %v346, %v348
  %v351 = vtanh.pop %v349
  %v352 = vtanh.pop %v350
  %v353 = vmul.f32 %v317, %v351
  %v354 = vmul.f32 %v319, %v352
  %355 = vst [vmem:[%s2] sm:$0x1] %v353
  %356 = vst [vmem:[%s2 + $0x8] sm:$0x1] %v354
  %s357 = scalar_lea.vmem %s0, 1
  %v358 = vld [vmem:[%s357] ss:$8 sm:$0xf]
  %s359 = scalar_lea.vmem %s0, 33
  %v360 = vld [vmem:[%s359] ss:$8 sm:$0xf]
  %v363 = vcombine.low %v353, %v354
  %v365 = vunpack.c.l.s4 1966171168
  %v366 = vunpack.c.0.s8 %v365
  %v367 = vlaneseq
  %v368 = vshrl.u32 %v367, 7
  %v369 = vsub.s32 %v366, %v368
  %v370 = vrot.slane %v363, %v369
  %v372 = vunpack.c.l.s4 1966171168
  %v373 = vunpack.c.0.s8 %v372
  %v374 = vlaneseq
  %v375 = vshrl.u32 %v374, 7
  %v376 = vsub.s32 %v373, %v375
  %v377 = vrot.slane %v370, %v376
  %379 = vmatprep.subr.mxu0 %v18
  %380 = vmatpush1.msra.mxu0 %v17
  %381 = vmatprep.subr.mxu0 %v22
  %382 = vmatpush1.msra.mxu0 %v21
  %383 = vmatprep.subr.mxu0 %v26
  %384 = vmatpush1.msra.mxu0 %v25
  %385 = vmatprep.subr.mxu0 %v30
  %386 = vmatpush1.msra.mxu0 %v29
  %387 = vmatprep.subr.mxu0 %v34
  %388 = vmatpush1.msra.mxu0 %v33
  %389 = vmatprep.subr.mxu0 %v38
  %390 = vmatpush1.msra.mxu0 %v37
  %391 = vmatprep.subr.mxu0 %v42
  %392 = vmatpush1.msra.mxu0 %v41
  %393 = vmatprep.subr.mxu0 %v46
  %394 = vmatpush1.msra.mxu0 %v45
  %395 = vmatprep.subr.mxu0 %v50
  %396 = vmatpush1.msra.mxu0 %v49
  %397 = vmatprep.subr.mxu0 %v54
  %398 = vmatpush1.msra.mxu0 %v53
  %399 = vmatprep.subr.mxu0 %v58
  %400 = vmatpush1.msra.mxu0 %v57
  %401 = vmatprep.subr.mxu0 %v62
  %402 = vmatpush1.msra.mxu0 %v61
  %403 = vmatprep.subr.mxu0 %v66
  %404 = vmatpush1.msra.mxu0 %v65
  %405 = vmatprep.subr.mxu0 %v70
  %406 = vmatpush1.msra.mxu0 %v69
  %407 = vmatprep.subr.mxu0 %v74
  %408 = vmatpush1.msra.mxu0 %v73
  %409 = vmatprep.subr.mxu0 %v78
  %410 = vmatpush1.msra.mxu0 %v77
  %411 = vmatprep.subr.mxu0 0.0
  %412 = vmatpush1.msra.mxu0 0.0
  %413 = vmatprep.subr.mxu0 0.0
  %414 = vmatpush1.msra.mxu0 0.0
  %415 = vmatprep.subr.mxu0 0.0
  %416 = vmatpush1.msra.mxu0 0.0
  %417 = vmatprep.subr.mxu0 0.0
  %418 = vmatpush1.msra.mxu0 0.0
  %419 = vmatprep.subr.mxu0 0.0
  %420 = vmatpush1.msra.mxu0 0.0
  %421 = vmatprep.subr.mxu0 0.0
  %422 = vmatpush1.msra.mxu0 0.0
  %423 = vmatprep.subr.mxu0 0.0
  %424 = vmatpush1.msra.mxu0 0.0
  %425 = vmatprep.subr.mxu0 0.0
  %426 = vmatpush1.msra.mxu0 0.0
  %427 = vmatprep.subr.mxu0 0.0
  %428 = vmatpush1.msra.mxu0 0.0
  %429 = vmatprep.subr.mxu0 0.0
  %430 = vmatpush1.msra.mxu0 0.0
  %431 = vmatprep.subr.mxu0 0.0
  %432 = vmatpush1.msra.mxu0 0.0
  %433 = vmatprep.subr.mxu0 0.0
  %434 = vmatpush1.msra.mxu0 0.0
  %435 = vmatprep.subr.mxu0 0.0
  %436 = vmatpush1.msra.mxu0 0.0
  %437 = vmatprep.subr.mxu0 0.0
  %438 = vmatpush1.msra.mxu0 0.0
  %439 = vmatprep.subr.mxu0 0.0
  %440 = vmatpush1.msra.mxu0 0.0
  %441 = vmatprep.subr.mxu0 0.0
  %442 = vmatpush1.msra.mxu0 0.0
  %443 = vmatprep.mubr.f32.mxu0 0.0
  %444 = vmatmul.mubr.f32.gmra.mrb[0].mxu0 %v377
  %v445 = vpop.f32.mrb[0].mxu0
  %v446 = vadd.f32 0.0, %v445
  %v447 = vpop.f32.mrb[0].mxu0
  %v448 = vadd.f32 0.0, %v447
  %449 = vdwg.mxu0
  %450 = vmatprep.subr.mxu0 %v20
  %451 = vmatpush1.msra.mxu0 %v19
  %452 = vmatprep.subr.mxu0 %v24
  %453 = vmatpush1.msra.mxu0 %v23
  %454 = vmatprep.subr.mxu0 %v28
  %455 = vmatpush1.msra.mxu0 %v27
  %456 = vmatprep.subr.mxu0 %v32
  %457 = vmatpush1.msra.mxu0 %v31
  %458 = vmatprep.subr.mxu0 %v36
  %459 = vmatpush1.msra.mxu0 %v35
  %460 = vmatprep.subr.mxu0 %v40
  %461 = vmatpush1.msra.mxu0 %v39
  %462 = vmatprep.subr.mxu0 %v44
  %463 = vmatpush1.msra.mxu0 %v43
  %464 = vmatprep.subr.mxu0 %v48
  %465 = vmatpush1.msra.mxu0 %v47
  %466 = vmatprep.subr.mxu0 %v52
  %467 = vmatpush1.msra.mxu0 %v51
  %468 = vmatprep.subr.mxu0 %v56
  %469 = vmatpush1.msra.mxu0 %v55
  %470 = vmatprep.subr.mxu0 %v60
  %471 = vmatpush1.msra.mxu0 %v59
  %472 = vmatprep.subr.mxu0 %v64
  %473 = vmatpush1.msra.mxu0 %v63
  %474 = vmatprep.subr.mxu0 %v68
  %475 = vmatpush1.msra.mxu0 %v67
  %476 = vmatprep.subr.mxu0 %v72
  %477 = vmatpush1.msra.mxu0 %v71
  %478 = vmatprep.subr.mxu0 %v76
  %479 = vmatpush1.msra.mxu0 %v75
  %480 = vmatprep.subr.mxu0 %v80
  %481 = vmatpush1.msra.mxu0 %v79
  %482 = vmatprep.subr.mxu0 0.0
  %483 = vmatpush1.msra.mxu0 0.0
  %484 = vmatprep.subr.mxu0 0.0
  %485 = vmatpush1.msra.mxu0 0.0
  %486 = vmatprep.subr.mxu0 0.0
  %487 = vmatpush1.msra.mxu0 0.0
  %488 = vmatprep.subr.mxu0 0.0
  %489 = vmatpush1.msra.mxu0 0.0
  %490 = vmatprep.subr.mxu0 0.0
  %491 = vmatpush1.msra.mxu0 0.0
  %492 = vmatprep.subr.mxu0 0.0
  %493 = vmatpush1.msra.mxu0 0.0
  %494 = vmatprep.subr.mxu0 0.0
  %495 = vmatpush1.msra.mxu0 0.0
  %496 = vmatprep.subr.mxu0 0.0
  %497 = vmatpush1.msra.mxu0 0.0
  %498 = vmatprep.subr.mxu0 0.0
  %499 = vmatpush1.msra.mxu0 0.0
  %500 = vmatprep.subr.mxu0 0.0
  %501 = vmatpush1.msra.mxu0 0.0
  %502 = vmatprep.subr.mxu0 0.0
  %503 = vmatpush1.msra.mxu0 0.0
  %504 = vmatprep.subr.mxu0 0.0
  %505 = vmatpush1.msra.mxu0 0.0
  %506 = vmatprep.subr.mxu0 0.0
  %507 = vmatpush1.msra.mxu0 0.0
  %508 = vmatprep.subr.mxu0 0.0
  %509 = vmatpush1.msra.mxu0 0.0
  %510 = vmatprep.subr.mxu0 0.0
  %511 = vmatpush1.msra.mxu0 0.0
  %512 = vmatprep.subr.mxu0 0.0
  %513 = vmatpush1.msra.mxu0 0.0
  %514 = vmatprep.mubr.f32.mxu0 0.0
  %515 = vmatmul.mubr.f32.gmra.mrb[0].mxu0 %v377
  %v516 = vpop.f32.mrb[0].mxu0
  %v517 = vadd.f32 0.0, %v516
  %v518 = vpop.f32.mrb[0].mxu0
  %v519 = vadd.f32 0.0, %v518
  %520 = vdwg.mxu0
  %v525 = vcombine.low %v446, %v448
  %v526 = vcombine.low %v517, %v519
  %v528 = vunpack.c.l.s4 1966171168
  %v529 = vunpack.c.0.s8 %v528
  %v530 = vlaneseq
  %v531 = vshrl.u32 %v530, 7
  %v532 = vsub.s32 %v529, %v531
  %v533 = vrot.slane %v525, %v532
  %v535 = vunpack.c.l.s4 1966171168
  %v536 = vunpack.c.0.s8 %v535
  %v537 = vlaneseq
  %v538 = vshrl.u32 %v537, 7
  %v539 = vsub.s32 %v536, %v538
  %v540 = vrot.slane %v526, %v539
  %v541 = vcombine.low %v533, %v540
  %v542 = vcombine.high %v533, %v540
  %v544 = vunpack.c.l.s4 1966171168
  %v545 = vunpack.c.0.s8 %v544
  %v546 = vlaneseq
  %v547 = vshrl.u32 %v546, 7
  %v548 = vsub.s32 %v545, %v547
  %v549 = vrot.slane %v541, %v548
  %v551 = vunpack.c.l.s4 1966171168
  %v552 = vunpack.c.0.s8 %v551
  %v553 = vlaneseq
  %v554 = vshrl.u32 %v553, 7
  %v555 = vsub.s32 %v552, %v554
  %v556 = vrot.slane %v542, %v555
  %v559 = vadd.f32 %v358, %v549
  %v560 = vadd.f32 %v360, %v556
  %v561 = vxor.u32 %v559, 2147483648
  %v562 = vxor.u32 %v560, 2147483648
  %v563 = vmul.f32 %v561, 1.442695
  %v564 = vpow.pop %v563
  %v565 = vmul.f32 %v562, 1.442695
  %v566 = vpow.pop %v565
  %v567 = vadd.f32 %v564, 1.0
  %v568 = vadd.f32 %v566, 1.0
  %v569 = vrcp.pop %v567
  %v570 = vmul.f32 1.0, %v569
  %v571 = vrcp.pop %v568
  %v572 = vmul.f32 1.0, %v571
  %v575 = vrot.slane %v559, 1
  %v576 = vrot.slane %v560, 1
  %v579 = vxor.u32 %v575, 2147483648
  %v580 = vxor.u32 %v576, 2147483648
  %v581 = vmul.f32 %v579, 1.442695
  %v582 = vpow.pop %v581
  %v583 = vmul.f32 %v580, 1.442695
  %v584 = vpow.pop %v583
  %v585 = vadd.f32 %v582, 1.0
  %v586 = vadd.f32 %v584, 1.0
  %v587 = vrcp.pop %v585
  %v588 = vmul.f32 1.0, %v587
  %v589 = vrcp.pop %v586
  %v590 = vmul.f32 1.0, %v589
  %v591 = vrot.slane %v559, 2
  %v592 = vrot.slane %v560, 2
  %v595 = vtanh.pop %v591
  %v596 = vtanh.pop %v592
  %v597 = vrot.slane %v559, 3
  %v598 = vrot.slane %v560, 3
  %v601 = vxor.u32 %v597, 2147483648
  %v602 = vxor.u32 %v598, 2147483648
  %v603 = vmul.f32 %v601, 1.442695
  %v604 = vpow.pop %v603
  %v605 = vmul.f32 %v602, 1.442695
  %v606 = vpow.pop %v605
  %v607 = vadd.f32 %v604, 1.0
  %v608 = vadd.f32 %v606, 1.0
  %v609 = vrcp.pop %v607
  %v610 = vmul.f32 1.0, %v609
  %v611 = vrcp.pop %v608
  %v612 = vmul.f32 1.0, %v611
  %v613 = vmul.f32 %v588, %v349
  %v614 = vmul.f32 %v590, %v350
  %v615 = vmul.f32 %v570, %v595
  %v616 = vmul.f32 %v572, %v596
  %v617 = vadd.f32 %v613, %v615
  %v618 = vadd.f32 %v614, %v616
  %v619 = vtanh.pop %v617
  %v620 = vtanh.pop %v618
  %v621 = vmul.f32 %v610, %v619
  %v622 = vmul.f32 %v612, %v620
  %623 = vst [vmem:[%s2 + $0x1] sm:$0x1] %v621
  %624 = vst [vmem:[%s2 + $0x9] sm:$0x1] %v622
  %s625 = scalar_lea.vmem %s0, 2
  %v626 = vld [vmem:[%s625] ss:$8 sm:$0xf]
  %s627 = scalar_lea.vmem %s0, 34
  %v628 = vld [vmem:[%s627] ss:$8 sm:$0xf]
  %v631 = vcombine.low %v621, %v622
  %v633 = vunpack.c.l.s4 1966171168
  %v634 = vunpack.c.0.s8 %v633
  %v635 = vlaneseq
  %v636 = vshrl.u32 %v635, 7
  %v637 = vsub.s32 %v634, %v636
  %v638 = vrot.slane %v631, %v637
  %v640 = vunpack.c.l.s4 1966171168
  %v641 = vunpack.c.0.s8 %v640
  %v642 = vlaneseq
  %v643 = vshrl.u32 %v642, 7
  %v644 = vsub.s32 %v641, %v643
  %v645 = vrot.slane %v638, %v644
  %647 = vmatprep.subr.mxu0 %v18
  %648 = vmatpush1.msra.mxu0 %v17
  %649 = vmatprep.subr.mxu0 %v22
  %650 = vmatpush1.msra.mxu0 %v21
  %651 = vmatprep.subr.mxu0 %v26
  %652 = vmatpush1.msra.mxu0 %v25
  %653 = vmatprep.subr.mxu0 %v30
  %654 = vmatpush1.msra.mxu0 %v29
  %655 = vmatprep.subr.mxu0 %v34
  %656 = vmatpush1.msra.mxu0 %v33
  %657 = vmatprep.subr.mxu0 %v38
  %658 = vmatpush1.msra.mxu0 %v37
  %659 = vmatprep.subr.mxu0 %v42
  %660 = vmatpush1.msra.mxu0 %v41
  %661 = vmatprep.subr.mxu0 %v46
  %662 = vmatpush1.msra.mxu0 %v45
  %663 = vmatprep.subr.mxu0 %v50
  %664 = vmatpush1.msra.mxu0 %v49
  %665 = vmatprep.subr.mxu0 %v54
  %666 = vmatpush1.msra.mxu0 %v53
  %667 = vmatprep.subr.mxu0 %v58
  %668 = vmatpush1.msra.mxu0 %v57
  %669 = vmatprep.subr.mxu0 %v62
  %670 = vmatpush1.msra.mxu0 %v61
  %671 = vmatprep.subr.mxu0 %v66
  %672 = vmatpush1.msra.mxu0 %v65
  %673 = vmatprep.subr.mxu0 %v70
  %674 = vmatpush1.msra.mxu0 %v69
  %675 = vmatprep.subr.mxu0 %v74
  %676 = vmatpush1.msra.mxu0 %v73
  %677 = vmatprep.subr.mxu0 %v78
  %678 = vmatpush1.msra.mxu0 %v77
  %679 = vmatprep.subr.mxu0 0.0
  %680 = vmatpush1.msra.mxu0 0.0
  %681 = vmatprep.subr.mxu0 0.0
  %682 = vmatpush1.msra.mxu0 0.0
  %683 = vmatprep.subr.mxu0 0.0
  %684 = vmatpush1.msra.mxu0 0.0
  %685 = vmatprep.subr.mxu0 0.0
  %686 = vmatpush1.msra.mxu0 0.0
  %687 = vmatprep.subr.mxu0 0.0
  %688 = vmatpush1.msra.mxu0 0.0
  %689 = vmatprep.subr.mxu0 0.0
  %690 = vmatpush1.msra.mxu0 0.0
  %691 = vmatprep.subr.mxu0 0.0
  %692 = vmatpush1.msra.mxu0 0.0
  %693 = vmatprep.subr.mxu0 0.0
  %694 = vmatpush1.msra.mxu0 0.0
  %695 = vmatprep.subr.mxu0 0.0
  %696 = vmatpush1.msra.mxu0 0.0
  %697 = vmatprep.subr.mxu0 0.0
  %698 = vmatpush1.msra.mxu0 0.0
  %699 = vmatprep.subr.mxu0 0.0
  %700 = vmatpush1.msra.mxu0 0.0
  %701 = vmatprep.subr.mxu0 0.0
  %702 = vmatpush1.msra.mxu0 0.0
  %703 = vmatprep.subr.mxu0 0.0
  %704 = vmatpush1.msra.mxu0 0.0
  %705 = vmatprep.subr.mxu0 0.0
  %706 = vmatpush1.msra.mxu0 0.0
  %707 = vmatprep.subr.mxu0 0.0
  %708 = vmatpush1.msra.mxu0 0.0
  %709 = vmatprep.subr.mxu0 0.0
  %710 = vmatpush1.msra.mxu0 0.0
  %711 = vmatprep.mubr.f32.mxu0 0.0
  %712 = vmatmul.mubr.f32.gmra.mrb[0].mxu0 %v645
  %v713 = vpop.f32.mrb[0].mxu0
  %v714 = vadd.f32 0.0, %v713
  %v715 = vpop.f32.mrb[0].mxu0
  %v716 = vadd.f32 0.0, %v715
  %717 = vdwg.mxu0
  %718 = vmatprep.subr.mxu0 %v20
  %719 = vmatpush1.msra.mxu0 %v19
  %720 = vmatprep.subr.mxu0 %v24
  %721 = vmatpush1.msra.mxu0 %v23
  %722 = vmatprep.subr.mxu0 %v28
  %723 = vmatpush1.msra.mxu0 %v27
  %724 = vmatprep.subr.mxu0 %v32
  %725 = vmatpush1.msra.mxu0 %v31
  %726 = vmatprep.subr.mxu0 %v36
  %727 = vmatpush1.msra.mxu0 %v35
  %728 = vmatprep.subr.mxu0 %v40
  %729 = vmatpush1.msra.mxu0 %v39
  %730 = vmatprep.subr.mxu0 %v44
  %731 = vmatpush1.msra.mxu0 %v43
  %732 = vmatprep.subr.mxu0 %v48
  %733 = vmatpush1.msra.mxu0 %v47
  %734 = vmatprep.subr.mxu0 %v52
  %735 = vmatpush1.msra.mxu0 %v51
  %736 = vmatprep.subr.mxu0 %v56
  %737 = vmatpush1.msra.mxu0 %v55
  %738 = vmatprep.subr.mxu0 %v60
  %739 = vmatpush1.msra.mxu0 %v59
  %740 = vmatprep.subr.mxu0 %v64
  %741 = vmatpush1.msra.mxu0 %v63
  %742 = vmatprep.subr.mxu0 %v68
  %743 = vmatpush1.msra.mxu0 %v67
  %744 = vmatprep.subr.mxu0 %v72
  %745 = vmatpush1.msra.mxu0 %v71
  %746 = vmatprep.subr.mxu0 %v76
  %747 = vmatpush1.msra.mxu0 %v75
  %748 = vmatprep.subr.mxu0 %v80
  %749 = vmatpush1.msra.mxu0 %v79
  %750 = vmatprep.subr.mxu0 0.0
  %751 = vmatpush1.msra.mxu0 0.0
  %752 = vmatprep.subr.mxu0 0.0
  %753 = vmatpush1.msra.mxu0 0.0
  %754 = vmatprep.subr.mxu0 0.0
  %755 = vmatpush1.msra.mxu0 0.0
  %756 = vmatprep.subr.mxu0 0.0
  %757 = vmatpush1.msra.mxu0 0.0
  %758 = vmatprep.subr.mxu0 0.0
  %759 = vmatpush1.msra.mxu0 0.0
  %760 = vmatprep.subr.mxu0 0.0
  %761 = vmatpush1.msra.mxu0 0.0
  %762 = vmatprep.subr.mxu0 0.0
  %763 = vmatpush1.msra.mxu0 0.0
  %764 = vmatprep.subr.mxu0 0.0
  %765 = vmatpush1.msra.mxu0 0.0
  %766 = vmatprep.subr.mxu0 0.0
  %767 = vmatpush1.msra.mxu0 0.0
  %768 = vmatprep.subr.mxu0 0.0
  %769 = vmatpush1.msra.mxu0 0.0
  %770 = vmatprep.subr.mxu0 0.0
  %771 = vmatpush1.msra.mxu0 0.0
  %772 = vmatprep.subr.mxu0 0.0
  %773 = vmatpush1.msra.mxu0 0.0
  %774 = vmatprep.subr.mxu0 0.0
  %775 = vmatpush1.msra.mxu0 0.0
  %776 = vmatprep.subr.mxu0 0.0
  %777 = vmatpush1.msra.mxu0 0.0
  %778 = vmatprep.subr.mxu0 0.0
  %779 = vmatpush1.msra.mxu0 0.0
  %780 = vmatprep.subr.mxu0 0.0
  %781 = vmatpush1.msra.mxu0 0.0
  %782 = vmatprep.mubr.f32.mxu0 0.0
  %783 = vmatmul.mubr.f32.gmra.mrb[0].mxu0 %v645
  %v784 = vpop.f32.mrb[0].mxu0
  %v785 = vadd.f32 0.0, %v784
  %v786 = vpop.f32.mrb[0].mxu0
  %v787 = vadd.f32 0.0, %v786
  %788 = vdwg.mxu0
  %v793 = vcombine.low %v714, %v716
  %v794 = vcombine.low %v785, %v787
  %v796 = vunpack.c.l.s4 1966171168
  %v797 = vunpack.c.0.s8 %v796
  %v798 = vlaneseq
  %v799 = vshrl.u32 %v798, 7
  %v800 = vsub.s32 %v797, %v799
  %v801 = vrot.slane %v793, %v800
  %v803 = vunpack.c.l.s4 1966171168
  %v804 = vunpack.c.0.s8 %v803
  %v805 = vlaneseq
  %v806 = vshrl.u32 %v805, 7
  %v807 = vsub.s32 %v804, %v806
  %v808 = vrot.slane %v794, %v807
  %v809 = vcombine.low %v801, %v808
  %v810 = vcombine.high %v801, %v808
  %v812 = vunpack.c.l.s4 1966171168
  %v813 = vunpack.c.0.s8 %v812
  %v814 = vlaneseq
  %v815 = vshrl.u32 %v814, 7
  %v816 = vsub.s32 %v813, %v815
  %v817 = vrot.slane %v809, %v816
  %v819 = vunpack.c.l.s4 1966171168
  %v820 = vunpack.c.0.s8 %v819
  %v821 = vlaneseq
  %v822 = vshrl.u32 %v821, 7
  %v823 = vsub.s32 %v820, %v822
  %v824 = vrot.slane %v810, %v823
  %v827 = vadd.f32 %v626, %v817
  %v828 = vadd.f32 %v628, %v824
  %v829 = vxor.u32 %v827, 2147483648
  %v830 = vxor.u32 %v828, 2147483648
  %v831 = vmul.f32 %v829, 1.442695
  %v832 = vpow.pop %v831
  %v833 = vmul.f32 %v830, 1.442695
  %v834 = vpow.pop %v833
  %v835 = vadd.f32 %v832, 1.0
  %v836 = vadd.f32 %v834, 1.0
  %v837 = vrcp.pop %v835
  %v838 = vmul.f32 1.0, %v837
  %v839 = vrcp.pop %v836
  %v840 = vmul.f32 1.0, %v839
  %v843 = vrot.slane %v827, 1
  %v844 = vrot.slane %v828, 1
  %v847 = vxor.u32 %v843, 2147483648
  %v848 = vxor.u32 %v844, 2147483648
  %v849 = vmul.f32 %v847, 1.442695
  %v850 = vpow.pop %v849
  %v851 = vmul.f32 %v848, 1.442695
  %v852 = vpow.pop %v851
  %v853 = vadd.f32 %v850, 1.0
  %v854 = vadd.f32 %v852, 1.0
  %v855 = vrcp.pop %v853
  %v856 = vmul.f32 1.0, %v855
  %v857 = vrcp.pop %v854
  %v858 = vmul.f32 1.0, %v857
  %v859 = vrot.slane %v827, 2
  %v860 = vrot.slane %v828, 2
  %v863 = vtanh.pop %v859
  %v864 = vtanh.pop %v860
  %v865 = vrot.slane %v827, 3
  %v866 = vrot.slane %v828, 3
  %v869 = vxor.u32 %v865, 2147483648
  %v870 = vxor.u32 %v866, 2147483648
  %v871 = vmul.f32 %v869, 1.442695
  %v872 = vpow.pop %v871
  %v873 = vmul.f32 %v870, 1.442695
  %v874 = vpow.pop %v873
  %v875 = vadd.f32 %v872, 1.0
  %v876 = vadd.f32 %v874, 1.0
  %v877 = vrcp.pop %v875
  %v878 = vmul.f32 1.0, %v877
  %v879 = vrcp.pop %v876
  %v880 = vmul.f32 1.0, %v879
  %v881 = vmul.f32 %v856, %v617
  %v882 = vmul.f32 %v858, %v618
  %v883 = vmul.f32 %v838, %v863
  %v884 = vmul.f32 %v840, %v864
  %v885 = vadd.f32 %v881, %v883
  %v886 = vadd.f32 %v882, %v884
  %v887 = vtanh.pop %v885
  %v888 = vtanh.pop %v886
  %v889 = vmul.f32 %v878, %v887
  %v890 = vmul.f32 %v880, %v888
  %891 = vst [vmem:[%s2 + $0x2] sm:$0x1] %v889
  %892 = vst [vmem:[%s2 + $0xa] sm:$0x1] %v890
  %s893 = scalar_lea.vmem %s0, 3
  %v894 = vld [vmem:[%s893] ss:$8 sm:$0xf]
  %s895 = scalar_lea.vmem %s0, 35
  %v896 = vld [vmem:[%s895] ss:$8 sm:$0xf]
  %v899 = vcombine.low %v889, %v890
  %v901 = vunpack.c.l.s4 1966171168
  %v902 = vunpack.c.0.s8 %v901
  %v903 = vlaneseq
  %v904 = vshrl.u32 %v903, 7
  %v905 = vsub.s32 %v902, %v904
  %v906 = vrot.slane %v899, %v905
  %v908 = vunpack.c.l.s4 1966171168
  %v909 = vunpack.c.0.s8 %v908
  %v910 = vlaneseq
  %v911 = vshrl.u32 %v910, 7
  %v912 = vsub.s32 %v909, %v911
  %v913 = vrot.slane %v906, %v912
  %915 = vmatprep.subr.mxu0 %v18
  %916 = vmatpush1.msra.mxu0 %v17
  %917 = vmatprep.subr.mxu0 %v22
  %918 = vmatpush1.msra.mxu0 %v21
  %919 = vmatprep.subr.mxu0 %v26
  %920 = vmatpush1.msra.mxu0 %v25
  %921 = vmatprep.subr.mxu0 %v30
  %922 = vmatpush1.msra.mxu0 %v29
  %923 = vmatprep.subr.mxu0 %v34
  %924 = vmatpush1.msra.mxu0 %v33
  %925 = vmatprep.subr.mxu0 %v38
  %926 = vmatpush1.msra.mxu0 %v37
  %927 = vmatprep.subr.mxu0 %v42
  %928 = vmatpush1.msra.mxu0 %v41
  %929 = vmatprep.subr.mxu0 %v46
  %930 = vmatpush1.msra.mxu0 %v45
  %931 = vmatprep.subr.mxu0 %v50
  %932 = vmatpush1.msra.mxu0 %v49
  %933 = vmatprep.subr.mxu0 %v54
  %934 = vmatpush1.msra.mxu0 %v53
  %935 = vmatprep.subr.mxu0 %v58
  %936 = vmatpush1.msra.mxu0 %v57
  %937 = vmatprep.subr.mxu0 %v62
  %938 = vmatpush1.msra.mxu0 %v61
  %939 = vmatprep.subr.mxu0 %v66
  %940 = vmatpush1.msra.mxu0 %v65
  %941 = vmatprep.subr.mxu0 %v70
  %942 = vmatpush1.msra.mxu0 %v69
  %943 = vmatprep.subr.mxu0 %v74
  %944 = vmatpush1.msra.mxu0 %v73
  %945 = vmatprep.subr.mxu0 %v78
  %946 = vmatpush1.msra.mxu0 %v77
  %947 = vmatprep.subr.mxu0 0.0
  %948 = vmatpush1.msra.mxu0 0.0
  %949 = vmatprep.subr.mxu0 0.0
  %950 = vmatpush1.msra.mxu0 0.0
  %951 = vmatprep.subr.mxu0 0.0
  %952 = vmatpush1.msra.mxu0 0.0
  %953 = vmatprep.subr.mxu0 0.0
  %954 = vmatpush1.msra.mxu0 0.0
  %955 = vmatprep.subr.mxu0 0.0
  %956 = vmatpush1.msra.mxu0 0.0
  %957 = vmatprep.subr.mxu0 0.0
  %958 = vmatpush1.msra.mxu0 0.0
  %959 = vmatprep.subr.mxu0 0.0
  %960 = vmatpush1.msra.mxu0 0.0
  %961 = vmatprep.subr.mxu0 0.0
  %962 = vmatpush1.msra.mxu0 0.0
  %963 = vmatprep.subr.mxu0 0.0
  %964 = vmatpush1.msra.mxu0 0.0
  %965 = vmatprep.subr.mxu0 0.0
  %966 = vmatpush1.msra.mxu0 0.0
  %967 = vmatprep.subr.mxu0 0.0
  %968 = vmatpush1.msra.mxu0 0.0
  %969 = vmatprep.subr.mxu0 0.0
  %970 = vmatpush1.msra.mxu0 0.0
  %971 = vmatprep.subr.mxu0 0.0
  %972 = vmatpush1.msra.mxu0 0.0
  %973 = vmatprep.subr.mxu0 0.0
  %974 = vmatpush1.msra.mxu0 0.0
  %975 = vmatprep.subr.mxu0 0.0
  %976 = vmatpush1.msra.mxu0 0.0
  %977 = vmatprep.subr.mxu0 0.0
  %978 = vmatpush1.msra.mxu0 0.0
  %979 = vmatprep.mubr.f32.mxu0 0.0
  %980 = vmatmul.mubr.f32.gmra.mrb[0].mxu0 %v913
  %v981 = vpop.f32.mrb[0].mxu0
  %v982 = vadd.f32 0.0, %v981
  %v983 = vpop.f32.mrb[0].mxu0
  %v984 = vadd.f32 0.0, %v983
  %985 = vdwg.mxu0
  %986 = vmatprep.subr.mxu0 %v20
  %987 = vmatpush1.msra.mxu0 %v19
  %988 = vmatprep.subr.mxu0 %v24
  %989 = vmatpush1.msra.mxu0 %v23
  %990 = vmatprep.subr.mxu0 %v28
  %991 = vmatpush1.msra.mxu0 %v27
  %992 = vmatprep.subr.mxu0 %v32
  %993 = vmatpush1.msra.mxu0 %v31
  %994 = vmatprep.subr.mxu0 %v36
  %995 = vmatpush1.msra.mxu0 %v35
  %996 = vmatprep.subr.mxu0 %v40
  %997 = vmatpush1.msra.mxu0 %v39
  %998 = vmatprep.subr.mxu0 %v44
  %999 = vmatpush1.msra.mxu0 %v43
  %1000 = vmatprep.subr.mxu0 %v48
  %1001 = vmatpush1.msra.mxu0 %v47
  %1002 = vmatprep.subr.mxu0 %v52
  %1003 = vmatpush1.msra.mxu0 %v51
  %1004 = vmatprep.subr.mxu0 %v56
  %1005 = vmatpush1.msra.mxu0 %v55
  %1006 = vmatprep.subr.mxu0 %v60
  %1007 = vmatpush1.msra.mxu0 %v59
  %1008 = vmatprep.subr.mxu0 %v64
  %1009 = vmatpush1.msra.mxu0 %v63
  %1010 = vmatprep.subr.mxu0 %v68
  %1011 = vmatpush1.msra.mxu0 %v67
  %1012 = vmatprep.subr.mxu0 %v72
  %1013 = vmatpush1.msra.mxu0 %v71
  %1014 = vmatprep.subr.mxu0 %v76
  %1015 = vmatpush1.msra.mxu0 %v75
  %1016 = vmatprep.subr.mxu0 %v80
  %1017 = vmatpush1.msra.mxu0 %v79
  %1018 = vmatprep.subr.mxu0 0.0
  %1019 = vmatpush1.msra.mxu0 0.0
  %1020 = vmatprep.subr.mxu0 0.0
  %1021 = vmatpush1.msra.mxu0 0.0
  %1022 = vmatprep.subr.mxu0 0.0
  %1023 = vmatpush1.msra.mxu0 0.0
  %1024 = vmatprep.subr.mxu0 0.0
  %1025 = vmatpush1.msra.mxu0 0.0
  %1026 = vmatprep.subr.mxu0 0.0
  %1027 = vmatpush1.msra.mxu0 0.0
  %1028 = vmatprep.subr.mxu0 0.0
  %1029 = vmatpush1.msra.mxu0 0.0
  %1030 = vmatprep.subr.mxu0 0.0
  %1031 = vmatpush1.msra.mxu0 0.0
  %1032 = vmatprep.subr.mxu0 0.0
  %1033 = vmatpush1.msra.mxu0 0.0
  %1034 = vmatprep.subr.mxu0 0.0
  %1035 = vmatpush1.msra.mxu0 0.0
  %1036 = vmatprep.subr.mxu0 0.0
  %1037 = vmatpush1.msra.mxu0 0.0
  %1038 = vmatprep.subr.mxu0 0.0
  %1039 = vmatpush1.msra.mxu0 0.0
  %1040 = vmatprep.subr.mxu0 0.0
  %1041 = vmatpush1.msra.mxu0 0.0
  %1042 = vmatprep.subr.mxu0 0.0
  %1043 = vmatpush1.msra.mxu0 0.0
  %1044 = vmatprep.subr.mxu0 0.0
  %1045 = vmatpush1.msra.mxu0 0.0
  %1046 = vmatprep.subr.mxu0 0.0
  %1047 = vmatpush1.msra.mxu0 0.0
  %1048 = vmatprep.subr.mxu0 0.0
  %1049 = vmatpush1.msra.mxu0 0.0
  %1050 = vmatprep.mubr.f32.mxu0 0.0
  %1051 = vmatmul.mubr.f32.gmra.mrb[0].mxu0 %v913
  %v1052 = vpop.f32.mrb[0].mxu0
  %v1053 = vadd.f32 0.0, %v1052
  %v1054 = vpop.f32.mrb[0].mxu0
  %v1055 = vadd.f32 0.0, %v1054
  %1056 = vdwg.mxu0
  %v1061 = vcombine.low %v982, %v984
  %v1062 = vcombine.low %v1053, %v1055
  %v1064 = vunpack.c.l.s4 1966171168
  %v1065 = vunpack.c.0.s8 %v1064
  %v1066 = vlaneseq
  %v1067 = vshrl.u32 %v1066, 7
  %v1068 = vsub.s32 %v1065, %v1067
  %v1069 = vrot.slane %v1061, %v1068
  %v1071 = vunpack.c.l.s4 1966171168
  %v1072 = vunpack.c.0.s8 %v1071
  %v1073 = vlaneseq
  %v1074 = vshrl.u32 %v1073, 7
  %v1075 = vsub.s32 %v1072, %v1074
  %v1076 = vrot.slane %v1062, %v1075
  %v1077 = vcombine.low %v1069, %v1076
  %v1078 = vcombine.high %v1069, %v1076
  %v1080 = vunpack.c.l.s4 1966171168
  %v1081 = vunpack.c.0.s8 %v1080
  %v1082 = vlaneseq
  %v1083 = vshrl.u32 %v1082, 7
  %v1084 = vsub.s32 %v1081, %v1083
  %v1085 = vrot.slane %v1077, %v1084
  %v1087 = vunpack.c.l.s4 1966171168
  %v1088 = vunpack.c.0.s8 %v1087
  %v1089 = vlaneseq
  %v1090 = vshrl.u32 %v1089, 7
  %v1091 = vsub.s32 %v1088, %v1090
  %v1092 = vrot.slane %v1078, %v1091
  %v1095 = vadd.f32 %v894, %v1085
  %v1096 = vadd.f32 %v896, %v1092
  %v1097 = vxor.u32 %v1095, 2147483648
  %v1098 = vxor.u32 %v1096, 2147483648
  %v1099 = vmul.f32 %v1097, 1.442695
  %v1100 = vpow.pop %v1099
  %v1101 = vmul.f32 %v1098, 1.442695
  %v1102 = vpow.pop %v1101
  %v1103 = vadd.f32 %v1100, 1.0
  %v1104 = vadd.f32 %v1102, 1.0
  %v1105 = vrcp.pop %v1103
  %v1106 = vmul.f32 1.0, %v1105
  %v1107 = vrcp.pop %v1104
  %v1108 = vmul.f32 1.0, %v1107
  %v1111 = vrot.slane %v1095, 1
  %v1112 = vrot.slane %v1096, 1
  %v1115 = vxor.u32 %v1111, 2147483648
  %v1116 = vxor.u32 %v1112, 2147483648
  %v1117 = vmul.f32 %v1115, 1.442695
  %v1118 = vpow.pop %v1117
  %v1119 = vmul.f32 %v1116, 1.442695
  %v1120 = vpow.pop %v1119
  %v1121 = vadd.f32 %v1118, 1.0
  %v1122 = vadd.f32 %v1120, 1.0
  %v1123 = vrcp.pop %v1121
  %v1124 = vmul.f32 1.0, %v1123
  %v1125 = vrcp.pop %v1122
  %v1126 = vmul.f32 1.0, %v1125
  %v1127 = vrot.slane %v1095, 2
  %v1128 = vrot.slane %v1096, 2
  %v1131 = vtanh.pop %v1127
  %v1132 = vtanh.pop %v1128
  %v1133 = vrot.slane %v1095, 3
  %v1134 = vrot.slane %v1096, 3
  %v1137 = vxor.u32 %v1133, 2147483648
  %v1138 = vxor.u32 %v1134, 2147483648
  %v1139 = vmul.f32 %v1137, 1.442695
  %v1140 = vpow.pop %v1139
  %v1141 = vmul.f32 %v1138, 1.442695
  %v1142 = vpow.pop %v1141
  %v1143 = vadd.f32 %v1140, 1.0
  %v1144 = vadd.f32 %v1142, 1.0
  %v1145 = vrcp.pop %v1143
  %v1146 = vmul.f32 1.0, %v1145
  %v1147 = vrcp.pop %v1144
  %v1148 = vmul.f32 1.0, %v1147
  %v1149 = vmul.f32 %v1124, %v885
  %v1150 = vmul.f32 %v1126, %v886
  %v1151 = vmul.f32 %v1106, %v1131
  %v1152 = vmul.f32 %v1108, %v1132
  %v1153 = vadd.f32 %v1149, %v1151
  %v1154 = vadd.f32 %v1150, %v1152
  %v1155 = vtanh.pop %v1153
  %v1156 = vtanh.pop %v1154
  %v1157 = vmul.f32 %v1146, %v1155
  %v1158 = vmul.f32 %v1148, %v1156
  %1159 = vst [vmem:[%s2 + $0x3] sm:$0x1] %v1157
  %1160 = vst [vmem:[%s2 + $0xb] sm:$0x1] %v1158
  %s1161 = scalar_lea.vmem %s0, 4
  %v1162 = vld [vmem:[%s1161] ss:$8 sm:$0xf]
  %s1163 = scalar_lea.vmem %s0, 36
  %v1164 = vld [vmem:[%s1163] ss:$8 sm:$0xf]
  %v1167 = vcombine.low %v1157, %v1158
  %v1169 = vunpack.c.l.s4 1966171168
  %v1170 = vunpack.c.0.s8 %v1169
  %v1171 = vlaneseq
  %v1172 = vshrl.u32 %v1171, 7
  %v1173 = vsub.s32 %v1170, %v1172
  %v1174 = vrot.slane %v1167, %v1173
  %v1176 = vunpack.c.l.s4 1966171168
  %v1177 = vunpack.c.0.s8 %v1176
  %v1178 = vlaneseq
  %v1179 = vshrl.u32 %v1178, 7
  %v1180 = vsub.s32 %v1177, %v1179
  %v1181 = vrot.slane %v1174, %v1180
  %1183 = vmatprep.subr.mxu0 %v18
  %1184 = vmatpush1.msra.mxu0 %v17
  %1185 = vmatprep.subr.mxu0 %v22
  %1186 = vmatpush1.msra.mxu0 %v21
  %1187 = vmatprep.subr.mxu0 %v26
  %1188 = vmatpush1.msra.mxu0 %v25
  %1189 = vmatprep.subr.mxu0 %v30
  %1190 = vmatpush1.msra.mxu0 %v29
  %1191 = vmatprep.subr.mxu0 %v34
  %1192 = vmatpush1.msra.mxu0 %v33
  %1193 = vmatprep.subr.mxu0 %v38
  %1194 = vmatpush1.msra.mxu0 %v37
  %1195 = vmatprep.subr.mxu0 %v42
  %1196 = vmatpush1.msra.mxu0 %v41
  %1197 = vmatprep.subr.mxu0 %v46
  %1198 = vmatpush1.msra.mxu0 %v45
  %1199 = vmatprep.subr.mxu0 %v50
  %1200 = vmatpush1.msra.mxu0 %v49
  %1201 = vmatprep.subr.mxu0 %v54
  %1202 = vmatpush1.msra.mxu0 %v53
  %1203 = vmatprep.subr.mxu0 %v58
  %1204 = vmatpush1.msra.mxu0 %v57
  %1205 = vmatprep.subr.mxu0 %v62
  %1206 = vmatpush1.msra.mxu0 %v61
  %1207 = vmatprep.subr.mxu0 %v66
  %1208 = vmatpush1.msra.mxu0 %v65
  %1209 = vmatprep.subr.mxu0 %v70
  %1210 = vmatpush1.msra.mxu0 %v69
  %1211 = vmatprep.subr.mxu0 %v74
  %1212 = vmatpush1.msra.mxu0 %v73
  %1213 = vmatprep.subr.mxu0 %v78
  %1214 = vmatpush1.msra.mxu0 %v77
  %1215 = vmatprep.subr.mxu0 0.0
  %1216 = vmatpush1.msra.mxu0 0.0
  %1217 = vmatprep.subr.mxu0 0.0
  %1218 = vmatpush1.msra.mxu0 0.0
  %1219 = vmatprep.subr.mxu0 0.0
  %1220 = vmatpush1.msra.mxu0 0.0
  %1221 = vmatprep.subr.mxu0 0.0
  %1222 = vmatpush1.msra.mxu0 0.0
  %1223 = vmatprep.subr.mxu0 0.0
  %1224 = vmatpush1.msra.mxu0 0.0
  %1225 = vmatprep.subr.mxu0 0.0
  %1226 = vmatpush1.msra.mxu0 0.0
  %1227 = vmatprep.subr.mxu0 0.0
  %1228 = vmatpush1.msra.mxu0 0.0
  %1229 = vmatprep.subr.mxu0 0.0
  %1230 = vmatpush1.msra.mxu0 0.0
  %1231 = vmatprep.subr.mxu0 0.0
  %1232 = vmatpush1.msra.mxu0 0.0
  %1233 = vmatprep.subr.mxu0 0.0
  %1234 = vmatpush1.msra.mxu0 0.0
  %1235 = vmatprep.subr.mxu0 0.0
  %1236 = vmatpush1.msra.mxu0 0.0
  %1237 = vmatprep.subr.mxu0 0.0
  %1238 = vmatpush1.msra.mxu0 0.0
  %1239 = vmatprep.subr.mxu0 0.0
  %1240 = vmatpush1.msra.mxu0 0.0
  %1241 = vmatprep.subr.mxu0 0.0
  %1242 = vmatpush1.msra.mxu0 0.0
  %1243 = vmatprep.subr.mxu0 0.0
  %1244 = vmatpush1.msra.mxu0 0.0
  %1245 = vmatprep.subr.mxu0 0.0
  %1246 = vmatpush1.msra.mxu0 0.0
  %1247 = vmatprep.mubr.f32.mxu0 0.0
  %1248 = vmatmul.mubr.f32.gmra.mrb[0].mxu0 %v1181
  %v1249 = vpop.f32.mrb[0].mxu0
  %v1250 = vadd.f32 0.0, %v1249
  %v1251 = vpop.f32.mrb[0].mxu0
  %v1252 = vadd.f32 0.0, %v1251
  %1253 = vdwg.mxu0
  %1254 = vmatprep.subr.mxu0 %v20
  %1255 = vmatpush1.msra.mxu0 %v19
  %1256 = vmatprep.subr.mxu0 %v24
  %1257 = vmatpush1.msra.mxu0 %v23
  %1258 = vmatprep.subr.mxu0 %v28
  %1259 = vmatpush1.msra.mxu0 %v27
  %1260 = vmatprep.subr.mxu0 %v32
  %1261 = vmatpush1.msra.mxu0 %v31
  %1262 = vmatprep.subr.mxu0 %v36
  %1263 = vmatpush1.msra.mxu0 %v35
  %1264 = vmatprep.subr.mxu0 %v40
  %1265 = vmatpush1.msra.mxu0 %v39
  %1266 = vmatprep.subr.mxu0 %v44
  %1267 = vmatpush1.msra.mxu0 %v43
  %1268 = vmatprep.subr.mxu0 %v48
  %1269 = vmatpush1.msra.mxu0 %v47
  %1270 = vmatprep.subr.mxu0 %v52
  %1271 = vmatpush1.msra.mxu0 %v51
  %1272 = vmatprep.subr.mxu0 %v56
  %1273 = vmatpush1.msra.mxu0 %v55
  %1274 = vmatprep.subr.mxu0 %v60
  %1275 = vmatpush1.msra.mxu0 %v59
  %1276 = vmatprep.subr.mxu0 %v64
  %1277 = vmatpush1.msra.mxu0 %v63
  %1278 = vmatprep.subr.mxu0 %v68
  %1279 = vmatpush1.msra.mxu0 %v67
  %1280 = vmatprep.subr.mxu0 %v72
  %1281 = vmatpush1.msra.mxu0 %v71
  %1282 = vmatprep.subr.mxu0 %v76
  %1283 = vmatpush1.msra.mxu0 %v75
  %1284 = vmatprep.subr.mxu0 %v80
  %1285 = vmatpush1.msra.mxu0 %v79
  %1286 = vmatprep.subr.mxu0 0.0
  %1287 = vmatpush1.msra.mxu0 0.0
  %1288 = vmatprep.subr.mxu0 0.0
  %1289 = vmatpush1.msra.mxu0 0.0
  %1290 = vmatprep.subr.mxu0 0.0
  %1291 = vmatpush1.msra.mxu0 0.0
  %1292 = vmatprep.subr.mxu0 0.0
  %1293 = vmatpush1.msra.mxu0 0.0
  %1294 = vmatprep.subr.mxu0 0.0
  %1295 = vmatpush1.msra.mxu0 0.0
  %1296 = vmatprep.subr.mxu0 0.0
  %1297 = vmatpush1.msra.mxu0 0.0
  %1298 = vmatprep.subr.mxu0 0.0
  %1299 = vmatpush1.msra.mxu0 0.0
  %1300 = vmatprep.subr.mxu0 0.0
  %1301 = vmatpush1.msra.mxu0 0.0
  %1302 = vmatprep.subr.mxu0 0.0
  %1303 = vmatpush1.msra.mxu0 0.0
  %1304 = vmatprep.subr.mxu0 0.0
  %1305 = vmatpush1.msra.mxu0 0.0
  %1306 = vmatprep.subr.mxu0 0.0
  %1307 = vmatpush1.msra.mxu0 0.0
  %1308 = vmatprep.subr.mxu0 0.0
  %1309 = vmatpush1.msra.mxu0 0.0
  %1310 = vmatprep.subr.mxu0 0.0
  %1311 = vmatpush1.msra.mxu0 0.0
  %1312 = vmatprep.subr.mxu0 0.0
  %1313 = vmatpush1.msra.mxu0 0.0
  %1314 = vmatprep.subr.mxu0 0.0
  %1315 = vmatpush1.msra.mxu0 0.0
  %1316 = vmatprep.subr.mxu0 0.0
  %1317 = vmatpush1.msra.mxu0 0.0
  %1318 = vmatprep.mubr.f32.mxu0 0.0
  %1319 = vmatmul.mubr.f32.gmra.mrb[0].mxu0 %v1181
  %v1320 = vpop.f32.mrb[0].mxu0
  %v1321 = vadd.f32 0.0, %v1320
  %v1322 = vpop.f32.mrb[0].mxu0
  %v1323 = vadd.f32 0.0, %v1322
  %1324 = vdwg.mxu0
  %v1329 = vcombine.low %v1250, %v1252
  %v1330 = vcombine.low %v1321, %v1323
  %v1332 = vunpack.c.l.s4 1966171168
  %v1333 = vunpack.c.0.s8 %v1332
  %v1334 = vlaneseq
  %v1335 = vshrl.u32 %v1334, 7
  %v1336 = vsub.s32 %v1333, %v1335
  %v1337 = vrot.slane %v1329, %v1336
  %v1339 = vunpack.c.l.s4 1966171168
  %v1340 = vunpack.c.0.s8 %v1339
  %v1341 = vlaneseq
  %v1342 = vshrl.u32 %v1341, 7
  %v1343 = vsub.s32 %v1340, %v1342
  %v1344 = vrot.slane %v1330, %v1343
  %v1345 = vcombine.low %v1337, %v1344
  %v1346 = vcombine.high %v1337, %v1344
  %v1348 = vunpack.c.l.s4 1966171168
  %v1349 = vunpack.c.0.s8 %v1348
  %v1350 = vlaneseq
  %v1351 = vshrl.u32 %v1350, 7
  %v1352 = vsub.s32 %v1349, %v1351
  %v1353 = vrot.slane %v1345, %v1352
  %v1355 = vunpack.c.l.s4 1966171168
  %v1356 = vunpack.c.0.s8 %v1355
  %v1357 = vlaneseq
  %v1358 = vshrl.u32 %v1357, 7
  %v1359 = vsub.s32 %v1356, %v1358
  %v1360 = vrot.slane %v1346, %v1359
  %v1363 = vadd.f32 %v1162, %v1353
  %v1364 = vadd.f32 %v1164, %v1360
  %v1365 = vxor.u32 %v1363, 2147483648
  %v1366 = vxor.u32 %v1364, 2147483648
  %v1367 = vmul.f32 %v1365, 1.442695
  %v1368 = vpow.pop %v1367
  %v1369 = vmul.f32 %v1366, 1.442695
  %v1370 = vpow.pop %v1369
  %v1371 = vadd.f32 %v1368, 1.0
  %v1372 = vadd.f32 %v1370, 1.0
  %v1373 = vrcp.pop %v1371
  %v1374 = vmul.f32 1.0, %v1373
  %v1375 = vrcp.pop %v1372
  %v1376 = vmul.f32 1.0, %v1375
  %v1379 = vrot.slane %v1363, 1
  %v1380 = vrot.slane %v1364, 1
  %v1383 = vxor.u32 %v1379, 2147483648
  %v1384 = vxor.u32 %v1380, 2147483648
  %v1385 = vmul.f32 %v1383, 1.442695
  %v1386 = vpow.pop %v1385
  %v1387 = vmul.f32 %v1384, 1.442695
  %v1388 = vpow.pop %v1387
  %v1389 = vadd.f32 %v1386, 1.0
  %v1390 = vadd.f32 %v1388, 1.0
  %v1391 = vrcp.pop %v1389
  %v1392 = vmul.f32 1.0, %v1391
  %v1393 = vrcp.pop %v1390
  %v1394 = vmul.f32 1.0, %v1393
  %v1395 = vrot.slane %v1363, 2
  %v1396 = vrot.slane %v1364, 2
  %v1399 = vtanh.pop %v1395
  %v1400 = vtanh.pop %v1396
  %v1401 = vrot.slane %v1363, 3
  %v1402 = vrot.slane %v1364, 3
  %v1405 = vxor.u32 %v1401, 2147483648
  %v1406 = vxor.u32 %v1402, 2147483648
  %v1407 = vmul.f32 %v1405, 1.442695
  %v1408 = vpow.pop %v1407
  %v1409 = vmul.f32 %v1406, 1.442695
  %v1410 = vpow.pop %v1409
  %v1411 = vadd.f32 %v1408, 1.0
  %v1412 = vadd.f32 %v1410, 1.0
  %v1413 = vrcp.pop %v1411
  %v1414 = vmul.f32 1.0, %v1413
  %v1415 = vrcp.pop %v1412
  %v1416 = vmul.f32 1.0, %v1415
  %v1417 = vmul.f32 %v1392, %v1153
  %v1418 = vmul.f32 %v1394, %v1154
  %v1419 = vmul.f32 %v1374, %v1399
  %v1420 = vmul.f32 %v1376, %v1400
  %v1421 = vadd.f32 %v1417, %v1419
  %v1422 = vadd.f32 %v1418, %v1420
  %v1423 = vtanh.pop %v1421
  %v1424 = vtanh.pop %v1422
  %v1425 = vmul.f32 %v1414, %v1423
  %v1426 = vmul.f32 %v1416, %v1424
  %1427 = vst [vmem:[%s2 + $0x4] sm:$0x1] %v1425
  %1428 = vst [vmem:[%s2 + $0xc] sm:$0x1] %v1426
  %s1429 = scalar_lea.vmem %s0, 5
  %v1430 = vld [vmem:[%s1429] ss:$8 sm:$0xf]
  %s1431 = scalar_lea.vmem %s0, 37
  %v1432 = vld [vmem:[%s1431] ss:$8 sm:$0xf]
  %v1435 = vcombine.low %v1425, %v1426
  %v1437 = vunpack.c.l.s4 1966171168
  %v1438 = vunpack.c.0.s8 %v1437
  %v1439 = vlaneseq
  %v1440 = vshrl.u32 %v1439, 7
  %v1441 = vsub.s32 %v1438, %v1440
  %v1442 = vrot.slane %v1435, %v1441
  %v1444 = vunpack.c.l.s4 1966171168
  %v1445 = vunpack.c.0.s8 %v1444
  %v1446 = vlaneseq
  %v1447 = vshrl.u32 %v1446, 7
  %v1448 = vsub.s32 %v1445, %v1447
  %v1449 = vrot.slane %v1442, %v1448
  %1451 = vmatprep.subr.mxu0 %v18
  %1452 = vmatpush1.msra.mxu0 %v17
  %1453 = vmatprep.subr.mxu0 %v22
  %1454 = vmatpush1.msra.mxu0 %v21
  %1455 = vmatprep.subr.mxu0 %v26
  %1456 = vmatpush1.msra.mxu0 %v25
  %1457 = vmatprep.subr.mxu0 %v30
  %1458 = vmatpush1.msra.mxu0 %v29
  %1459 = vmatprep.subr.mxu0 %v34
  %1460 = vmatpush1.msra.mxu0 %v33
  %1461 = vmatprep.subr.mxu0 %v38
  %1462 = vmatpush1.msra.mxu0 %v37
  %1463 = vmatprep.subr.mxu0 %v42
  %1464 = vmatpush1.msra.mxu0 %v41
  %1465 = vmatprep.subr.mxu0 %v46
  %1466 = vmatpush1.msra.mxu0 %v45
  %1467 = vmatprep.subr.mxu0 %v50
  %1468 = vmatpush1.msra.mxu0 %v49
  %1469 = vmatprep.subr.mxu0 %v54
  %1470 = vmatpush1.msra.mxu0 %v53
  %1471 = vmatprep.subr.mxu0 %v58
  %1472 = vmatpush1.msra.mxu0 %v57
  %1473 = vmatprep.subr.mxu0 %v62
  %1474 = vmatpush1.msra.mxu0 %v61
  %1475 = vmatprep.subr.mxu0 %v66
  %1476 = vmatpush1.msra.mxu0 %v65
  %1477 = vmatprep.subr.mxu0 %v70
  %1478 = vmatpush1.msra.mxu0 %v69
  %1479 = vmatprep.subr.mxu0 %v74
  %1480 = vmatpush1.msra.mxu0 %v73
  %1481 = vmatprep.subr.mxu0 %v78
  %1482 = vmatpush1.msra.mxu0 %v77
  %1483 = vmatprep.subr.mxu0 0.0
  %1484 = vmatpush1.msra.mxu0 0.0
  %1485 = vmatprep.subr.mxu0 0.0
  %1486 = vmatpush1.msra.mxu0 0.0
  %1487 = vmatprep.subr.mxu0 0.0
  %1488 = vmatpush1.msra.mxu0 0.0
  %1489 = vmatprep.subr.mxu0 0.0
  %1490 = vmatpush1.msra.mxu0 0.0
  %1491 = vmatprep.subr.mxu0 0.0
  %1492 = vmatpush1.msra.mxu0 0.0
  %1493 = vmatprep.subr.mxu0 0.0
  %1494 = vmatpush1.msra.mxu0 0.0
  %1495 = vmatprep.subr.mxu0 0.0
  %1496 = vmatpush1.msra.mxu0 0.0
  %1497 = vmatprep.subr.mxu0 0.0
  %1498 = vmatpush1.msra.mxu0 0.0
  %1499 = vmatprep.subr.mxu0 0.0
  %1500 = vmatpush1.msra.mxu0 0.0
  %1501 = vmatprep.subr.mxu0 0.0
  %1502 = vmatpush1.msra.mxu0 0.0
  %1503 = vmatprep.subr.mxu0 0.0
  %1504 = vmatpush1.msra.mxu0 0.0
  %1505 = vmatprep.subr.mxu0 0.0
  %1506 = vmatpush1.msra.mxu0 0.0
  %1507 = vmatprep.subr.mxu0 0.0
  %1508 = vmatpush1.msra.mxu0 0.0
  %1509 = vmatprep.subr.mxu0 0.0
  %1510 = vmatpush1.msra.mxu0 0.0
  %1511 = vmatprep.subr.mxu0 0.0
  %1512 = vmatpush1.msra.mxu0 0.0
  %1513 = vmatprep.subr.mxu0 0.0
  %1514 = vmatpush1.msra.mxu0 0.0
  %1515 = vmatprep.mubr.f32.mxu0 0.0
  %1516 = vmatmul.mubr.f32.gmra.mrb[0].mxu0 %v1449
  %v1517 = vpop.f32.mrb[0].mxu0
  %v1518 = vadd.f32 0.0, %v1517
  %v1519 = vpop.f32.mrb[0].mxu0
  %v1520 = vadd.f32 0.0, %v1519
  %1521 = vdwg.mxu0
  %1522 = vmatprep.subr.mxu0 %v20
  %1523 = vmatpush1.msra.mxu0 %v19
  %1524 = vmatprep.subr.mxu0 %v24
  %1525 = vmatpush1.msra.mxu0 %v23
  %1526 = vmatprep.subr.mxu0 %v28
  %1527 = vmatpush1.msra.mxu0 %v27
  %1528 = vmatprep.subr.mxu0 %v32
  %1529 = vmatpush1.msra.mxu0 %v31
  %1530 = vmatprep.subr.mxu0 %v36
  %1531 = vmatpush1.msra.mxu0 %v35
  %1532 = vmatprep.subr.mxu0 %v40
  %1533 = vmatpush1.msra.mxu0 %v39
  %1534 = vmatprep.subr.mxu0 %v44
  %1535 = vmatpush1.msra.mxu0 %v43
  %1536 = vmatprep.subr.mxu0 %v48
  %1537 = vmatpush1.msra.mxu0 %v47
  %1538 = vmatprep.subr.mxu0 %v52
  %1539 = vmatpush1.msra.mxu0 %v51
  %1540 = vmatprep.subr.mxu0 %v56
  %1541 = vmatpush1.msra.mxu0 %v55
  %1542 = vmatprep.subr.mxu0 %v60
  %1543 = vmatpush1.msra.mxu0 %v59
  %1544 = vmatprep.subr.mxu0 %v64
  %1545 = vmatpush1.msra.mxu0 %v63
  %1546 = vmatprep.subr.mxu0 %v68
  %1547 = vmatpush1.msra.mxu0 %v67
  %1548 = vmatprep.subr.mxu0 %v72
  %1549 = vmatpush1.msra.mxu0 %v71
  %1550 = vmatprep.subr.mxu0 %v76
  %1551 = vmatpush1.msra.mxu0 %v75
  %1552 = vmatprep.subr.mxu0 %v80
  %1553 = vmatpush1.msra.mxu0 %v79
  %1554 = vmatprep.subr.mxu0 0.0
  %1555 = vmatpush1.msra.mxu0 0.0
  %1556 = vmatprep.subr.mxu0 0.0
  %1557 = vmatpush1.msra.mxu0 0.0
  %1558 = vmatprep.subr.mxu0 0.0
  %1559 = vmatpush1.msra.mxu0 0.0
  %1560 = vmatprep.subr.mxu0 0.0
  %1561 = vmatpush1.msra.mxu0 0.0
  %1562 = vmatprep.subr.mxu0 0.0
  %1563 = vmatpush1.msra.mxu0 0.0
  %1564 = vmatprep.subr.mxu0 0.0
  %1565 = vmatpush1.msra.mxu0 0.0
  %1566 = vmatprep.subr.mxu0 0.0
  %1567 = vmatpush1.msra.mxu0 0.0
  %1568 = vmatprep.subr.mxu0 0.0
  %1569 = vmatpush1.msra.mxu0 0.0
  %1570 = vmatprep.subr.mxu0 0.0
  %1571 = vmatpush1.msra.mxu0 0.0
  %1572 = vmatprep.subr.mxu0 0.0
  %1573 = vmatpush1.msra.mxu0 0.0
  %1574 = vmatprep.subr.mxu0 0.0
  %1575 = vmatpush1.msra.mxu0 0.0
  %1576 = vmatprep.subr.mxu0 0.0
  %1577 = vmatpush1.msra.mxu0 0.0
  %1578 = vmatprep.subr.mxu0 0.0
  %1579 = vmatpush1.msra.mxu0 0.0
  %1580 = vmatprep.subr.mxu0 0.0
  %1581 = vmatpush1.msra.mxu0 0.0
  %1582 = vmatprep.subr.mxu0 0.0
  %1583 = vmatpush1.msra.mxu0 0.0
  %1584 = vmatprep.subr.mxu0 0.0
  %1585 = vmatpush1.msra.mxu0 0.0
  %1586 = vmatprep.mubr.f32.mxu0 0.0
  %1587 = vmatmul.mubr.f32.gmra.mrb[0].mxu0 %v1449
  %v1588 = vpop.f32.mrb[0].mxu0
  %v1589 = vadd.f32 0.0, %v1588
  %v1590 = vpop.f32.mrb[0].mxu0
  %v1591 = vadd.f32 0.0, %v1590
  %1592 = vdwg.mxu0
  %v1597 = vcombine.low %v1518, %v1520
  %v1598 = vcombine.low %v1589, %v1591
  %v1600 = vunpack.c.l.s4 1966171168
  %v1601 = vunpack.c.0.s8 %v1600
  %v1602 = vlaneseq
  %v1603 = vshrl.u32 %v1602, 7
  %v1604 = vsub.s32 %v1601, %v1603
  %v1605 = vrot.slane %v1597, %v1604
  %v1607 = vunpack.c.l.s4 1966171168
  %v1608 = vunpack.c.0.s8 %v1607
  %v1609 = vlaneseq
  %v1610 = vshrl.u32 %v1609, 7
  %v1611 = vsub.s32 %v1608, %v1610
  %v1612 = vrot.slane %v1598, %v1611
  %v1613 = vcombine.low %v1605, %v1612
  %v1614 = vcombine.high %v1605, %v1612
  %v1616 = vunpack.c.l.s4 1966171168
  %v1617 = vunpack.c.0.s8 %v1616
  %v1618 = vlaneseq
  %v1619 = vshrl.u32 %v1618, 7
  %v1620 = vsub.s32 %v1617, %v1619
  %v1621 = vrot.slane %v1613, %v1620
  %v1623 = vunpack.c.l.s4 1966171168
  %v1624 = vunpack.c.0.s8 %v1623
  %v1625 = vlaneseq
  %v1626 = vshrl.u32 %v1625, 7
  %v1627 = vsub.s32 %v1624, %v1626
  %v1628 = vrot.slane %v1614, %v1627
  %v1631 = vadd.f32 %v1430, %v1621
  %v1632 = vadd.f32 %v1432, %v1628
  %v1633 = vxor.u32 %v1631, 2147483648
  %v1634 = vxor.u32 %v1632, 2147483648
  %v1635 = vmul.f32 %v1633, 1.442695
  %v1636 = vpow.pop %v1635
  %v1637 = vmul.f32 %v1634, 1.442695
  %v1638 = vpow.pop %v1637
  %v1639 = vadd.f32 %v1636, 1.0
  %v1640 = vadd.f32 %v1638, 1.0
  %v1641 = vrcp.pop %v1639
  %v1642 = vmul.f32 1.0, %v1641
  %v1643 = vrcp.pop %v1640
  %v1644 = vmul.f32 1.0, %v1643
  %v1647 = vrot.slane %v1631, 1
  %v1648 = vrot.slane %v1632, 1
  %v1651 = vxor.u32 %v1647, 2147483648
  %v1652 = vxor.u32 %v1648, 2147483648
  %v1653 = vmul.f32 %v1651, 1.442695
  %v1654 = vpow.pop %v1653
  %v1655 = vmul.f32 %v1652, 1.442695
  %v1656 = vpow.pop %v1655
  %v1657 = vadd.f32 %v1654, 1.0
  %v1658 = vadd.f32 %v1656, 1.0
  %v1659 = vrcp.pop %v1657
  %v1660 = vmul.f32 1.0, %v1659
  %v1661 = vrcp.pop %v1658
  %v1662 = vmul.f32 1.0, %v1661
  %v1663 = vrot.slane %v1631, 2
  %v1664 = vrot.slane %v1632, 2
  %v1667 = vtanh.pop %v1663
  %v1668 = vtanh.pop %v1664
  %v1669 = vrot.slane %v1631, 3
  %v1670 = vrot.slane %v1632, 3
  %v1673 = vxor.u32 %v1669, 2147483648
  %v1674 = vxor.u32 %v1670, 2147483648
  %v1675 = vmul.f32 %v1673, 1.442695
  %v1676 = vpow.pop %v1675
  %v1677 = vmul.f32 %v1674, 1.442695
  %v1678 = vpow.pop %v1677
  %v1679 = vadd.f32 %v1676, 1.0
  %v1680 = vadd.f32 %v1678, 1.0
  %v1681 = vrcp.pop %v1679
  %v1682 = vmul.f32 1.0, %v1681
  %v1683 = vrcp.pop %v1680
  %v1684 = vmul.f32 1.0, %v1683
  %v1685 = vmul.f32 %v1660, %v1421
  %v1686 = vmul.f32 %v1662, %v1422
  %v1687 = vmul.f32 %v1642, %v1667
  %v1688 = vmul.f32 %v1644, %v1668
  %v1689 = vadd.f32 %v1685, %v1687
  %v1690 = vadd.f32 %v1686, %v1688
  %v1691 = vtanh.pop %v1689
  %v1692 = vtanh.pop %v1690
  %v1693 = vmul.f32 %v1682, %v1691
  %v1694 = vmul.f32 %v1684, %v1692
  %1695 = vst [vmem:[%s2 + $0x5] sm:$0x1] %v1693
  %1696 = vst [vmem:[%s2 + $0xd] sm:$0x1] %v1694
  %s1697 = scalar_lea.vmem %s0, 6
  %v1698 = vld [vmem:[%s1697] ss:$8 sm:$0xf]
  %s1699 = scalar_lea.vmem %s0, 38
  %v1700 = vld [vmem:[%s1699] ss:$8 sm:$0xf]
  %v1703 = vcombine.low %v1693, %v1694
  %v1705 = vunpack.c.l.s4 1966171168
  %v1706 = vunpack.c.0.s8 %v1705
  %v1707 = vlaneseq
  %v1708 = vshrl.u32 %v1707, 7
  %v1709 = vsub.s32 %v1706, %v1708
  %v1710 = vrot.slane %v1703, %v1709
  %v1712 = vunpack.c.l.s4 1966171168
  %v1713 = vunpack.c.0.s8 %v1712
  %v1714 = vlaneseq
  %v1715 = vshrl.u32 %v1714, 7
  %v1716 = vsub.s32 %v1713, %v1715
  %v1717 = vrot.slane %v1710, %v1716
  %1719 = vmatprep.subr.mxu0 %v18
  %1720 = vmatpush1.msra.mxu0 %v17
  %1721 = vmatprep.subr.mxu0 %v22
  %1722 = vmatpush1.msra.mxu0 %v21
  %1723 = vmatprep.subr.mxu0 %v26
  %1724 = vmatpush1.msra.mxu0 %v25
  %1725 = vmatprep.subr.mxu0 %v30
  %1726 = vmatpush1.msra.mxu0 %v29
  %1727 = vmatprep.subr.mxu0 %v34
  %1728 = vmatpush1.msra.mxu0 %v33
  %1729 = vmatprep.subr.mxu0 %v38
  %1730 = vmatpush1.msra.mxu0 %v37
  %1731 = vmatprep.subr.mxu0 %v42
  %1732 = vmatpush1.msra.mxu0 %v41
  %1733 = vmatprep.subr.mxu0 %v46
  %1734 = vmatpush1.msra.mxu0 %v45
  %1735 = vmatprep.subr.mxu0 %v50
  %1736 = vmatpush1.msra.mxu0 %v49
  %1737 = vmatprep.subr.mxu0 %v54
  %1738 = vmatpush1.msra.mxu0 %v53
  %1739 = vmatprep.subr.mxu0 %v58
  %1740 = vmatpush1.msra.mxu0 %v57
  %1741 = vmatprep.subr.mxu0 %v62
  %1742 = vmatpush1.msra.mxu0 %v61
  %1743 = vmatprep.subr.mxu0 %v66
  %1744 = vmatpush1.msra.mxu0 %v65
  %1745 = vmatprep.subr.mxu0 %v70
  %1746 = vmatpush1.msra.mxu0 %v69
  %1747 = vmatprep.subr.mxu0 %v74
  %1748 = vmatpush1.msra.mxu0 %v73
  %1749 = vmatprep.subr.mxu0 %v78
  %1750 = vmatpush1.msra.mxu0 %v77
  %1751 = vmatprep.subr.mxu0 0.0
  %1752 = vmatpush1.msra.mxu0 0.0
  %1753 = vmatprep.subr.mxu0 0.0
  %1754 = vmatpush1.msra.mxu0 0.0
  %1755 = vmatprep.subr.mxu0 0.0
  %1756 = vmatpush1.msra.mxu0 0.0
  %1757 = vmatprep.subr.mxu0 0.0
  %1758 = vmatpush1.msra.mxu0 0.0
  %1759 = vmatprep.subr.mxu0 0.0
  %1760 = vmatpush1.msra.mxu0 0.0
  %1761 = vmatprep.subr.mxu0 0.0
  %1762 = vmatpush1.msra.mxu0 0.0
  %1763 = vmatprep.subr.mxu0 0.0
  %1764 = vmatpush1.msra.mxu0 0.0
  %1765 = vmatprep.subr.mxu0 0.0
  %1766 = vmatpush1.msra.mxu0 0.0
  %1767 = vmatprep.subr.mxu0 0.0
  %1768 = vmatpush1.msra.mxu0 0.0
  %1769 = vmatprep.subr.mxu0 0.0
  %1770 = vmatpush1.msra.mxu0 0.0
  %1771 = vmatprep.subr.mxu0 0.0
  %1772 = vmatpush1.msra.mxu0 0.0
  %1773 = vmatprep.subr.mxu0 0.0
  %1774 = vmatpush1.msra.mxu0 0.0
  %1775 = vmatprep.subr.mxu0 0.0
  %1776 = vmatpush1.msra.mxu0 0.0
  %1777 = vmatprep.subr.mxu0 0.0
  %1778 = vmatpush1.msra.mxu0 0.0
  %1779 = vmatprep.subr.mxu0 0.0
  %1780 = vmatpush1.msra.mxu0 0.0
  %1781 = vmatprep.subr.mxu0 0.0
  %1782 = vmatpush1.msra.mxu0 0.0
  %1783 = vmatprep.mubr.f32.mxu0 0.0
  %1784 = vmatmul.mubr.f32.gmra.mrb[0].mxu0 %v1717
  %v1785 = vpop.f32.mrb[0].mxu0
  %v1786 = vadd.f32 0.0, %v1785
  %v1787 = vpop.f32.mrb[0].mxu0
  %v1788 = vadd.f32 0.0, %v1787
  %1789 = vdwg.mxu0
  %1790 = vmatprep.subr.mxu0 %v20
  %1791 = vmatpush1.msra.mxu0 %v19
  %1792 = vmatprep.subr.mxu0 %v24
  %1793 = vmatpush1.msra.mxu0 %v23
  %1794 = vmatprep.subr.mxu0 %v28
  %1795 = vmatpush1.msra.mxu0 %v27
  %1796 = vmatprep.subr.mxu0 %v32
  %1797 = vmatpush1.msra.mxu0 %v31
  %1798 = vmatprep.subr.mxu0 %v36
  %1799 = vmatpush1.msra.mxu0 %v35
  %1800 = vmatprep.subr.mxu0 %v40
  %1801 = vmatpush1.msra.mxu0 %v39
  %1802 = vmatprep.subr.mxu0 %v44
  %1803 = vmatpush1.msra.mxu0 %v43
  %1804 = vmatprep.subr.mxu0 %v48
  %1805 = vmatpush1.msra.mxu0 %v47
  %1806 = vmatprep.subr.mxu0 %v52
  %1807 = vmatpush1.msra.mxu0 %v51
  %1808 = vmatprep.subr.mxu0 %v56
  %1809 = vmatpush1.msra.mxu0 %v55
  %1810 = vmatprep.subr.mxu0 %v60
  %1811 = vmatpush1.msra.mxu0 %v59
  %1812 = vmatprep.subr.mxu0 %v64
  %1813 = vmatpush1.msra.mxu0 %v63
  %1814 = vmatprep.subr.mxu0 %v68
  %1815 = vmatpush1.msra.mxu0 %v67
  %1816 = vmatprep.subr.mxu0 %v72
  %1817 = vmatpush1.msra.mxu0 %v71
  %1818 = vmatprep.subr.mxu0 %v76
  %1819 = vmatpush1.msra.mxu0 %v75
  %1820 = vmatprep.subr.mxu0 %v80
  %1821 = vmatpush1.msra.mxu0 %v79
  %1822 = vmatprep.subr.mxu0 0.0
  %1823 = vmatpush1.msra.mxu0 0.0
  %1824 = vmatprep.subr.mxu0 0.0
  %1825 = vmatpush1.msra.mxu0 0.0
  %1826 = vmatprep.subr.mxu0 0.0
  %1827 = vmatpush1.msra.mxu0 0.0
  %1828 = vmatprep.subr.mxu0 0.0
  %1829 = vmatpush1.msra.mxu0 0.0
  %1830 = vmatprep.subr.mxu0 0.0
  %1831 = vmatpush1.msra.mxu0 0.0
  %1832 = vmatprep.subr.mxu0 0.0
  %1833 = vmatpush1.msra.mxu0 0.0
  %1834 = vmatprep.subr.mxu0 0.0
  %1835 = vmatpush1.msra.mxu0 0.0
  %1836 = vmatprep.subr.mxu0 0.0
  %1837 = vmatpush1.msra.mxu0 0.0
  %1838 = vmatprep.subr.mxu0 0.0
  %1839 = vmatpush1.msra.mxu0 0.0
  %1840 = vmatprep.subr.mxu0 0.0
  %1841 = vmatpush1.msra.mxu0 0.0
  %1842 = vmatprep.subr.mxu0 0.0
  %1843 = vmatpush1.msra.mxu0 0.0
  %1844 = vmatprep.subr.mxu0 0.0
  %1845 = vmatpush1.msra.mxu0 0.0
  %1846 = vmatprep.subr.mxu0 0.0
  %1847 = vmatpush1.msra.mxu0 0.0
  %1848 = vmatprep.subr.mxu0 0.0
  %1849 = vmatpush1.msra.mxu0 0.0
  %1850 = vmatprep.subr.mxu0 0.0
  %1851 = vmatpush1.msra.mxu0 0.0
  %1852 = vmatprep.subr.mxu0 0.0
  %1853 = vmatpush1.msra.mxu0 0.0
  %1854 = vmatprep.mubr.f32.mxu0 0.0
  %1855 = vmatmul.mubr.f32.gmra.mrb[0].mxu0 %v1717
  %v1856 = vpop.f32.mrb[0].mxu0
  %v1857 = vadd.f32 0.0, %v1856
  %v1858 = vpop.f32.mrb[0].mxu0
  %v1859 = vadd.f32 0.0, %v1858
  %1860 = vdwg.mxu0
  %v1865 = vcombine.low %v1786, %v1788
  %v1866 = vcombine.low %v1857, %v1859
  %v1868 = vunpack.c.l.s4 1966171168
  %v1869 = vunpack.c.0.s8 %v1868
  %v1870 = vlaneseq
  %v1871 = vshrl.u32 %v1870, 7
  %v1872 = vsub.s32 %v1869, %v1871
  %v1873 = vrot.slane %v1865, %v1872
  %v1875 = vunpack.c.l.s4 1966171168
  %v1876 = vunpack.c.0.s8 %v1875
  %v1877 = vlaneseq
  %v1878 = vshrl.u32 %v1877, 7
  %v1879 = vsub.s32 %v1876, %v1878
  %v1880 = vrot.slane %v1866, %v1879
  %v1881 = vcombine.low %v1873, %v1880
  %v1882 = vcombine.high %v1873, %v1880
  %v1884 = vunpack.c.l.s4 1966171168
  %v1885 = vunpack.c.0.s8 %v1884
  %v1886 = vlaneseq
  %v1887 = vshrl.u32 %v1886, 7
  %v1888 = vsub.s32 %v1885, %v1887
  %v1889 = vrot.slane %v1881, %v1888
  %v1891 = vunpack.c.l.s4 1966171168
  %v1892 = vunpack.c.0.s8 %v1891
  %v1893 = vlaneseq
  %v1894 = vshrl.u32 %v1893, 7
  %v1895 = vsub.s32 %v1892, %v1894
  %v1896 = vrot.slane %v1882, %v1895
  %v1899 = vadd.f32 %v1698, %v1889
  %v1900 = vadd.f32 %v1700, %v1896
  %v1901 = vxor.u32 %v1899, 2147483648
  %v1902 = vxor.u32 %v1900, 2147483648
  %v1903 = vmul.f32 %v1901, 1.442695
  %v1904 = vpow.pop %v1903
  %v1905 = vmul.f32 %v1902, 1.442695
  %v1906 = vpow.pop %v1905
  %v1907 = vadd.f32 %v1904, 1.0
  %v1908 = vadd.f32 %v1906, 1.0
  %v1909 = vrcp.pop %v1907
  %v1910 = vmul.f32 1.0, %v1909
  %v1911 = vrcp.pop %v1908
  %v1912 = vmul.f32 1.0, %v1911
  %v1915 = vrot.slane %v1899, 1
  %v1916 = vrot.slane %v1900, 1
  %v1919 = vxor.u32 %v1915, 2147483648
  %v1920 = vxor.u32 %v1916, 2147483648
  %v1921 = vmul.f32 %v1919, 1.442695
  %v1922 = vpow.pop %v1921
  %v1923 = vmul.f32 %v1920, 1.442695
  %v1924 = vpow.pop %v1923
  %v1925 = vadd.f32 %v1922, 1.0
  %v1926 = vadd.f32 %v1924, 1.0
  %v1927 = vrcp.pop %v1925
  %v1928 = vmul.f32 1.0, %v1927
  %v1929 = vrcp.pop %v1926
  %v1930 = vmul.f32 1.0, %v1929
  %v1931 = vrot.slane %v1899, 2
  %v1932 = vrot.slane %v1900, 2
  %v1935 = vtanh.pop %v1931
  %v1936 = vtanh.pop %v1932
  %v1937 = vrot.slane %v1899, 3
  %v1938 = vrot.slane %v1900, 3
  %v1941 = vxor.u32 %v1937, 2147483648
  %v1942 = vxor.u32 %v1938, 2147483648
  %v1943 = vmul.f32 %v1941, 1.442695
  %v1944 = vpow.pop %v1943
  %v1945 = vmul.f32 %v1942, 1.442695
  %v1946 = vpow.pop %v1945
  %v1947 = vadd.f32 %v1944, 1.0
  %v1948 = vadd.f32 %v1946, 1.0
  %v1949 = vrcp.pop %v1947
  %v1950 = vmul.f32 1.0, %v1949
  %v1951 = vrcp.pop %v1948
  %v1952 = vmul.f32 1.0, %v1951
  %v1953 = vmul.f32 %v1928, %v1689
  %v1954 = vmul.f32 %v1930, %v1690
  %v1955 = vmul.f32 %v1910, %v1935
  %v1956 = vmul.f32 %v1912, %v1936
  %v1957 = vadd.f32 %v1953, %v1955
  %v1958 = vadd.f32 %v1954, %v1956
  %v1959 = vtanh.pop %v1957
  %v1960 = vtanh.pop %v1958
  %v1961 = vmul.f32 %v1950, %v1959
  %v1962 = vmul.f32 %v1952, %v1960
  %1963 = vst [vmem:[%s2 + $0x6] sm:$0x1] %v1961
  %1964 = vst [vmem:[%s2 + $0xe] sm:$0x1] %v1962
  %s1965 = scalar_lea.vmem %s0, 7
  %v1966 = vld [vmem:[%s1965] ss:$8 sm:$0xf]
  %s1967 = scalar_lea.vmem %s0, 39
  %v1968 = vld [vmem:[%s1967] ss:$8 sm:$0xf]
  %v1971 = vcombine.low %v1961, %v1962
  %v1973 = vunpack.c.l.s4 1966171168
  %v1974 = vunpack.c.0.s8 %v1973
  %v1975 = vlaneseq
  %v1976 = vshrl.u32 %v1975, 7
  %v1977 = vsub.s32 %v1974, %v1976
  %v1978 = vrot.slane %v1971, %v1977
  %v1980 = vunpack.c.l.s4 1966171168
  %v1981 = vunpack.c.0.s8 %v1980
  %v1982 = vlaneseq
  %v1983 = vshrl.u32 %v1982, 7
  %v1984 = vsub.s32 %v1981, %v1983
  %v1985 = vrot.slane %v1978, %v1984
  %1987 = vmatprep.subr.mxu0 %v18
  %1988 = vmatpush1.msra.mxu0 %v17
  %1989 = vmatprep.subr.mxu0 %v22
  %1990 = vmatpush1.msra.mxu0 %v21
  %1991 = vmatprep.subr.mxu0 %v26
  %1992 = vmatpush1.msra.mxu0 %v25
  %1993 = vmatprep.subr.mxu0 %v30
  %1994 = vmatpush1.msra.mxu0 %v29
  %1995 = vmatprep.subr.mxu0 %v34
  %1996 = vmatpush1.msra.mxu0 %v33
  %1997 = vmatprep.subr.mxu0 %v38
  %1998 = vmatpush1.msra.mxu0 %v37
  %1999 = vmatprep.subr.mxu0 %v42
  %2000 = vmatpush1.msra.mxu0 %v41
  %2001 = vmatprep.subr.mxu0 %v46
  %2002 = vmatpush1.msra.mxu0 %v45
  %2003 = vmatprep.subr.mxu0 %v50
  %2004 = vmatpush1.msra.mxu0 %v49
  %2005 = vmatprep.subr.mxu0 %v54
  %2006 = vmatpush1.msra.mxu0 %v53
  %2007 = vmatprep.subr.mxu0 %v58
  %2008 = vmatpush1.msra.mxu0 %v57
  %2009 = vmatprep.subr.mxu0 %v62
  %2010 = vmatpush1.msra.mxu0 %v61
  %2011 = vmatprep.subr.mxu0 %v66
  %2012 = vmatpush1.msra.mxu0 %v65
  %2013 = vmatprep.subr.mxu0 %v70
  %2014 = vmatpush1.msra.mxu0 %v69
  %2015 = vmatprep.subr.mxu0 %v74
  %2016 = vmatpush1.msra.mxu0 %v73
  %2017 = vmatprep.subr.mxu0 %v78
  %2018 = vmatpush1.msra.mxu0 %v77
  %2019 = vmatprep.subr.mxu0 0.0
  %2020 = vmatpush1.msra.mxu0 0.0
  %2021 = vmatprep.subr.mxu0 0.0
  %2022 = vmatpush1.msra.mxu0 0.0
  %2023 = vmatprep.subr.mxu0 0.0
  %2024 = vmatpush1.msra.mxu0 0.0
  %2025 = vmatprep.subr.mxu0 0.0
  %2026 = vmatpush1.msra.mxu0 0.0
  %2027 = vmatprep.subr.mxu0 0.0
  %2028 = vmatpush1.msra.mxu0 0.0
  %2029 = vmatprep.subr.mxu0 0.0
  %2030 = vmatpush1.msra.mxu0 0.0
  %2031 = vmatprep.subr.mxu0 0.0
  %2032 = vmatpush1.msra.mxu0 0.0
  %2033 = vmatprep.subr.mxu0 0.0
  %2034 = vmatpush1.msra.mxu0 0.0
  %2035 = vmatprep.subr.mxu0 0.0
  %2036 = vmatpush1.msra.mxu0 0.0
  %2037 = vmatprep.subr.mxu0 0.0
  %2038 = vmatpush1.msra.mxu0 0.0
  %2039 = vmatprep.subr.mxu0 0.0
  %2040 = vmatpush1.msra.mxu0 0.0
  %2041 = vmatprep.subr.mxu0 0.0
  %2042 = vmatpush1.msra.mxu0 0.0
  %2043 = vmatprep.subr.mxu0 0.0
  %2044 = vmatpush1.msra.mxu0 0.0
  %2045 = vmatprep.subr.mxu0 0.0
  %2046 = vmatpush1.msra.mxu0 0.0
  %2047 = vmatprep.subr.mxu0 0.0
  %2048 = vmatpush1.msra.mxu0 0.0
  %2049 = vmatprep.subr.mxu0 0.0
  %2050 = vmatpush1.msra.mxu0 0.0
  %2051 = vmatprep.mubr.f32.mxu0 0.0
  %2052 = vmatmul.mubr.f32.gmra.mrb[0].mxu0 %v1985
  %v2053 = vpop.f32.mrb[0].mxu0
  %v2054 = vadd.f32 0.0, %v2053
  %v2055 = vpop.f32.mrb[0].mxu0
  %v2056 = vadd.f32 0.0, %v2055
  %2057 = vdwg.mxu0
  %2058 = vmatprep.subr.mxu0 %v20
  %2059 = vmatpush1.msra.mxu0 %v19
  %2060 = vmatprep.subr.mxu0 %v24
  %2061 = vmatpush1.msra.mxu0 %v23
  %2062 = vmatprep.subr.mxu0 %v28
  %2063 = vmatpush1.msra.mxu0 %v27
  %2064 = vmatprep.subr.mxu0 %v32
  %2065 = vmatpush1.msra.mxu0 %v31
  %2066 = vmatprep.subr.mxu0 %v36
  %2067 = vmatpush1.msra.mxu0 %v35
  %2068 = vmatprep.subr.mxu0 %v40
  %2069 = vmatpush1.msra.mxu0 %v39
  %2070 = vmatprep.subr.mxu0 %v44
  %2071 = vmatpush1.msra.mxu0 %v43
  %2072 = vmatprep.subr.mxu0 %v48
  %2073 = vmatpush1.msra.mxu0 %v47
  %2074 = vmatprep.subr.mxu0 %v52
  %2075 = vmatpush1.msra.mxu0 %v51
  %2076 = vmatprep.subr.mxu0 %v56
  %2077 = vmatpush1.msra.mxu0 %v55
  %2078 = vmatprep.subr.mxu0 %v60
  %2079 = vmatpush1.msra.mxu0 %v59
  %2080 = vmatprep.subr.mxu0 %v64
  %2081 = vmatpush1.msra.mxu0 %v63
  %2082 = vmatprep.subr.mxu0 %v68
  %2083 = vmatpush1.msra.mxu0 %v67
  %2084 = vmatprep.subr.mxu0 %v72
  %2085 = vmatpush1.msra.mxu0 %v71
  %2086 = vmatprep.subr.mxu0 %v76
  %2087 = vmatpush1.msra.mxu0 %v75
  %2088 = vmatprep.subr.mxu0 %v80
  %2089 = vmatpush1.msra.mxu0 %v79
  %2090 = vmatprep.subr.mxu0 0.0
  %2091 = vmatpush1.msra.mxu0 0.0
  %2092 = vmatprep.subr.mxu0 0.0
  %2093 = vmatpush1.msra.mxu0 0.0
  %2094 = vmatprep.subr.mxu0 0.0
  %2095 = vmatpush1.msra.mxu0 0.0
  %2096 = vmatprep.subr.mxu0 0.0
  %2097 = vmatpush1.msra.mxu0 0.0
  %2098 = vmatprep.subr.mxu0 0.0
  %2099 = vmatpush1.msra.mxu0 0.0
  %2100 = vmatprep.subr.mxu0 0.0
  %2101 = vmatpush1.msra.mxu0 0.0
  %2102 = vmatprep.subr.mxu0 0.0
  %2103 = vmatpush1.msra.mxu0 0.0
  %2104 = vmatprep.subr.mxu0 0.0
  %2105 = vmatpush1.msra.mxu0 0.0
  %2106 = vmatprep.subr.mxu0 0.0
  %2107 = vmatpush1.msra.mxu0 0.0
  %2108 = vmatprep.subr.mxu0 0.0
  %2109 = vmatpush1.msra.mxu0 0.0
  %2110 = vmatprep.subr.mxu0 0.0
  %2111 = vmatpush1.msra.mxu0 0.0
  %2112 = vmatprep.subr.mxu0 0.0
  %2113 = vmatpush1.msra.mxu0 0.0
  %2114 = vmatprep.subr.mxu0 0.0
  %2115 = vmatpush1.msra.mxu0 0.0
  %2116 = vmatprep.subr.mxu0 0.0
  %2117 = vmatpush1.msra.mxu0 0.0
  %2118 = vmatprep.subr.mxu0 0.0
  %2119 = vmatpush1.msra.mxu0 0.0
  %2120 = vmatprep.subr.mxu0 0.0
  %2121 = vmatpush1.msra.mxu0 0.0
  %2122 = vmatprep.mubr.f32.mxu0 0.0
  %2123 = vmatmul.mubr.f32.gmra.mrb[0].mxu0 %v1985
  %v2124 = vpop.f32.mrb[0].mxu0
  %v2125 = vadd.f32 0.0, %v2124
  %v2126 = vpop.f32.mrb[0].mxu0
  %v2127 = vadd.f32 0.0, %v2126
  %2128 = vdwg.mxu0
  %v2133 = vcombine.low %v2054, %v2056
  %v2134 = vcombine.low %v2125, %v2127
  %v2136 = vunpack.c.l.s4 1966171168
  %v2137 = vunpack.c.0.s8 %v2136
  %v2138 = vlaneseq
  %v2139 = vshrl.u32 %v2138, 7
  %v2140 = vsub.s32 %v2137, %v2139
  %v2141 = vrot.slane %v2133, %v2140
  %v2143 = vunpack.c.l.s4 1966171168
  %v2144 = vunpack.c.0.s8 %v2143
  %v2145 = vlaneseq
  %v2146 = vshrl.u32 %v2145, 7
  %v2147 = vsub.s32 %v2144, %v2146
  %v2148 = vrot.slane %v2134, %v2147
  %v2149 = vcombine.low %v2141, %v2148
  %v2150 = vcombine.high %v2141, %v2148
  %v2152 = vunpack.c.l.s4 1966171168
  %v2153 = vunpack.c.0.s8 %v2152
  %v2154 = vlaneseq
  %v2155 = vshrl.u32 %v2154, 7
  %v2156 = vsub.s32 %v2153, %v2155
  %v2157 = vrot.slane %v2149, %v2156
  %v2159 = vunpack.c.l.s4 1966171168
  %v2160 = vunpack.c.0.s8 %v2159
  %v2161 = vlaneseq
  %v2162 = vshrl.u32 %v2161, 7
  %v2163 = vsub.s32 %v2160, %v2162
  %v2164 = vrot.slane %v2150, %v2163
  %v2167 = vadd.f32 %v1966, %v2157
  %v2168 = vadd.f32 %v1968, %v2164
  %v2169 = vxor.u32 %v2167, 2147483648
  %v2170 = vxor.u32 %v2168, 2147483648
  %v2171 = vmul.f32 %v2169, 1.442695
  %v2172 = vpow.pop %v2171
  %v2173 = vmul.f32 %v2170, 1.442695
  %v2174 = vpow.pop %v2173
  %v2175 = vadd.f32 %v2172, 1.0
  %v2176 = vadd.f32 %v2174, 1.0
  %v2177 = vrcp.pop %v2175
  %v2178 = vmul.f32 1.0, %v2177
  %v2179 = vrcp.pop %v2176
  %v2180 = vmul.f32 1.0, %v2179
  %v2183 = vrot.slane %v2167, 1
  %v2184 = vrot.slane %v2168, 1
  %v2187 = vxor.u32 %v2183, 2147483648
  %v2188 = vxor.u32 %v2184, 2147483648
  %v2189 = vmul.f32 %v2187, 1.442695
  %v2190 = vpow.pop %v2189
  %v2191 = vmul.f32 %v2188, 1.442695
  %v2192 = vpow.pop %v2191
  %v2193 = vadd.f32 %v2190, 1.0
  %v2194 = vadd.f32 %v2192, 1.0
  %v2195 = vrcp.pop %v2193
  %v2196 = vmul.f32 1.0, %v2195
  %v2197 = vrcp.pop %v2194
  %v2198 = vmul.f32 1.0, %v2197
  %v2199 = vrot.slane %v2167, 2
  %v2200 = vrot.slane %v2168, 2
  %v2203 = vtanh.pop %v2199
  %v2204 = vtanh.pop %v2200
  %v2205 = vrot.slane %v2167, 3
  %v2206 = vrot.slane %v2168, 3
  %v2209 = vxor.u32 %v2205, 2147483648
  %v2210 = vxor.u32 %v2206, 2147483648
  %v2211 = vmul.f32 %v2209, 1.442695
  %v2212 = vpow.pop %v2211
  %v2213 = vmul.f32 %v2210, 1.442695
  %v2214 = vpow.pop %v2213
  %v2215 = vadd.f32 %v2212, 1.0
  %v2216 = vadd.f32 %v2214, 1.0
  %v2217 = vrcp.pop %v2215
  %v2218 = vmul.f32 1.0, %v2217
  %v2219 = vrcp.pop %v2216
  %v2220 = vmul.f32 1.0, %v2219
  %v2221 = vmul.f32 %v2196, %v1957
  %v2222 = vmul.f32 %v2198, %v1958
  %v2223 = vmul.f32 %v2178, %v2203
  %v2224 = vmul.f32 %v2180, %v2204
  %v2225 = vadd.f32 %v2221, %v2223
  %v2226 = vadd.f32 %v2222, %v2224
  %v2227 = vtanh.pop %v2225
  %v2228 = vtanh.pop %v2226
  %v2229 = vmul.f32 %v2218, %v2227
  %v2230 = vmul.f32 %v2220, %v2228
  %2231 = vst [vmem:[%s2 + $0x7] sm:$0x1] %v2229
  %2232 = vst [vmem:[%s2 + $0xf] sm:$0x1] %v2230
  %v2235 = vcombine.low %v2229, %v2230
  %v2237 = vunpack.c.l.s4 1966171168
  %v2238 = vunpack.c.0.s8 %v2237
  %v2239 = vlaneseq
  %v2240 = vshrl.u32 %v2239, 7
  %v2241 = vsub.s32 %v2238, %v2240
  %v2242 = vrot.slane %v2235, %v2241
  %v2244 = vunpack.c.l.s4 1966171168
  %v2245 = vunpack.c.0.s8 %v2244
  %v2246 = vlaneseq
  %v2247 = vshrl.u32 %v2246, 7
  %v2248 = vsub.s32 %v2245, %v2247
  %v2249 = vrot.slane %v2242, %v2248
  %2251 = vst [vmem:[#allocation2] sm:$0x3] %v2249
  %v2254 = vcombine.low %v2225, %v2226
  %v2256 = vunpack.c.l.s4 1966171168
  %v2257 = vunpack.c.0.s8 %v2256
  %v2258 = vlaneseq
  %v2259 = vshrl.u32 %v2258, 7
  %v2260 = vsub.s32 %v2257, %v2259
  %v2261 = vrot.slane %v2254, %v2260
  %v2263 = vunpack.c.l.s4 1966171168
  %v2264 = vunpack.c.0.s8 %v2263
  %v2265 = vlaneseq
  %v2266 = vshrl.u32 %v2265, 7
  %v2267 = vsub.s32 %v2264, %v2266
  %v2268 = vrot.slane %v2261, %v2267
  %2270 = vst [vmem:[#allocation3] sm:$0x3] %v2268
  // Predicated region
  $region14: #{rnnlm_forward.4} parent=0 // pred_check
    _
  $region15: #{rnnlm_forward.4} parent=0 // pred_check_branch
    %2272 = sbr.rel (0) target = $region17
  $region16: #{rnnlm_forward.4} parent=0 // pred_region
    _
  $region17: #{rnnlm_forward.4} parent=0 // pred_fallthru
    _
  // Predicated region
  $region18: #{rnnlm_forward.4} parent=0 // pred_check
    _
  $region19: #{rnnlm_forward.4} parent=0 // pred_check_branch
    %2274 = sbr.rel (0) target = $region21
  $region20: #{rnnlm_forward.4} parent=0 // pred_region
    _
  $region21: #{rnnlm_forward.4} parent=0 // pred_fallthru
    _

</llo_original>
